<compile_context>
chip_gen: v7x
topology: tpu7x:2x2x1
jax: 0.10.0
libtpu: 0.0.40
codegen_flags: <defaults>
</compile_context>

<pallas_src>
import functools

import jax
import jax.numpy as jnp
from jax.experimental import pallas as pl
from jax.experimental.pallas import tpu as pltpu

PATCH = 14
EMBED_DIM = 128                    # scaled-down ViT-B (real: 768); lane-dense
DEPTH = 2                          # scaled-down (real: 12)
HEADS = 4                          # scaled-down (real: 12)
HEAD_DIM = EMBED_DIM // HEADS
MLP_HIDDEN = 4 * EMBED_DIM
LN_EPS = 1e-6                      # timm / DINOv2 LayerNorm eps
LS_INIT = 1e-5                     # DINOv2 LayerScale init
K_PATCH = 3 * PATCH * PATCH        # 588
K_PATCH_PAD = 640                  # pad K to a multiple of 128 (clean MXU / DMA)


# ----------------------------- in-kernel helpers -----------------------------

def _ln(x, g, b):
    mean = jnp.mean(x, axis=-1, keepdims=True)
    var = jnp.mean(jnp.square(x - mean), axis=-1, keepdims=True)
    return (x - mean) * jax.lax.rsqrt(var + LN_EPS) * g + b


def _bf16_dot(x, w):
    return jnp.dot(x.astype(jnp.bfloat16), w.astype(jnp.bfloat16),
                   preferred_element_type=jnp.float32)


# ----------------------------- fused Pallas kernel -----------------------------

def _fused_vit_kernel(patches_ref, patch_w_ref, tok_bias_ref,
                      n1g_ref, n1b_ref, qkvw_ref, qkvb_ref, projw_ref, projb_ref,
                      ls1_ref, n2g_ref, n2b_ref, fc1w_ref, fc1b_ref, fc2w_ref,
                      fc2b_ref, ls2_ref, normg_ref, normb_ref, o_ref,
                      *, bt, n_tok, scale):
    C = EMBED_DIM

    # --- patch embed: row 0 of each image is a zero "patch" for the cls position;
    # patch bias, cls token and pos_embed are all folded into tok_bias. ---
    pe = jnp.dot(patches_ref[0], patch_w_ref[...],
                 preferred_element_type=jnp.float32)            # (bt*n_tok, C) f32
    x = pe + tok_bias_ref[...]                                  # residual stream (stays in VMEM)

    for d in range(DEPTH):
        # --- attention branch: LN1 -> QKV -> per-head softmax(QK^T)V with proj folded in ---
        y = _ln(x, n1g_ref[d], n1b_ref[d])
        qkv = _bf16_dot(y, qkvw_ref[d]) + qkvb_ref[d]           # (rows, 3C) f32
        q = qkv[:, 0 * C:1 * C] * scale                         # softmax scale folded into q
        k = qkv[:, 1 * C:2 * C]
        v = qkv[:, 2 * C:3 * C]
        projw_d = projw_ref[d]                                  # (C, C) bf16

        per_img = []
        for b in range(bt):                                     # attention is per image
            r0 = b * n_tok
            acc = jnp.zeros((n_tok, C), jnp.float32)
            for h in range(HEADS):
                lo = h * HEAD_DIM
                qh = q[r0:r0 + n_tok, lo:lo + HEAD_DIM].astype(jnp.bfloat16)
                kh = k[r0:r0 + n_tok, lo:lo + HEAD_DIM].astype(jnp.bfloat16)
                vh = v[r0:r0 + n_tok, lo:lo + HEAD_DIM].astype(jnp.bfloat16)
                s = jax.lax.dot_general(qh, kh, (((1,), (1,)), ((), ())),
                                        preferred_element_type=jnp.float32)    # (n_tok, n_tok)
                s = s - jnp.max(s, axis=-1, keepdims=True)
                prob = jnp.exp(s)
                prob = prob / jnp.sum(prob, axis=-1, keepdims=True)
                oh = jnp.dot(prob.astype(jnp.bfloat16), vh,
                             preferred_element_type=jnp.float32)                # (n_tok, HD)
                # fold the output projection per head: no lane-dim concat of heads
                acc = acc + jnp.dot(oh.astype(jnp.bfloat16),
                                    projw_d[lo:lo + HEAD_DIM, :],
                                    preferred_element_type=jnp.float32)         # (n_tok, C)
            per_img.append(acc)
        attn = per_img[0] if bt == 1 else jnp.concatenate(per_img, axis=0)
        x = x + (attn + projb_ref[d]) * ls1_ref[d]

        # --- MLP branch: LN2 -> fc1 -> GELU -> fc2 -> LayerScale residual ---
        y = _ln(x, n2g_ref[d], n2b_ref[d])
        h1 = _bf16_dot(y, fc1w_ref[d]) + fc1b_ref[d]
        # TODO(synk): PyTorch nn.GELU is the exact erf form; tanh approximation used for
        # Mosaic-safe lowering.
        h1 = jax.nn.gelu(h1, approximate=True)
        h2 = _bf16_dot(h1, fc2w_ref[d]) + fc2b_ref[d]
        x = x + h2 * ls2_ref[d]

    # --- final LayerNorm ---
    o_ref[0] = _ln(x, normg_ref[...], normb_ref[...]).astype(o_ref.dtype)


def _full_spec(a):
    nd = a.ndim
    return pl.BlockSpec(a.shape, lambda g: (0,) * nd)


def _split_batch(B):
    # Keep ≥2 "parallel" grid steps when possible (both v7x TensorCores get work) while
    # packing as many images per step as possible (row-batches the projection matmuls).
    if B >= 2 and B % 2 == 0:
        return 2, B // 2          # (grid, images per step)
    return B, 1


# ----------------------------- model (glue in JAX) -----------------------------

def init_params(key, num_patches):
    n_tok = num_patches + 1
    keys = jax.random.split(key, 7)

    def nrm(k, shape, dtype=jnp.float32, scale=0.02):
        return (scale * jax.random.normal(k, shape, jnp.float32)).astype(dtype)

    patch_w = nrm(keys[0], (K_PATCH, EMBED_DIM))
    patch_w = jnp.pad(patch_w, ((0, K_PATCH_PAD - K_PATCH), (0, 0))).astype(jnp.bfloat16)

    return {
        "patch_w": patch_w,                                       # (640, C) bf16, zero-padded rows
        "patch_b": jnp.zeros((1, EMBED_DIM), jnp.float32),
        "cls_token": nrm(keys[1], (1, EMBED_DIM)),
        "pos_embed": nrm(keys[2], (n_tok, EMBED_DIM)),
        "norm_g": jnp.ones((1, EMBED_DIM), jnp.float32),
        "norm_b": jnp.zeros((1, EMBED_DIM), jnp.float32),
        # per-block params stacked along a DEPTH axis (all resident in VMEM in the fused kernel)
        "n1_g": jnp.ones((DEPTH, 1, EMBED_DIM), jnp.float32),
        "n1_b": jnp.zeros((DEPTH, 1, EMBED_DIM), jnp.float32),
        "qkv_w": nrm(keys[3], (DEPTH, EMBED_DIM, 3 * EMBED_DIM), jnp.bfloat16),
        "qkv_b": jnp.zeros((DEPTH, 1, 3 * EMBED_DIM), jnp.float32),
        "proj_w": nrm(keys[4], (DEPTH, EMBED_DIM, EMBED_DIM), jnp.bfloat16),
        "proj_b": jnp.zeros((DEPTH, 1, EMBED_DIM), jnp.float32),
        "ls1": LS_INIT * jnp.ones((DEPTH, 1, EMBED_DIM), jnp.float32),
        "n2_g": jnp.ones((DEPTH, 1, EMBED_DIM), jnp.float32),
        "n2_b": jnp.zeros((DEPTH, 1, EMBED_DIM), jnp.float32),
        "fc1_w": nrm(keys[5], (DEPTH, EMBED_DIM, MLP_HIDDEN), jnp.bfloat16),
        "fc1_b": jnp.zeros((DEPTH, 1, MLP_HIDDEN), jnp.float32),
        "fc2_w": nrm(keys[6], (DEPTH, MLP_HIDDEN, EMBED_DIM), jnp.bfloat16),
        "fc2_b": jnp.zeros((DEPTH, 1, EMBED_DIM), jnp.float32),
        "ls2": LS_INIT * jnp.ones((DEPTH, 1, EMBED_DIM), jnp.float32),
    }


def dinov2_forward(params, img, include_cls):
    B, Cin, H, W = img.shape
    assert H % PATCH == 0 and W % PATCH == 0
    nh, nw = H // PATCH, W // PATCH
    n_patch = nh * nw
    n_tok = n_patch + 1
    C = EMBED_DIM
    grid, bt = _split_batch(B)
    rows = bt * n_tok

    # im2col unfold of the 14x14/14 conv; prepend one zero row per image (cls position),
    # pad K 588 -> 640 and cast to bf16 (patch embed is memory-bound).
    k_raw = Cin * PATCH * PATCH
    p = img.reshape(B, Cin, nh, PATCH, nw, PATCH)
    p = p.transpose(0, 2, 4, 1, 3, 5).reshape(B, n_patch, k_raw)
    p = jnp.pad(p, ((0, 0), (1, 0), (0, K_PATCH_PAD - k_raw)))
    patches = p.reshape(grid, rows, K_PATCH_PAD).astype(jnp.bfloat16)

    # fold patch bias, cls token and pos_embed into one per-row additive bias:
    #   row 0 (cls, zero patch row): cls_token + pos[0]
    #   rows 1..: patch_b + pos[j]
    # TODO(synk): pos_embed bicubic interpolation for arbitrary grids not implemented;
    # direct add matches DINOv2 only when the patch grid equals the pretraining grid.
    pos = params["pos_embed"]                                     # (n_tok, C)
    tok_bias = pos + params["patch_b"]
    tok_bias = tok_bias.at[0].set(pos[0] + params["cls_token"][0])
    tok_bias = jnp.tile(tok_bias, (bt, 1))                        # (rows, C)

    weight_args = (params["patch_w"], tok_bias,
                   params["n1_g"], params["n1_b"], params["qkv_w"], params["qkv_b"],
                   params["proj_w"], params["proj_b"], params["ls1"],
                   params["n2_g"], params["n2_b"], params["fc1_w"], params["fc1_b"],
                   params["fc2_w"], params["fc2_b"], params["ls2"],
                   params["norm_g"], params["norm_b"])

    kernel = functools.partial(_fused_vit_kernel, bt=bt, n_tok=n_tok,
                               scale=float(HEAD_DIM) ** -0.5)

    tokens = pl.pallas_call(
        kernel,
        grid=(grid,),
        in_specs=[pl.BlockSpec((1, rows, K_PATCH_PAD), lambda g: (g, 0, 0))]
                 + [_full_spec(a) for a in weight_args],
        out_specs=pl.BlockSpec((1, rows, C), lambda g: (g, 0, 0)),
        out_shape=jax.ShapeDtypeStruct((grid, rows, C), jnp.float32),
        compiler_params=pltpu.CompilerParams(
            dimension_semantics=("parallel",),
            vmem_limit_bytes=32 * 1024 * 1024),   # explicit (v5e default scoped VMEM is 16 MiB)
    )(patches, *weight_args)

    tokens = tokens.reshape(B, n_tok, C)
    x_norm_clstoken = tokens[:, 0]                                # (B, C)
    x_norm_patchtokens = tokens[:, 1:]                            # (B, nh*nw, C)

    # matches: permute(0, 2, 1).reshape(b, c, new_h, new_w)
    spatial_tokens = x_norm_patchtokens.transpose(0, 2, 1).reshape(B, C, nh, nw)
    if include_cls:
        return spatial_tokens, x_norm_clstoken
    return spatial_tokens


if __name__ == "__main__":
    key = jax.random.PRNGKey(0)
    pkey, ikey = jax.random.split(key)

    B, H, W = 2, 56, 56                 # H, W multiples of the 14-pixel patch size
    img = jax.random.normal(ikey, (B, 3, H, W), jnp.float32)
    params = init_params(pkey, num_patches=(H // PATCH) * (W // PATCH))

    fwd = jax.jit(functools.partial(dinov2_forward, include_cls=True))
    spatial, cls_tok = fwd(params, img)
    jax.block_until_ready((spatial, cls_tok))

    assert spatial.shape == (B, EMBED_DIM, H // PATCH, W // PATCH)
    assert cls_tok.shape == (B, EMBED_DIM)
    print("KERNEL_OK")
</pallas_src>

<mosaic_0001>
module attributes {stable_mosaic.version = 11 : i64} {
  func.func @_fused_vit_kernel(%arg0: i32, %arg1: memref<1x17x640xbf16, #tpu.memory_space<vmem>>, %arg2: memref<640x128xbf16, #tpu.memory_space<vmem>>, %arg3: memref<17x128xf32, #tpu.memory_space<vmem>>, %arg4: memref<2x1x128xf32, #tpu.memory_space<vmem>>, %arg5: memref<2x1x128xf32, #tpu.memory_space<vmem>>, %arg6: memref<2x128x384xbf16, #tpu.memory_space<vmem>>, %arg7: memref<2x1x384xf32, #tpu.memory_space<vmem>>, %arg8: memref<2x128x128xbf16, #tpu.memory_space<vmem>>, %arg9: memref<2x1x128xf32, #tpu.memory_space<vmem>>, %arg10: memref<2x1x128xf32, #tpu.memory_space<vmem>>, %arg11: memref<2x1x128xf32, #tpu.memory_space<vmem>>, %arg12: memref<2x1x128xf32, #tpu.memory_space<vmem>>, %arg13: memref<2x128x512xbf16, #tpu.memory_space<vmem>>, %arg14: memref<2x1x512xf32, #tpu.memory_space<vmem>>, %arg15: memref<2x512x128xbf16, #tpu.memory_space<vmem>>, %arg16: memref<2x1x128xf32, #tpu.memory_space<vmem>>, %arg17: memref<2x1x128xf32, #tpu.memory_space<vmem>>, %arg18: memref<1x128xf32, #tpu.memory_space<vmem>>, %arg19: memref<1x128xf32, #tpu.memory_space<vmem>>, %arg20: memref<1x17x128xf32, #tpu.memory_space<vmem>>) attributes {dimension_semantics = [#tpu.dimension_semantics<parallel>], iteration_bounds = array<i64: 2>, scalar_prefetch = 0 : i64, scratch_operands = 0 : i64, tpu.core_type = #tpu.core_type<tc>, window_params = [{transform_indices = @transform_0, window_bounds = array<i64: 1, 17, 640>}, {pipeline_mode = #tpu.pipeline_mode<synchronous>, transform_indices = @transform_1, window_bounds = array<i64: 640, 128>}, {pipeline_mode = #tpu.pipeline_mode<synchronous>, transform_indices = @transform_2, window_bounds = array<i64: 17, 128>}, {pipeline_mode = #tpu.pipeline_mode<synchronous>, transform_indices = @transform_3, window_bounds = array<i64: 2, 1, 128>}, {pipeline_mode = #tpu.pipeline_mode<synchronous>, transform_indices = @transform_4, window_bounds = array<i64: 2, 1, 128>}, {pipeline_mode = #tpu.pipeline_mode<synchronous>, transform_indices = @transform_5, window_bounds = array<i64: 2, 128, 384>}, {pipeline_mode = #tpu.pipeline_mode<synchronous>, transform_indices = @transform_6, window_bounds = array<i64: 2, 1, 384>}, {pipeline_mode = #tpu.pipeline_mode<synchronous>, transform_indices = @transform_7, window_bounds = array<i64: 2, 128, 128>}, {pipeline_mode = #tpu.pipeline_mode<synchronous>, transform_indices = @transform_8, window_bounds = array<i64: 2, 1, 128>}, {pipeline_mode = #tpu.pipeline_mode<synchronous>, transform_indices = @transform_9, window_bounds = array<i64: 2, 1, 128>}, {pipeline_mode = #tpu.pipeline_mode<synchronous>, transform_indices = @transform_10, window_bounds = array<i64: 2, 1, 128>}, {pipeline_mode = #tpu.pipeline_mode<synchronous>, transform_indices = @transform_11, window_bounds = array<i64: 2, 1, 128>}, {pipeline_mode = #tpu.pipeline_mode<synchronous>, transform_indices = @transform_12, window_bounds = array<i64: 2, 128, 512>}, {pipeline_mode = #tpu.pipeline_mode<synchronous>, transform_indices = @transform_13, window_bounds = array<i64: 2, 1, 512>}, {pipeline_mode = #tpu.pipeline_mode<synchronous>, transform_indices = @transform_14, window_bounds = array<i64: 2, 512, 128>}, {pipeline_mode = #tpu.pipeline_mode<synchronous>, transform_indices = @transform_15, window_bounds = array<i64: 2, 1, 128>}, {pipeline_mode = #tpu.pipeline_mode<synchronous>, transform_indices = @transform_16, window_bounds = array<i64: 2, 1, 128>}, {pipeline_mode = #tpu.pipeline_mode<synchronous>, transform_indices = @transform_17, window_bounds = array<i64: 1, 128>}, {pipeline_mode = #tpu.pipeline_mode<synchronous>, transform_indices = @transform_18, window_bounds = array<i64: 1, 128>}, {transform_indices = @transform_19, window_bounds = array<i64: 1, 17, 128>}]} {
    %c0 = arith.constant 0 : index
    %c0_0 = arith.constant 0 : index
    %c0_1 = arith.constant 0 : index
    %0 = vector.load %arg1[%c0, %c0_0, %c0_1] : memref<1x17x640xbf16, #tpu.memory_space<vmem>>, vector<1x17x640xbf16>
    %1 = vector.shape_cast %0 : vector<1x17x640xbf16> to vector<17x640xbf16>
    %c0_2 = arith.constant 0 : index
    %c0_3 = arith.constant 0 : index
    %2 = vector.load %arg2[%c0_2, %c0_3] : memref<640x128xbf16, #tpu.memory_space<vmem>>, vector<640x128xbf16>
    %cst = arith.constant dense<0.000000e+00> : vector<17x128xf32>
    %3 = tpu.matmul %1, %2, %cst {dimension_numbers = #tpu.dot_dimension_numbers<[1], [0], [0], [1], [0, 0, 1, 1], [], []>} : vector<17x640xbf16>, vector<640x128xbf16>, vector<17x128xf32> -> vector<17x128xf32>
    %c0_4 = arith.constant 0 : index
    %c0_5 = arith.constant 0 : index
    %4 = vector.load %arg3[%c0_4, %c0_5] : memref<17x128xf32, #tpu.memory_space<vmem>>, vector<17x128xf32>
    %5 = arith.addf %3, %4 : vector<17x128xf32>
    %c0_6 = arith.constant 0 : index
    %c0_7 = arith.constant 0 : index
    %c0_8 = arith.constant 0 : index
    %6 = vector.load %arg4[%c0_6, %c0_7, %c0_8] : memref<2x1x128xf32, #tpu.memory_space<vmem>>, vector<1x1x128xf32>
    %7 = vector.shape_cast %6 : vector<1x1x128xf32> to vector<1x128xf32>
    %c0_9 = arith.constant 0 : index
    %c0_10 = arith.constant 0 : index
    %c0_11 = arith.constant 0 : index
    %8 = vector.load %arg5[%c0_9, %c0_10, %c0_11] : memref<2x1x128xf32, #tpu.memory_space<vmem>>, vector<1x1x128xf32>
    %9 = vector.shape_cast %8 : vector<1x1x128xf32> to vector<1x128xf32>
    %cst_12 = arith.constant dense<0.000000e+00> : vector<17xf32>
    %10 = vector.multi_reduction <add>, %5, %cst_12 [1] : vector<17x128xf32> to vector<17xf32>
    %11 = vector.shape_cast %10 : vector<17xf32> to vector<17x1xf32>
    %cst_13 = arith.constant 1.280000e+02 : f32
    %12 = vector.broadcast %cst_13 : f32 to vector<17x1xf32>
    %13 = arith.divf %11, %12 : vector<17x1xf32>
    %14 = vector.broadcast %13 : vector<17x1xf32> to vector<17x128xf32>
    %15 = arith.subf %5, %14 : vector<17x128xf32>
    %16 = arith.mulf %15, %15 : vector<17x128xf32>
    %cst_14 = arith.constant dense<0.000000e+00> : vector<17xf32>
    %17 = vector.multi_reduction <add>, %16, %cst_14 [1] : vector<17x128xf32> to vector<17xf32>
    %18 = vector.shape_cast %17 : vector<17xf32> to vector<17x1xf32>
    %cst_15 = arith.constant 1.280000e+02 : f32
    %19 = vector.broadcast %cst_15 : f32 to vector<17x1xf32>
    %20 = arith.divf %18, %19 : vector<17x1xf32>
    %21 = vector.broadcast %13 : vector<17x1xf32> to vector<17x128xf32>
    %22 = arith.subf %5, %21 : vector<17x128xf32>
    %cst_16 = arith.constant 9.99999997E-7 : f32
    %23 = vector.broadcast %cst_16 : f32 to vector<17x1xf32>
    %24 = arith.addf %20, %23 : vector<17x1xf32>
    %25 = math.rsqrt %24 : vector<17x1xf32>
    %26 = vector.broadcast %25 : vector<17x1xf32> to vector<17x128xf32>
    %27 = arith.mulf %22, %26 : vector<17x128xf32>
    %28 = vector.broadcast %7 : vector<1x128xf32> to vector<17x128xf32>
    %29 = arith.mulf %27, %28 : vector<17x128xf32>
    %30 = vector.broadcast %9 : vector<1x128xf32> to vector<17x128xf32>
    %31 = arith.addf %29, %30 : vector<17x128xf32>
    %c0_17 = arith.constant 0 : index
    %c0_18 = arith.constant 0 : index
    %c0_19 = arith.constant 0 : index
    %32 = vector.load %arg6[%c0_17, %c0_18, %c0_19] : memref<2x128x384xbf16, #tpu.memory_space<vmem>>, vector<1x128x384xbf16>
    %33 = vector.shape_cast %32 : vector<1x128x384xbf16> to vector<128x384xbf16>
    %34 = arith.truncf %31 : vector<17x128xf32> to vector<17x128xbf16>
    %cst_20 = arith.constant dense<0.000000e+00> : vector<17x384xf32>
    %35 = tpu.matmul %34, %33, %cst_20 {dimension_numbers = #tpu.dot_dimension_numbers<[1], [0], [0], [1], [0, 0, 1, 1], [], []>} : vector<17x128xbf16>, vector<128x384xbf16>, vector<17x384xf32> -> vector<17x384xf32>
    %c0_21 = arith.constant 0 : index
    %c0_22 = arith.constant 0 : index
    %c0_23 = arith.constant 0 : index
    %36 = vector.load %arg7[%c0_21, %c0_22, %c0_23] : memref<2x1x384xf32, #tpu.memory_space<vmem>>, vector<1x1x384xf32>
    %37 = vector.shape_cast %36 : vector<1x1x384xf32> to vector<1x384xf32>
    %38 = vector.broadcast %37 : vector<1x384xf32> to vector<17x384xf32>
    %39 = arith.addf %35, %38 : vector<17x384xf32>
    %40 = vector.extract_strided_slice %39 {offsets = [0, 0], sizes = [17, 128], strides = [1, 1]} : vector<17x384xf32> to vector<17x128xf32>
    %cst_24 = arith.constant 0.176776692 : f32
    %41 = vector.broadcast %cst_24 : f32 to vector<17x128xf32>
    %42 = arith.mulf %40, %41 : vector<17x128xf32>
    %43 = vector.extract_strided_slice %39 {offsets = [0, 128], sizes = [17, 128], strides = [1, 1]} : vector<17x384xf32> to vector<17x128xf32>
    %44 = vector.extract_strided_slice %39 {offsets = [0, 256], sizes = [17, 128], strides = [1, 1]} : vector<17x384xf32> to vector<17x128xf32>
    %c0_25 = arith.constant 0 : index
    %c0_26 = arith.constant 0 : index
    %c0_27 = arith.constant 0 : index
    %45 = vector.load %arg8[%c0_25, %c0_26, %c0_27] : memref<2x128x128xbf16, #tpu.memory_space<vmem>>, vector<1x128x128xbf16>
    %46 = vector.shape_cast %45 : vector<1x128x128xbf16> to vector<128x128xbf16>
    %cst_28 = arith.constant 0.000000e+00 : f32
    %47 = vector.broadcast %cst_28 : f32 to vector<17x128xf32>
    %48 = vector.extract_strided_slice %42 {offsets = [0, 0], sizes = [17, 32], strides = [1, 1]} : vector<17x128xf32> to vector<17x32xf32>
    %49 = arith.truncf %48 : vector<17x32xf32> to vector<17x32xbf16>
    %50 = vector.extract_strided_slice %43 {offsets = [0, 0], sizes = [17, 32], strides = [1, 1]} : vector<17x128xf32> to vector<17x32xf32>
    %51 = arith.truncf %50 : vector<17x32xf32> to vector<17x32xbf16>
    %52 = vector.extract_strided_slice %44 {offsets = [0, 0], sizes = [17, 32], strides = [1, 1]} : vector<17x128xf32> to vector<17x32xf32>
    %53 = arith.truncf %52 : vector<17x32xf32> to vector<17x32xbf16>
    %cst_29 = arith.constant dense<0.000000e+00> : vector<17x17xf32>
    %54 = tpu.matmul %49, %51, %cst_29 {dimension_numbers = #tpu.dot_dimension_numbers<[1], [1], [0], [0], [0, 0, 1, 0], [], []>} : vector<17x32xbf16>, vector<17x32xbf16>, vector<17x17xf32> -> vector<17x17xf32>
    %cst_30 = arith.constant dense<0xFF800000> : vector<17xf32>
    %55 = vector.multi_reduction <maximumf>, %54, %cst_30 [1] : vector<17x17xf32> to vector<17xf32>
    %56 = vector.shape_cast %55 : vector<17xf32> to vector<17x1xf32>
    %57 = vector.broadcast %56 : vector<17x1xf32> to vector<17x17xf32>
    %58 = arith.subf %54, %57 : vector<17x17xf32>
    %59 = math.exp %58 : vector<17x17xf32>
    %cst_31 = arith.constant dense<0.000000e+00> : vector<17xf32>
    %60 = vector.multi_reduction <add>, %59, %cst_31 [1] : vector<17x17xf32> to vector<17xf32>
    %61 = vector.shape_cast %60 : vector<17xf32> to vector<17x1xf32>
    %62 = vector.broadcast %61 : vector<17x1xf32> to vector<17x17xf32>
    %63 = arith.divf %59, %62 : vector<17x17xf32>
    %64 = arith.truncf %63 : vector<17x17xf32> to vector<17x17xbf16>
    %cst_32 = arith.constant dense<0.000000e+00> : vector<17x32xf32>
    %65 = tpu.matmul %64, %53, %cst_32 {dimension_numbers = #tpu.dot_dimension_numbers<[1], [0], [0], [1], [0, 0, 1, 1], [], []>} : vector<17x17xbf16>, vector<17x32xbf16>, vector<17x32xf32> -> vector<17x32xf32>
    %66 = arith.truncf %65 : vector<17x32xf32> to vector<17x32xbf16>
    %67 = vector.extract_strided_slice %46 {offsets = [0, 0], sizes = [32, 128], strides = [1, 1]} : vector<128x128xbf16> to vector<32x128xbf16>
    %cst_33 = arith.constant dense<0.000000e+00> : vector<17x128xf32>
    %68 = tpu.matmul %66, %67, %cst_33 {dimension_numbers = #tpu.dot_dimension_numbers<[1], [0], [0], [1], [0, 0, 1, 1], [], []>} : vector<17x32xbf16>, vector<32x128xbf16>, vector<17x128xf32> -> vector<17x128xf32>
    %69 = arith.addf %47, %68 : vector<17x128xf32>
    %70 = vector.extract_strided_slice %42 {offsets = [0, 32], sizes = [17, 32], strides = [1, 1]} : vector<17x128xf32> to vector<17x32xf32>
    %71 = arith.truncf %70 : vector<17x32xf32> to vector<17x32xbf16>
    %72 = vector.extract_strided_slice %43 {offsets = [0, 32], sizes = [17, 32], strides = [1, 1]} : vector<17x128xf32> to vector<17x32xf32>
    %73 = arith.truncf %72 : vector<17x32xf32> to vector<17x32xbf16>
    %74 = vector.extract_strided_slice %44 {offsets = [0, 32], sizes = [17, 32], strides = [1, 1]} : vector<17x128xf32> to vector<17x32xf32>
    %75 = arith.truncf %74 : vector<17x32xf32> to vector<17x32xbf16>
    %cst_34 = arith.constant dense<0.000000e+00> : vector<17x17xf32>
    %76 = tpu.matmul %71, %73, %cst_34 {dimension_numbers = #tpu.dot_dimension_numbers<[1], [1], [0], [0], [0, 0, 1, 0], [], []>} : vector<17x32xbf16>, vector<17x32xbf16>, vector<17x17xf32> -> vector<17x17xf32>
    %cst_35 = arith.constant dense<0xFF800000> : vector<17xf32>
    %77 = vector.multi_reduction <maximumf>, %76, %cst_35 [1] : vector<17x17xf32> to vector<17xf32>
    %78 = vector.shape_cast %77 : vector<17xf32> to vector<17x1xf32>
    %79 = vector.broadcast %78 : vector<17x1xf32> to vector<17x17xf32>
    %80 = arith.subf %76, %79 : vector<17x17xf32>
    %81 = math.exp %80 : vector<17x17xf32>
    %cst_36 = arith.constant dense<0.000000e+00> : vector<17xf32>
    %82 = vector.multi_reduction <add>, %81, %cst_36 [1] : vector<17x17xf32> to vector<17xf32>
    %83 = vector.shape_cast %82 : vector<17xf32> to vector<17x1xf32>
    %84 = vector.broadcast %83 : vector<17x1xf32> to vector<17x17xf32>
    %85 = arith.divf %81, %84 : vector<17x17xf32>
    %86 = arith.truncf %85 : vector<17x17xf32> to vector<17x17xbf16>
    %cst_37 = arith.constant dense<0.000000e+00> : vector<17x32xf32>
    %87 = tpu.matmul %86, %75, %cst_37 {dimension_numbers = #tpu.dot_dimension_numbers<[1], [0], [0], [1], [0, 0, 1, 1], [], []>} : vector<17x17xbf16>, vector<17x32xbf16>, vector<17x32xf32> -> vector<17x32xf32>
    %88 = arith.truncf %87 : vector<17x32xf32> to vector<17x32xbf16>
    %89 = vector.extract_strided_slice %46 {offsets = [32, 0], sizes = [32, 128], strides = [1, 1]} : vector<128x128xbf16> to vector<32x128xbf16>
    %cst_38 = arith.constant dense<0.000000e+00> : vector<17x128xf32>
    %90 = tpu.matmul %88, %89, %cst_38 {dimension_numbers = #tpu.dot_dimension_numbers<[1], [0], [0], [1], [0, 0, 1, 1], [], []>} : vector<17x32xbf16>, vector<32x128xbf16>, vector<17x128xf32> -> vector<17x128xf32>
    %91 = arith.addf %69, %90 : vector<17x128xf32>
    %92 = vector.extract_strided_slice %42 {offsets = [0, 64], sizes = [17, 32], strides = [1, 1]} : vector<17x128xf32> to vector<17x32xf32>
    %93 = arith.truncf %92 : vector<17x32xf32> to vector<17x32xbf16>
    %94 = vector.extract_strided_slice %43 {offsets = [0, 64], sizes = [17, 32], strides = [1, 1]} : vector<17x128xf32> to vector<17x32xf32>
    %95 = arith.truncf %94 : vector<17x32xf32> to vector<17x32xbf16>
    %96 = vector.extract_strided_slice %44 {offsets = [0, 64], sizes = [17, 32], strides = [1, 1]} : vector<17x128xf32> to vector<17x32xf32>
    %97 = arith.truncf %96 : vector<17x32xf32> to vector<17x32xbf16>
    %cst_39 = arith.constant dense<0.000000e+00> : vector<17x17xf32>
    %98 = tpu.matmul %93, %95, %cst_39 {dimension_numbers = #tpu.dot_dimension_numbers<[1], [1], [0], [0], [0, 0, 1, 0], [], []>} : vector<17x32xbf16>, vector<17x32xbf16>, vector<17x17xf32> -> vector<17x17xf32>
    %cst_40 = arith.constant dense<0xFF800000> : vector<17xf32>
    %99 = vector.multi_reduction <maximumf>, %98, %cst_40 [1] : vector<17x17xf32> to vector<17xf32>
    %100 = vector.shape_cast %99 : vector<17xf32> to vector<17x1xf32>
    %101 = vector.broadcast %100 : vector<17x1xf32> to vector<17x17xf32>
    %102 = arith.subf %98, %101 : vector<17x17xf32>
    %103 = math.exp %102 : vector<17x17xf32>
    %cst_41 = arith.constant dense<0.000000e+00> : vector<17xf32>
    %104 = vector.multi_reduction <add>, %103, %cst_41 [1] : vector<17x17xf32> to vector<17xf32>
    %105 = vector.shape_cast %104 : vector<17xf32> to vector<17x1xf32>
    %106 = vector.broadcast %105 : vector<17x1xf32> to vector<17x17xf32>
    %107 = arith.divf %103, %106 : vector<17x17xf32>
    %108 = arith.truncf %107 : vector<17x17xf32> to vector<17x17xbf16>
    %cst_42 = arith.constant dense<0.000000e+00> : vector<17x32xf32>
    %109 = tpu.matmul %108, %97, %cst_42 {dimension_numbers = #tpu.dot_dimension_numbers<[1], [0], [0], [1], [0, 0, 1, 1], [], []>} : vector<17x17xbf16>, vector<17x32xbf16>, vector<17x32xf32> -> vector<17x32xf32>
    %110 = arith.truncf %109 : vector<17x32xf32> to vector<17x32xbf16>
    %111 = vector.extract_strided_slice %46 {offsets = [64, 0], sizes = [32, 128], strides = [1, 1]} : vector<128x128xbf16> to vector<32x128xbf16>
    %cst_43 = arith.constant dense<0.000000e+00> : vector<17x128xf32>
    %112 = tpu.matmul %110, %111, %cst_43 {dimension_numbers = #tpu.dot_dimension_numbers<[1], [0], [0], [1], [0, 0, 1, 1], [], []>} : vector<17x32xbf16>, vector<32x128xbf16>, vector<17x128xf32> -> vector<17x128xf32>
    %113 = arith.addf %91, %112 : vector<17x128xf32>
    %114 = vector.extract_strided_slice %42 {offsets = [0, 96], sizes = [17, 32], strides = [1, 1]} : vector<17x128xf32> to vector<17x32xf32>
    %115 = arith.truncf %114 : vector<17x32xf32> to vector<17x32xbf16>
    %116 = vector.extract_strided_slice %43 {offsets = [0, 96], sizes = [17, 32], strides = [1, 1]} : vector<17x128xf32> to vector<17x32xf32>
    %117 = arith.truncf %116 : vector<17x32xf32> to vector<17x32xbf16>
    %118 = vector.extract_strided_slice %44 {offsets = [0, 96], sizes = [17, 32], strides = [1, 1]} : vector<17x128xf32> to vector<17x32xf32>
    %119 = arith.truncf %118 : vector<17x32xf32> to vector<17x32xbf16>
    %cst_44 = arith.constant dense<0.000000e+00> : vector<17x17xf32>
    %120 = tpu.matmul %115, %117, %cst_44 {dimension_numbers = #tpu.dot_dimension_numbers<[1], [1], [0], [0], [0, 0, 1, 0], [], []>} : vector<17x32xbf16>, vector<17x32xbf16>, vector<17x17xf32> -> vector<17x17xf32>
    %cst_45 = arith.constant dense<0xFF800000> : vector<17xf32>
    %121 = vector.multi_reduction <maximumf>, %120, %cst_45 [1] : vector<17x17xf32> to vector<17xf32>
    %122 = vector.shape_cast %121 : vector<17xf32> to vector<17x1xf32>
    %123 = vector.broadcast %122 : vector<17x1xf32> to vector<17x17xf32>
    %124 = arith.subf %120, %123 : vector<17x17xf32>
    %125 = math.exp %124 : vector<17x17xf32>
    %cst_46 = arith.constant dense<0.000000e+00> : vector<17xf32>
    %126 = vector.multi_reduction <add>, %125, %cst_46 [1] : vector<17x17xf32> to vector<17xf32>
    %127 = vector.shape_cast %126 : vector<17xf32> to vector<17x1xf32>
    %128 = vector.broadcast %127 : vector<17x1xf32> to vector<17x17xf32>
    %129 = arith.divf %125, %128 : vector<17x17xf32>
    %130 = arith.truncf %129 : vector<17x17xf32> to vector<17x17xbf16>
    %cst_47 = arith.constant dense<0.000000e+00> : vector<17x32xf32>
    %131 = tpu.matmul %130, %119, %cst_47 {dimension_numbers = #tpu.dot_dimension_numbers<[1], [0], [0], [1], [0, 0, 1, 1], [], []>} : vector<17x17xbf16>, vector<17x32xbf16>, vector<17x32xf32> -> vector<17x32xf32>
    %132 = arith.truncf %131 : vector<17x32xf32> to vector<17x32xbf16>
    %133 = vector.extract_strided_slice %46 {offsets = [96, 0], sizes = [32, 128], strides = [1, 1]} : vector<128x128xbf16> to vector<32x128xbf16>
    %cst_48 = arith.constant dense<0.000000e+00> : vector<17x128xf32>
    %134 = tpu.matmul %132, %133, %cst_48 {dimension_numbers = #tpu.dot_dimension_numbers<[1], [0], [0], [1], [0, 0, 1, 1], [], []>} : vector<17x32xbf16>, vector<32x128xbf16>, vector<17x128xf32> -> vector<17x128xf32>
    %135 = arith.addf %113, %134 : vector<17x128xf32>
    %c0_49 = arith.constant 0 : index
    %c0_50 = arith.constant 0 : index
    %c0_51 = arith.constant 0 : index
    %136 = vector.load %arg9[%c0_49, %c0_50, %c0_51] : memref<2x1x128xf32, #tpu.memory_space<vmem>>, vector<1x1x128xf32>
    %137 = vector.shape_cast %136 : vector<1x1x128xf32> to vector<1x128xf32>
    %138 = vector.broadcast %137 : vector<1x128xf32> to vector<17x128xf32>
    %139 = arith.addf %135, %138 : vector<17x128xf32>
    %c0_52 = arith.constant 0 : index
    %c0_53 = arith.constant 0 : index
    %c0_54 = arith.constant 0 : index
    %140 = vector.load %arg10[%c0_52, %c0_53, %c0_54] : memref<2x1x128xf32, #tpu.memory_space<vmem>>, vector<1x1x128xf32>
    %141 = vector.shape_cast %140 : vector<1x1x128xf32> to vector<1x128xf32>
    %142 = vector.broadcast %141 : vector<1x128xf32> to vector<17x128xf32>
    %143 = arith.mulf %139, %142 : vector<17x128xf32>
    %144 = arith.addf %5, %143 : vector<17x128xf32>
    %c0_55 = arith.constant 0 : index
    %c0_56 = arith.constant 0 : index
    %c0_57 = arith.constant 0 : index
    %145 = vector.load %arg11[%c0_55, %c0_56, %c0_57] : memref<2x1x128xf32, #tpu.memory_space<vmem>>, vector<1x1x128xf32>
    %146 = vector.shape_cast %145 : vector<1x1x128xf32> to vector<1x128xf32>
    %c0_58 = arith.constant 0 : index
    %c0_59 = arith.constant 0 : index
    %c0_60 = arith.constant 0 : index
    %147 = vector.load %arg12[%c0_58, %c0_59, %c0_60] : memref<2x1x128xf32, #tpu.memory_space<vmem>>, vector<1x1x128xf32>
    %148 = vector.shape_cast %147 : vector<1x1x128xf32> to vector<1x128xf32>
    %cst_61 = arith.constant dense<0.000000e+00> : vector<17xf32>
    %149 = vector.multi_reduction <add>, %144, %cst_61 [1] : vector<17x128xf32> to vector<17xf32>
    %150 = vector.shape_cast %149 : vector<17xf32> to vector<17x1xf32>
    %cst_62 = arith.constant 1.280000e+02 : f32
    %151 = vector.broadcast %cst_62 : f32 to vector<17x1xf32>
    %152 = arith.divf %150, %151 : vector<17x1xf32>
    %153 = vector.broadcast %152 : vector<17x1xf32> to vector<17x128xf32>
    %154 = arith.subf %144, %153 : vector<17x128xf32>
    %155 = arith.mulf %154, %154 : vector<17x128xf32>
    %cst_63 = arith.constant dense<0.000000e+00> : vector<17xf32>
    %156 = vector.multi_reduction <add>, %155, %cst_63 [1] : vector<17x128xf32> to vector<17xf32>
    %157 = vector.shape_cast %156 : vector<17xf32> to vector<17x1xf32>
    %cst_64 = arith.constant 1.280000e+02 : f32
    %158 = vector.broadcast %cst_64 : f32 to vector<17x1xf32>
    %159 = arith.divf %157, %158 : vector<17x1xf32>
    %160 = vector.broadcast %152 : vector<17x1xf32> to vector<17x128xf32>
    %161 = arith.subf %144, %160 : vector<17x128xf32>
    %cst_65 = arith.constant 9.99999997E-7 : f32
    %162 = vector.broadcast %cst_65 : f32 to vector<17x1xf32>
    %163 = arith.addf %159, %162 : vector<17x1xf32>
    %164 = math.rsqrt %163 : vector<17x1xf32>
    %165 = vector.broadcast %164 : vector<17x1xf32> to vector<17x128xf32>
    %166 = arith.mulf %161, %165 : vector<17x128xf32>
    %167 = vector.broadcast %146 : vector<1x128xf32> to vector<17x128xf32>
    %168 = arith.mulf %166, %167 : vector<17x128xf32>
    %169 = vector.broadcast %148 : vector<1x128xf32> to vector<17x128xf32>
    %170 = arith.addf %168, %169 : vector<17x128xf32>
    %c0_66 = arith.constant 0 : index
    %c0_67 = arith.constant 0 : index
    %c0_68 = arith.constant 0 : index
    %171 = vector.load %arg13[%c0_66, %c0_67, %c0_68] : memref<2x128x512xbf16, #tpu.memory_space<vmem>>, vector<1x128x512xbf16>
    %172 = vector.shape_cast %171 : vector<1x128x512xbf16> to vector<128x512xbf16>
    %173 = arith.truncf %170 : vector<17x128xf32> to vector<17x128xbf16>
    %cst_69 = arith.constant dense<0.000000e+00> : vector<17x512xf32>
    %174 = tpu.matmul %173, %172, %cst_69 {dimension_numbers = #tpu.dot_dimension_numbers<[1], [0], [0], [1], [0, 0, 1, 1], [], []>} : vector<17x128xbf16>, vector<128x512xbf16>, vector<17x512xf32> -> vector<17x512xf32>
    %c0_70 = arith.constant 0 : index
    %c0_71 = arith.constant 0 : index
    %c0_72 = arith.constant 0 : index
    %175 = vector.load %arg14[%c0_70, %c0_71, %c0_72] : memref<2x1x512xf32, #tpu.memory_space<vmem>>, vector<1x1x512xf32>
    %176 = vector.shape_cast %175 : vector<1x1x512xf32> to vector<1x512xf32>
    %177 = vector.broadcast %176 : vector<1x512xf32> to vector<17x512xf32>
    %178 = arith.addf %174, %177 : vector<17x512xf32>
    %179 = arith.mulf %178, %178 : vector<17x512xf32>
    %180 = arith.mulf %178, %179 : vector<17x512xf32>
    %cst_73 = arith.constant 4.471500e-02 : f32
    %181 = vector.broadcast %cst_73 : f32 to vector<17x512xf32>
    %182 = arith.mulf %181, %180 : vector<17x512xf32>
    %183 = arith.addf %178, %182 : vector<17x512xf32>
    %cst_74 = arith.constant 0.797884583 : f32
    %184 = vector.broadcast %cst_74 : f32 to vector<17x512xf32>
    %185 = arith.mulf %184, %183 : vector<17x512xf32>
    %186 = math.tanh %185 : vector<17x512xf32>
    %cst_75 = arith.constant 1.000000e+00 : f32
    %187 = vector.broadcast %cst_75 : f32 to vector<17x512xf32>
    %188 = arith.addf %187, %186 : vector<17x512xf32>
    %cst_76 = arith.constant 5.000000e-01 : f32
    %189 = vector.broadcast %cst_76 : f32 to vector<17x512xf32>
    %190 = arith.mulf %189, %188 : vector<17x512xf32>
    %191 = arith.mulf %178, %190 : vector<17x512xf32>
    %c0_77 = arith.constant 0 : index
    %c0_78 = arith.constant 0 : index
    %c0_79 = arith.constant 0 : index
    %192 = vector.load %arg15[%c0_77, %c0_78, %c0_79] : memref<2x512x128xbf16, #tpu.memory_space<vmem>>, vector<1x512x128xbf16>
    %193 = vector.shape_cast %192 : vector<1x512x128xbf16> to vector<512x128xbf16>
    %194 = arith.truncf %191 : vector<17x512xf32> to vector<17x512xbf16>
    %cst_80 = arith.constant dense<0.000000e+00> : vector<17x128xf32>
    %195 = tpu.matmul %194, %193, %cst_80 {dimension_numbers = #tpu.dot_dimension_numbers<[1], [0], [0], [1], [0, 0, 1, 1], [], []>} : vector<17x512xbf16>, vector<512x128xbf16>, vector<17x128xf32> -> vector<17x128xf32>
    %c0_81 = arith.constant 0 : index
    %c0_82 = arith.constant 0 : index
    %c0_83 = arith.constant 0 : index
    %196 = vector.load %arg16[%c0_81, %c0_82, %c0_83] : memref<2x1x128xf32, #tpu.memory_space<vmem>>, vector<1x1x128xf32>
    %197 = vector.shape_cast %196 : vector<1x1x128xf32> to vector<1x128xf32>
    %198 = vector.broadcast %197 : vector<1x128xf32> to vector<17x128xf32>
    %199 = arith.addf %195, %198 : vector<17x128xf32>
    %c0_84 = arith.constant 0 : index
    %c0_85 = arith.constant 0 : index
    %c0_86 = arith.constant 0 : index
    %200 = vector.load %arg17[%c0_84, %c0_85, %c0_86] : memref<2x1x128xf32, #tpu.memory_space<vmem>>, vector<1x1x128xf32>
    %201 = vector.shape_cast %200 : vector<1x1x128xf32> to vector<1x128xf32>
    %202 = vector.broadcast %201 : vector<1x128xf32> to vector<17x128xf32>
    %203 = arith.mulf %199, %202 : vector<17x128xf32>
    %204 = arith.addf %144, %203 : vector<17x128xf32>
    %c1 = arith.constant 1 : index
    %c0_87 = arith.constant 0 : index
    %c0_88 = arith.constant 0 : index
    %205 = vector.load %arg4[%c1, %c0_87, %c0_88] : memref<2x1x128xf32, #tpu.memory_space<vmem>>, vector<1x1x128xf32>
    %206 = vector.shape_cast %205 : vector<1x1x128xf32> to vector<1x128xf32>
    %c1_89 = arith.constant 1 : index
    %c0_90 = arith.constant 0 : index
    %c0_91 = arith.constant 0 : index
    %207 = vector.load %arg5[%c1_89, %c0_90, %c0_91] : memref<2x1x128xf32, #tpu.memory_space<vmem>>, vector<1x1x128xf32>
    %208 = vector.shape_cast %207 : vector<1x1x128xf32> to vector<1x128xf32>
    %cst_92 = arith.constant dense<0.000000e+00> : vector<17xf32>
    %209 = vector.multi_reduction <add>, %204, %cst_92 [1] : vector<17x128xf32> to vector<17xf32>
    %210 = vector.shape_cast %209 : vector<17xf32> to vector<17x1xf32>
    %cst_93 = arith.constant 1.280000e+02 : f32
    %211 = vector.broadcast %cst_93 : f32 to vector<17x1xf32>
    %212 = arith.divf %210, %211 : vector<17x1xf32>
    %213 = vector.broadcast %212 : vector<17x1xf32> to vector<17x128xf32>
    %214 = arith.subf %204, %213 : vector<17x128xf32>
    %215 = arith.mulf %214, %214 : vector<17x128xf32>
    %cst_94 = arith.constant dense<0.000000e+00> : vector<17xf32>
    %216 = vector.multi_reduction <add>, %215, %cst_94 [1] : vector<17x128xf32> to vector<17xf32>
    %217 = vector.shape_cast %216 : vector<17xf32> to vector<17x1xf32>
    %cst_95 = arith.constant 1.280000e+02 : f32
    %218 = vector.broadcast %cst_95 : f32 to vector<17x1xf32>
    %219 = arith.divf %217, %218 : vector<17x1xf32>
    %220 = vector.broadcast %212 : vector<17x1xf32> to vector<17x128xf32>
    %221 = arith.subf %204, %220 : vector<17x128xf32>
    %cst_96 = arith.constant 9.99999997E-7 : f32
    %222 = vector.broadcast %cst_96 : f32 to vector<17x1xf32>
    %223 = arith.addf %219, %222 : vector<17x1xf32>
    %224 = math.rsqrt %223 : vector<17x1xf32>
    %225 = vector.broadcast %224 : vector<17x1xf32> to vector<17x128xf32>
    %226 = arith.mulf %221, %225 : vector<17x128xf32>
    %227 = vector.broadcast %206 : vector<1x128xf32> to vector<17x128xf32>
    %228 = arith.mulf %226, %227 : vector<17x128xf32>
    %229 = vector.broadcast %208 : vector<1x128xf32> to vector<17x128xf32>
    %230 = arith.addf %228, %229 : vector<17x128xf32>
    %c1_97 = arith.constant 1 : index
    %c0_98 = arith.constant 0 : index
    %c0_99 = arith.constant 0 : index
    %231 = vector.load %arg6[%c1_97, %c0_98, %c0_99] : memref<2x128x384xbf16, #tpu.memory_space<vmem>>, vector<1x128x384xbf16>
    %232 = vector.shape_cast %231 : vector<1x128x384xbf16> to vector<128x384xbf16>
    %233 = arith.truncf %230 : vector<17x128xf32> to vector<17x128xbf16>
    %cst_100 = arith.constant dense<0.000000e+00> : vector<17x384xf32>
    %234 = tpu.matmul %233, %232, %cst_100 {dimension_numbers = #tpu.dot_dimension_numbers<[1], [0], [0], [1], [0, 0, 1, 1], [], []>} : vector<17x128xbf16>, vector<128x384xbf16>, vector<17x384xf32> -> vector<17x384xf32>
    %c1_101 = arith.constant 1 : index
    %c0_102 = arith.constant 0 : index
    %c0_103 = arith.constant 0 : index
    %235 = vector.load %arg7[%c1_101, %c0_102, %c0_103] : memref<2x1x384xf32, #tpu.memory_space<vmem>>, vector<1x1x384xf32>
    %236 = vector.shape_cast %235 : vector<1x1x384xf32> to vector<1x384xf32>
    %237 = vector.broadcast %236 : vector<1x384xf32> to vector<17x384xf32>
    %238 = arith.addf %234, %237 : vector<17x384xf32>
    %239 = vector.extract_strided_slice %238 {offsets = [0, 0], sizes = [17, 128], strides = [1, 1]} : vector<17x384xf32> to vector<17x128xf32>
    %cst_104 = arith.constant 0.176776692 : f32
    %240 = vector.broadcast %cst_104 : f32 to vector<17x128xf32>
    %241 = arith.mulf %239, %240 : vector<17x128xf32>
    %242 = vector.extract_strided_slice %238 {offsets = [0, 128], sizes = [17, 128], strides = [1, 1]} : vector<17x384xf32> to vector<17x128xf32>
    %243 = vector.extract_strided_slice %238 {offsets = [0, 256], sizes = [17, 128], strides = [1, 1]} : vector<17x384xf32> to vector<17x128xf32>
    %c1_105 = arith.constant 1 : index
    %c0_106 = arith.constant 0 : index
    %c0_107 = arith.constant 0 : index
    %244 = vector.load %arg8[%c1_105, %c0_106, %c0_107] : memref<2x128x128xbf16, #tpu.memory_space<vmem>>, vector<1x128x128xbf16>
    %245 = vector.shape_cast %244 : vector<1x128x128xbf16> to vector<128x128xbf16>
    %cst_108 = arith.constant 0.000000e+00 : f32
    %246 = vector.broadcast %cst_108 : f32 to vector<17x128xf32>
    %247 = vector.extract_strided_slice %241 {offsets = [0, 0], sizes = [17, 32], strides = [1, 1]} : vector<17x128xf32> to vector<17x32xf32>
    %248 = arith.truncf %247 : vector<17x32xf32> to vector<17x32xbf16>
    %249 = vector.extract_strided_slice %242 {offsets = [0, 0], sizes = [17, 32], strides = [1, 1]} : vector<17x128xf32> to vector<17x32xf32>
    %250 = arith.truncf %249 : vector<17x32xf32> to vector<17x32xbf16>
    %251 = vector.extract_strided_slice %243 {offsets = [0, 0], sizes = [17, 32], strides = [1, 1]} : vector<17x128xf32> to vector<17x32xf32>
    %252 = arith.truncf %251 : vector<17x32xf32> to vector<17x32xbf16>
    %cst_109 = arith.constant dense<0.000000e+00> : vector<17x17xf32>
    %253 = tpu.matmul %248, %250, %cst_109 {dimension_numbers = #tpu.dot_dimension_numbers<[1], [1], [0], [0], [0, 0, 1, 0], [], []>} : vector<17x32xbf16>, vector<17x32xbf16>, vector<17x17xf32> -> vector<17x17xf32>
    %cst_110 = arith.constant dense<0xFF800000> : vector<17xf32>
    %254 = vector.multi_reduction <maximumf>, %253, %cst_110 [1] : vector<17x17xf32> to vector<17xf32>
    %255 = vector.shape_cast %254 : vector<17xf32> to vector<17x1xf32>
    %256 = vector.broadcast %255 : vector<17x1xf32> to vector<17x17xf32>
    %257 = arith.subf %253, %256 : vector<17x17xf32>
    %258 = math.exp %257 : vector<17x17xf32>
    %cst_111 = arith.constant dense<0.000000e+00> : vector<17xf32>
    %259 = vector.multi_reduction <add>, %258, %cst_111 [1] : vector<17x17xf32> to vector<17xf32>
    %260 = vector.shape_cast %259 : vector<17xf32> to vector<17x1xf32>
    %261 = vector.broadcast %260 : vector<17x1xf32> to vector<17x17xf32>
    %262 = arith.divf %258, %261 : vector<17x17xf32>
    %263 = arith.truncf %262 : vector<17x17xf32> to vector<17x17xbf16>
    %cst_112 = arith.constant dense<0.000000e+00> : vector<17x32xf32>
    %264 = tpu.matmul %263, %252, %cst_112 {dimension_numbers = #tpu.dot_dimension_numbers<[1], [0], [0], [1], [0, 0, 1, 1], [], []>} : vector<17x17xbf16>, vector<17x32xbf16>, vector<17x32xf32> -> vector<17x32xf32>
    %265 = arith.truncf %264 : vector<17x32xf32> to vector<17x32xbf16>
    %266 = vector.extract_strided_slice %245 {offsets = [0, 0], sizes = [32, 128], strides = [1, 1]} : vector<128x128xbf16> to vector<32x128xbf16>
    %cst_113 = arith.constant dense<0.000000e+00> : vector<17x128xf32>
    %267 = tpu.matmul %265, %266, %cst_113 {dimension_numbers = #tpu.dot_dimension_numbers<[1], [0], [0], [1], [0, 0, 1, 1], [], []>} : vector<17x32xbf16>, vector<32x128xbf16>, vector<17x128xf32> -> vector<17x128xf32>
    %268 = arith.addf %246, %267 : vector<17x128xf32>
    %269 = vector.extract_strided_slice %241 {offsets = [0, 32], sizes = [17, 32], strides = [1, 1]} : vector<17x128xf32> to vector<17x32xf32>
    %270 = arith.truncf %269 : vector<17x32xf32> to vector<17x32xbf16>
    %271 = vector.extract_strided_slice %242 {offsets = [0, 32], sizes = [17, 32], strides = [1, 1]} : vector<17x128xf32> to vector<17x32xf32>
    %272 = arith.truncf %271 : vector<17x32xf32> to vector<17x32xbf16>
    %273 = vector.extract_strided_slice %243 {offsets = [0, 32], sizes = [17, 32], strides = [1, 1]} : vector<17x128xf32> to vector<17x32xf32>
    %274 = arith.truncf %273 : vector<17x32xf32> to vector<17x32xbf16>
    %cst_114 = arith.constant dense<0.000000e+00> : vector<17x17xf32>
    %275 = tpu.matmul %270, %272, %cst_114 {dimension_numbers = #tpu.dot_dimension_numbers<[1], [1], [0], [0], [0, 0, 1, 0], [], []>} : vector<17x32xbf16>, vector<17x32xbf16>, vector<17x17xf32> -> vector<17x17xf32>
    %cst_115 = arith.constant dense<0xFF800000> : vector<17xf32>
    %276 = vector.multi_reduction <maximumf>, %275, %cst_115 [1] : vector<17x17xf32> to vector<17xf32>
    %277 = vector.shape_cast %276 : vector<17xf32> to vector<17x1xf32>
    %278 = vector.broadcast %277 : vector<17x1xf32> to vector<17x17xf32>
    %279 = arith.subf %275, %278 : vector<17x17xf32>
    %280 = math.exp %279 : vector<17x17xf32>
    %cst_116 = arith.constant dense<0.000000e+00> : vector<17xf32>
    %281 = vector.multi_reduction <add>, %280, %cst_116 [1] : vector<17x17xf32> to vector<17xf32>
    %282 = vector.shape_cast %281 : vector<17xf32> to vector<17x1xf32>
    %283 = vector.broadcast %282 : vector<17x1xf32> to vector<17x17xf32>
    %284 = arith.divf %280, %283 : vector<17x17xf32>
    %285 = arith.truncf %284 : vector<17x17xf32> to vector<17x17xbf16>
    %cst_117 = arith.constant dense<0.000000e+00> : vector<17x32xf32>
    %286 = tpu.matmul %285, %274, %cst_117 {dimension_numbers = #tpu.dot_dimension_numbers<[1], [0], [0], [1], [0, 0, 1, 1], [], []>} : vector<17x17xbf16>, vector<17x32xbf16>, vector<17x32xf32> -> vector<17x32xf32>
    %287 = arith.truncf %286 : vector<17x32xf32> to vector<17x32xbf16>
    %288 = vector.extract_strided_slice %245 {offsets = [32, 0], sizes = [32, 128], strides = [1, 1]} : vector<128x128xbf16> to vector<32x128xbf16>
    %cst_118 = arith.constant dense<0.000000e+00> : vector<17x128xf32>
    %289 = tpu.matmul %287, %288, %cst_118 {dimension_numbers = #tpu.dot_dimension_numbers<[1], [0], [0], [1], [0, 0, 1, 1], [], []>} : vector<17x32xbf16>, vector<32x128xbf16>, vector<17x128xf32> -> vector<17x128xf32>
    %290 = arith.addf %268, %289 : vector<17x128xf32>
    %291 = vector.extract_strided_slice %241 {offsets = [0, 64], sizes = [17, 32], strides = [1, 1]} : vector<17x128xf32> to vector<17x32xf32>
    %292 = arith.truncf %291 : vector<17x32xf32> to vector<17x32xbf16>
    %293 = vector.extract_strided_slice %242 {offsets = [0, 64], sizes = [17, 32], strides = [1, 1]} : vector<17x128xf32> to vector<17x32xf32>
    %294 = arith.truncf %293 : vector<17x32xf32> to vector<17x32xbf16>
    %295 = vector.extract_strided_slice %243 {offsets = [0, 64], sizes = [17, 32], strides = [1, 1]} : vector<17x128xf32> to vector<17x32xf32>
    %296 = arith.truncf %295 : vector<17x32xf32> to vector<17x32xbf16>
    %cst_119 = arith.constant dense<0.000000e+00> : vector<17x17xf32>
    %297 = tpu.matmul %292, %294, %cst_119 {dimension_numbers = #tpu.dot_dimension_numbers<[1], [1], [0], [0], [0, 0, 1, 0], [], []>} : vector<17x32xbf16>, vector<17x32xbf16>, vector<17x17xf32> -> vector<17x17xf32>
    %cst_120 = arith.constant dense<0xFF800000> : vector<17xf32>
    %298 = vector.multi_reduction <maximumf>, %297, %cst_120 [1] : vector<17x17xf32> to vector<17xf32>
    %299 = vector.shape_cast %298 : vector<17xf32> to vector<17x1xf32>
    %300 = vector.broadcast %299 : vector<17x1xf32> to vector<17x17xf32>
    %301 = arith.subf %297, %300 : vector<17x17xf32>
    %302 = math.exp %301 : vector<17x17xf32>
    %cst_121 = arith.constant dense<0.000000e+00> : vector<17xf32>
    %303 = vector.multi_reduction <add>, %302, %cst_121 [1] : vector<17x17xf32> to vector<17xf32>
    %304 = vector.shape_cast %303 : vector<17xf32> to vector<17x1xf32>
    %305 = vector.broadcast %304 : vector<17x1xf32> to vector<17x17xf32>
    %306 = arith.divf %302, %305 : vector<17x17xf32>
    %307 = arith.truncf %306 : vector<17x17xf32> to vector<17x17xbf16>
    %cst_122 = arith.constant dense<0.000000e+00> : vector<17x32xf32>
    %308 = tpu.matmul %307, %296, %cst_122 {dimension_numbers = #tpu.dot_dimension_numbers<[1], [0], [0], [1], [0, 0, 1, 1], [], []>} : vector<17x17xbf16>, vector<17x32xbf16>, vector<17x32xf32> -> vector<17x32xf32>
    %309 = arith.truncf %308 : vector<17x32xf32> to vector<17x32xbf16>
    %310 = vector.extract_strided_slice %245 {offsets = [64, 0], sizes = [32, 128], strides = [1, 1]} : vector<128x128xbf16> to vector<32x128xbf16>
    %cst_123 = arith.constant dense<0.000000e+00> : vector<17x128xf32>
    %311 = tpu.matmul %309, %310, %cst_123 {dimension_numbers = #tpu.dot_dimension_numbers<[1], [0], [0], [1], [0, 0, 1, 1], [], []>} : vector<17x32xbf16>, vector<32x128xbf16>, vector<17x128xf32> -> vector<17x128xf32>
    %312 = arith.addf %290, %311 : vector<17x128xf32>
    %313 = vector.extract_strided_slice %241 {offsets = [0, 96], sizes = [17, 32], strides = [1, 1]} : vector<17x128xf32> to vector<17x32xf32>
    %314 = arith.truncf %313 : vector<17x32xf32> to vector<17x32xbf16>
    %315 = vector.extract_strided_slice %242 {offsets = [0, 96], sizes = [17, 32], strides = [1, 1]} : vector<17x128xf32> to vector<17x32xf32>
    %316 = arith.truncf %315 : vector<17x32xf32> to vector<17x32xbf16>
    %317 = vector.extract_strided_slice %243 {offsets = [0, 96], sizes = [17, 32], strides = [1, 1]} : vector<17x128xf32> to vector<17x32xf32>
    %318 = arith.truncf %317 : vector<17x32xf32> to vector<17x32xbf16>
    %cst_124 = arith.constant dense<0.000000e+00> : vector<17x17xf32>
    %319 = tpu.matmul %314, %316, %cst_124 {dimension_numbers = #tpu.dot_dimension_numbers<[1], [1], [0], [0], [0, 0, 1, 0], [], []>} : vector<17x32xbf16>, vector<17x32xbf16>, vector<17x17xf32> -> vector<17x17xf32>
    %cst_125 = arith.constant dense<0xFF800000> : vector<17xf32>
    %320 = vector.multi_reduction <maximumf>, %319, %cst_125 [1] : vector<17x17xf32> to vector<17xf32>
    %321 = vector.shape_cast %320 : vector<17xf32> to vector<17x1xf32>
    %322 = vector.broadcast %321 : vector<17x1xf32> to vector<17x17xf32>
    %323 = arith.subf %319, %322 : vector<17x17xf32>
    %324 = math.exp %323 : vector<17x17xf32>
    %cst_126 = arith.constant dense<0.000000e+00> : vector<17xf32>
    %325 = vector.multi_reduction <add>, %324, %cst_126 [1] : vector<17x17xf32> to vector<17xf32>
    %326 = vector.shape_cast %325 : vector<17xf32> to vector<17x1xf32>
    %327 = vector.broadcast %326 : vector<17x1xf32> to vector<17x17xf32>
    %328 = arith.divf %324, %327 : vector<17x17xf32>
    %329 = arith.truncf %328 : vector<17x17xf32> to vector<17x17xbf16>
    %cst_127 = arith.constant dense<0.000000e+00> : vector<17x32xf32>
    %330 = tpu.matmul %329, %318, %cst_127 {dimension_numbers = #tpu.dot_dimension_numbers<[1], [0], [0], [1], [0, 0, 1, 1], [], []>} : vector<17x17xbf16>, vector<17x32xbf16>, vector<17x32xf32> -> vector<17x32xf32>
    %331 = arith.truncf %330 : vector<17x32xf32> to vector<17x32xbf16>
    %332 = vector.extract_strided_slice %245 {offsets = [96, 0], sizes = [32, 128], strides = [1, 1]} : vector<128x128xbf16> to vector<32x128xbf16>
    %cst_128 = arith.constant dense<0.000000e+00> : vector<17x128xf32>
    %333 = tpu.matmul %331, %332, %cst_128 {dimension_numbers = #tpu.dot_dimension_numbers<[1], [0], [0], [1], [0, 0, 1, 1], [], []>} : vector<17x32xbf16>, vector<32x128xbf16>, vector<17x128xf32> -> vector<17x128xf32>
    %334 = arith.addf %312, %333 : vector<17x128xf32>
    %c1_129 = arith.constant 1 : index
    %c0_130 = arith.constant 0 : index
    %c0_131 = arith.constant 0 : index
    %335 = vector.load %arg9[%c1_129, %c0_130, %c0_131] : memref<2x1x128xf32, #tpu.memory_space<vmem>>, vector<1x1x128xf32>
    %336 = vector.shape_cast %335 : vector<1x1x128xf32> to vector<1x128xf32>
    %337 = vector.broadcast %336 : vector<1x128xf32> to vector<17x128xf32>
    %338 = arith.addf %334, %337 : vector<17x128xf32>
    %c1_132 = arith.constant 1 : index
    %c0_133 = arith.constant 0 : index
    %c0_134 = arith.constant 0 : index
    %339 = vector.load %arg10[%c1_132, %c0_133, %c0_134] : memref<2x1x128xf32, #tpu.memory_space<vmem>>, vector<1x1x128xf32>
    %340 = vector.shape_cast %339 : vector<1x1x128xf32> to vector<1x128xf32>
    %341 = vector.broadcast %340 : vector<1x128xf32> to vector<17x128xf32>
    %342 = arith.mulf %338, %341 : vector<17x128xf32>
    %343 = arith.addf %204, %342 : vector<17x128xf32>
    %c1_135 = arith.constant 1 : index
    %c0_136 = arith.constant 0 : index
    %c0_137 = arith.constant 0 : index
    %344 = vector.load %arg11[%c1_135, %c0_136, %c0_137] : memref<2x1x128xf32, #tpu.memory_space<vmem>>, vector<1x1x128xf32>
    %345 = vector.shape_cast %344 : vector<1x1x128xf32> to vector<1x128xf32>
    %c1_138 = arith.constant 1 : index
    %c0_139 = arith.constant 0 : index
    %c0_140 = arith.constant 0 : index
    %346 = vector.load %arg12[%c1_138, %c0_139, %c0_140] : memref<2x1x128xf32, #tpu.memory_space<vmem>>, vector<1x1x128xf32>
    %347 = vector.shape_cast %346 : vector<1x1x128xf32> to vector<1x128xf32>
    %cst_141 = arith.constant dense<0.000000e+00> : vector<17xf32>
    %348 = vector.multi_reduction <add>, %343, %cst_141 [1] : vector<17x128xf32> to vector<17xf32>
    %349 = vector.shape_cast %348 : vector<17xf32> to vector<17x1xf32>
    %cst_142 = arith.constant 1.280000e+02 : f32
    %350 = vector.broadcast %cst_142 : f32 to vector<17x1xf32>
    %351 = arith.divf %349, %350 : vector<17x1xf32>
    %352 = vector.broadcast %351 : vector<17x1xf32> to vector<17x128xf32>
    %353 = arith.subf %343, %352 : vector<17x128xf32>
    %354 = arith.mulf %353, %353 : vector<17x128xf32>
    %cst_143 = arith.constant dense<0.000000e+00> : vector<17xf32>
    %355 = vector.multi_reduction <add>, %354, %cst_143 [1] : vector<17x128xf32> to vector<17xf32>
    %356 = vector.shape_cast %355 : vector<17xf32> to vector<17x1xf32>
    %cst_144 = arith.constant 1.280000e+02 : f32
    %357 = vector.broadcast %cst_144 : f32 to vector<17x1xf32>
    %358 = arith.divf %356, %357 : vector<17x1xf32>
    %359 = vector.broadcast %351 : vector<17x1xf32> to vector<17x128xf32>
    %360 = arith.subf %343, %359 : vector<17x128xf32>
    %cst_145 = arith.constant 9.99999997E-7 : f32
    %361 = vector.broadcast %cst_145 : f32 to vector<17x1xf32>
    %362 = arith.addf %358, %361 : vector<17x1xf32>
    %363 = math.rsqrt %362 : vector<17x1xf32>
    %364 = vector.broadcast %363 : vector<17x1xf32> to vector<17x128xf32>
    %365 = arith.mulf %360, %364 : vector<17x128xf32>
    %366 = vector.broadcast %345 : vector<1x128xf32> to vector<17x128xf32>
    %367 = arith.mulf %365, %366 : vector<17x128xf32>
    %368 = vector.broadcast %347 : vector<1x128xf32> to vector<17x128xf32>
    %369 = arith.addf %367, %368 : vector<17x128xf32>
    %c1_146 = arith.constant 1 : index
    %c0_147 = arith.constant 0 : index
    %c0_148 = arith.constant 0 : index
    %370 = vector.load %arg13[%c1_146, %c0_147, %c0_148] : memref<2x128x512xbf16, #tpu.memory_space<vmem>>, vector<1x128x512xbf16>
    %371 = vector.shape_cast %370 : vector<1x128x512xbf16> to vector<128x512xbf16>
    %372 = arith.truncf %369 : vector<17x128xf32> to vector<17x128xbf16>
    %cst_149 = arith.constant dense<0.000000e+00> : vector<17x512xf32>
    %373 = tpu.matmul %372, %371, %cst_149 {dimension_numbers = #tpu.dot_dimension_numbers<[1], [0], [0], [1], [0, 0, 1, 1], [], []>} : vector<17x128xbf16>, vector<128x512xbf16>, vector<17x512xf32> -> vector<17x512xf32>
    %c1_150 = arith.constant 1 : index
    %c0_151 = arith.constant 0 : index
    %c0_152 = arith.constant 0 : index
    %374 = vector.load %arg14[%c1_150, %c0_151, %c0_152] : memref<2x1x512xf32, #tpu.memory_space<vmem>>, vector<1x1x512xf32>
    %375 = vector.shape_cast %374 : vector<1x1x512xf32> to vector<1x512xf32>
    %376 = vector.broadcast %375 : vector<1x512xf32> to vector<17x512xf32>
    %377 = arith.addf %373, %376 : vector<17x512xf32>
    %378 = arith.mulf %377, %377 : vector<17x512xf32>
    %379 = arith.mulf %377, %378 : vector<17x512xf32>
    %cst_153 = arith.constant 4.471500e-02 : f32
    %380 = vector.broadcast %cst_153 : f32 to vector<17x512xf32>
    %381 = arith.mulf %380, %379 : vector<17x512xf32>
    %382 = arith.addf %377, %381 : vector<17x512xf32>
    %cst_154 = arith.constant 0.797884583 : f32
    %383 = vector.broadcast %cst_154 : f32 to vector<17x512xf32>
    %384 = arith.mulf %383, %382 : vector<17x512xf32>
    %385 = math.tanh %384 : vector<17x512xf32>
    %cst_155 = arith.constant 1.000000e+00 : f32
    %386 = vector.broadcast %cst_155 : f32 to vector<17x512xf32>
    %387 = arith.addf %386, %385 : vector<17x512xf32>
    %cst_156 = arith.constant 5.000000e-01 : f32
    %388 = vector.broadcast %cst_156 : f32 to vector<17x512xf32>
    %389 = arith.mulf %388, %387 : vector<17x512xf32>
    %390 = arith.mulf %377, %389 : vector<17x512xf32>
    %c1_157 = arith.constant 1 : index
    %c0_158 = arith.constant 0 : index
    %c0_159 = arith.constant 0 : index
    %391 = vector.load %arg15[%c1_157, %c0_158, %c0_159] : memref<2x512x128xbf16, #tpu.memory_space<vmem>>, vector<1x512x128xbf16>
    %392 = vector.shape_cast %391 : vector<1x512x128xbf16> to vector<512x128xbf16>
    %393 = arith.truncf %390 : vector<17x512xf32> to vector<17x512xbf16>
    %cst_160 = arith.constant dense<0.000000e+00> : vector<17x128xf32>
    %394 = tpu.matmul %393, %392, %cst_160 {dimension_numbers = #tpu.dot_dimension_numbers<[1], [0], [0], [1], [0, 0, 1, 1], [], []>} : vector<17x512xbf16>, vector<512x128xbf16>, vector<17x128xf32> -> vector<17x128xf32>
    %c1_161 = arith.constant 1 : index
    %c0_162 = arith.constant 0 : index
    %c0_163 = arith.constant 0 : index
    %395 = vector.load %arg16[%c1_161, %c0_162, %c0_163] : memref<2x1x128xf32, #tpu.memory_space<vmem>>, vector<1x1x128xf32>
    %396 = vector.shape_cast %395 : vector<1x1x128xf32> to vector<1x128xf32>
    %397 = vector.broadcast %396 : vector<1x128xf32> to vector<17x128xf32>
    %398 = arith.addf %394, %397 : vector<17x128xf32>
    %c1_164 = arith.constant 1 : index
    %c0_165 = arith.constant 0 : index
    %c0_166 = arith.constant 0 : index
    %399 = vector.load %arg17[%c1_164, %c0_165, %c0_166] : memref<2x1x128xf32, #tpu.memory_space<vmem>>, vector<1x1x128xf32>
    %400 = vector.shape_cast %399 : vector<1x1x128xf32> to vector<1x128xf32>
    %401 = vector.broadcast %400 : vector<1x128xf32> to vector<17x128xf32>
    %402 = arith.mulf %398, %401 : vector<17x128xf32>
    %403 = arith.addf %343, %402 : vector<17x128xf32>
    %c0_167 = arith.constant 0 : index
    %c0_168 = arith.constant 0 : index
    %404 = vector.load %arg18[%c0_167, %c0_168] : memref<1x128xf32, #tpu.memory_space<vmem>>, vector<1x128xf32>
    %c0_169 = arith.constant 0 : index
    %c0_170 = arith.constant 0 : index
    %405 = vector.load %arg19[%c0_169, %c0_170] : memref<1x128xf32, #tpu.memory_space<vmem>>, vector<1x128xf32>
    %cst_171 = arith.constant dense<0.000000e+00> : vector<17xf32>
    %406 = vector.multi_reduction <add>, %403, %cst_171 [1] : vector<17x128xf32> to vector<17xf32>
    %407 = vector.shape_cast %406 : vector<17xf32> to vector<17x1xf32>
    %cst_172 = arith.constant 1.280000e+02 : f32
    %408 = vector.broadcast %cst_172 : f32 to vector<17x1xf32>
    %409 = arith.divf %407, %408 : vector<17x1xf32>
    %410 = vector.broadcast %409 : vector<17x1xf32> to vector<17x128xf32>
    %411 = arith.subf %403, %410 : vector<17x128xf32>
    %412 = arith.mulf %411, %411 : vector<17x128xf32>
    %cst_173 = arith.constant dense<0.000000e+00> : vector<17xf32>
    %413 = vector.multi_reduction <add>, %412, %cst_173 [1] : vector<17x128xf32> to vector<17xf32>
    %414 = vector.shape_cast %413 : vector<17xf32> to vector<17x1xf32>
    %cst_174 = arith.constant 1.280000e+02 : f32
    %415 = vector.broadcast %cst_174 : f32 to vector<17x1xf32>
    %416 = arith.divf %414, %415 : vector<17x1xf32>
    %417 = vector.broadcast %409 : vector<17x1xf32> to vector<17x128xf32>
    %418 = arith.subf %403, %417 : vector<17x128xf32>
    %cst_175 = arith.constant 9.99999997E-7 : f32
    %419 = vector.broadcast %cst_175 : f32 to vector<17x1xf32>
    %420 = arith.addf %416, %419 : vector<17x1xf32>
    %421 = math.rsqrt %420 : vector<17x1xf32>
    %422 = vector.broadcast %421 : vector<17x1xf32> to vector<17x128xf32>
    %423 = arith.mulf %418, %422 : vector<17x128xf32>
    %424 = vector.broadcast %404 : vector<1x128xf32> to vector<17x128xf32>
    %425 = arith.mulf %423, %424 : vector<17x128xf32>
    %426 = vector.broadcast %405 : vector<1x128xf32> to vector<17x128xf32>
    %427 = arith.addf %425, %426 : vector<17x128xf32>
    %c0_176 = arith.constant 0 : index
    %c0_177 = arith.constant 0 : index
    %c0_178 = arith.constant 0 : index
    %428 = vector.load %arg20[%c0_176, %c0_177, %c0_178] : memref<1x17x128xf32, #tpu.memory_space<vmem>>, vector<1x17x128xf32>
    %429 = vector.shape_cast %428 : vector<1x17x128xf32> to vector<17x128xf32>
    %430 = vector.shape_cast %427 : vector<17x128xf32> to vector<1x17x128xf32>
    tpu.vector_store %arg20[%c0_176, %c0_177, %c0_178], %430 {strides = array<i32>} : memref<1x17x128xf32, #tpu.memory_space<vmem>>, vector<1x17x128xf32>,
    return
  }
  func.func @transform_0(%arg0: i32) -> (i32, i32, i32) {
    %c0_i32 = arith.constant 0 : i32
    %c0_i32_0 = arith.constant 0 : i32
    %c0_i32_1 = arith.constant 0 : i32
    return %arg0, %c0_i32, %c0_i32_0 : i32, i32, i32
  }
  func.func @transform_1(%arg0: i32) -> (i32, i32) {
    %c0_i32 = arith.constant 0 : i32
    %c0_i32_0 = arith.constant 0 : i32
    %c0_i32_1 = arith.constant 0 : i32
    return %c0_i32, %c0_i32_0 : i32, i32
  }
  func.func @transform_2(%arg0: i32) -> (i32, i32) {
    %c0_i32 = arith.constant 0 : i32
    %c0_i32_0 = arith.constant 0 : i32
    %c0_i32_1 = arith.constant 0 : i32
    return %c0_i32, %c0_i32_0 : i32, i32
  }
  func.func @transform_3(%arg0: i32) -> (i32, i32, i32) {
    %c0_i32 = arith.constant 0 : i32
    %c0_i32_0 = arith.constant 0 : i32
    %c0_i32_1 = arith.constant 0 : i32
    %c0_i32_2 = arith.constant 0 : i32
    return %c0_i32, %c0_i32_0, %c0_i32_1 : i32, i32, i32
  }
  func.func @transform_4(%arg0: i32) -> (i32, i32, i32) {
    %c0_i32 = arith.constant 0 : i32
    %c0_i32_0 = arith.constant 0 : i32
    %c0_i32_1 = arith.constant 0 : i32
    %c0_i32_2 = arith.constant 0 : i32
    return %c0_i32, %c0_i32_0, %c0_i32_1 : i32, i32, i32
  }
  func.func @transform_5(%arg0: i32) -> (i32, i32, i32) {
    %c0_i32 = arith.constant 0 : i32
    %c0_i32_0 = arith.constant 0 : i32
    %c0_i32_1 = arith.constant 0 : i32
    %c0_i32_2 = arith.constant 0 : i32
    return %c0_i32, %c0_i32_0, %c0_i32_1 : i32, i32, i32
  }
  func.func @transform_6(%arg0: i32) -> (i32, i32, i32) {
    %c0_i32 = arith.constant 0 : i32
    %c0_i32_0 = arith.constant 0 : i32
    %c0_i32_1 = arith.constant 0 : i32
    %c0_i32_2 = arith.constant 0 : i32
    return %c0_i32, %c0_i32_0, %c0_i32_1 : i32, i32, i32
  }
  func.func @transform_7(%arg0: i32) -> (i32, i32, i32) {
    %c0_i32 = arith.constant 0 : i32
    %c0_i32_0 = arith.constant 0 : i32
    %c0_i32_1 = arith.constant 0 : i32
    %c0_i32_2 = arith.constant 0 : i32
    return %c0_i32, %c0_i32_0, %c0_i32_1 : i32, i32, i32
  }
  func.func @transform_8(%arg0: i32) -> (i32, i32, i32) {
    %c0_i32 = arith.constant 0 : i32
    %c0_i32_0 = arith.constant 0 : i32
    %c0_i32_1 = arith.constant 0 : i32
    %c0_i32_2 = arith.constant 0 : i32
    return %c0_i32, %c0_i32_0, %c0_i32_1 : i32, i32, i32
  }
  func.func @transform_9(%arg0: i32) -> (i32, i32, i32) {
    %c0_i32 = arith.constant 0 : i32
    %c0_i32_0 = arith.constant 0 : i32
    %c0_i32_1 = arith.constant 0 : i32
    %c0_i32_2 = arith.constant 0 : i32
    return %c0_i32, %c0_i32_0, %c0_i32_1 : i32, i32, i32
  }
  func.func @transform_10(%arg0: i32) -> (i32, i32, i32) {
    %c0_i32 = arith.constant 0 : i32
    %c0_i32_0 = arith.constant 0 : i32
    %c0_i32_1 = arith.constant 0 : i32
    %c0_i32_2 = arith.constant 0 : i32
    return %c0_i32, %c0_i32_0, %c0_i32_1 : i32, i32, i32
  }
  func.func @transform_11(%arg0: i32) -> (i32, i32, i32) {
    %c0_i32 = arith.constant 0 : i32
    %c0_i32_0 = arith.constant 0 : i32
    %c0_i32_1 = arith.constant 0 : i32
    %c0_i32_2 = arith.constant 0 : i32
    return %c0_i32, %c0_i32_0, %c0_i32_1 : i32, i32, i32
  }
  func.func @transform_12(%arg0: i32) -> (i32, i32, i32) {
    %c0_i32 = arith.constant 0 : i32
    %c0_i32_0 = arith.constant 0 : i32
    %c0_i32_1 = arith.constant 0 : i32
    %c0_i32_2 = arith.constant 0 : i32
    return %c0_i32, %c0_i32_0, %c0_i32_1 : i32, i32, i32
  }
  func.func @transform_13(%arg0: i32) -> (i32, i32, i32) {
    %c0_i32 = arith.constant 0 : i32
    %c0_i32_0 = arith.constant 0 : i32
    %c0_i32_1 = arith.constant 0 : i32
    %c0_i32_2 = arith.constant 0 : i32
    return %c0_i32, %c0_i32_0, %c0_i32_1 : i32, i32, i32
  }
  func.func @transform_14(%arg0: i32) -> (i32, i32, i32) {
    %c0_i32 = arith.constant 0 : i32
    %c0_i32_0 = arith.constant 0 : i32
    %c0_i32_1 = arith.constant 0 : i32
    %c0_i32_2 = arith.constant 0 : i32
    return %c0_i32, %c0_i32_0, %c0_i32_1 : i32, i32, i32
  }
  func.func @transform_15(%arg0: i32) -> (i32, i32, i32) {
    %c0_i32 = arith.constant 0 : i32
    %c0_i32_0 = arith.constant 0 : i32
    %c0_i32_1 = arith.constant 0 : i32
    %c0_i32_2 = arith.constant 0 : i32
    return %c0_i32, %c0_i32_0, %c0_i32_1 : i32, i32, i32
  }
  func.func @transform_16(%arg0: i32) -> (i32, i32, i32) {
    %c0_i32 = arith.constant 0 : i32
    %c0_i32_0 = arith.constant 0 : i32
    %c0_i32_1 = arith.constant 0 : i32
    %c0_i32_2 = arith.constant 0 : i32
    return %c0_i32, %c0_i32_0, %c0_i32_1 : i32, i32, i32
  }
  func.func @transform_17(%arg0: i32) -> (i32, i32) {
    %c0_i32 = arith.constant 0 : i32
    %c0_i32_0 = arith.constant 0 : i32
    %c0_i32_1 = arith.constant 0 : i32
    return %c0_i32, %c0_i32_0 : i32, i32
  }
  func.func @transform_18(%arg0: i32) -> (i32, i32) {
    %c0_i32 = arith.constant 0 : i32
    %c0_i32_0 = arith.constant 0 : i32
    %c0_i32_1 = arith.constant 0 : i32
    return %c0_i32, %c0_i32_0 : i32, i32
  }
  func.func @transform_19(%arg0: i32) -> (i32, i32, i32) {
    %c0_i32 = arith.constant 0 : i32
    %c0_i32_0 = arith.constant 0 : i32
    %c0_i32_1 = arith.constant 0 : i32
    return %arg0, %c0_i32, %c0_i32_0 : i32, i32, i32
  }
}

</mosaic_0001>

<llo_original>
// kernel: dinov2_forward.1
$region0: #{dinov2_forward.1}
  #allocation0 [shape = 'u32[]', space=smem, size = 0x4, offset = 0x4, fixed_abs, tag = 'smem constant byte address 0x4 - core index']
  #allocation1 [shape = 'u32[144,128]{1,0:T(1,128)}', space=vmem, size = 0x12000, scoped, tag = 'internal scratch']
  %s0 = inlined_call_operand.vmem [shape: bf16[2,17,640], index: 0, kind: input, shape index: {}]
  %s1 = inlined_call_operand.vmem [shape: bf16[640,128], index: 1, kind: input, shape index: {}]
  %s2 = inlined_call_operand.vmem [shape: f32[17,128], index: 2, kind: input, shape index: {}]
  %s3 = inlined_call_operand.vmem [shape: f32[2,1,128], index: 3, kind: input, shape index: {}]
  %s4 = inlined_call_operand.vmem [shape: f32[2,1,128], index: 4, kind: input, shape index: {}]
  %s5 = inlined_call_operand.vmem [shape: bf16[2,128,384], index: 5, kind: input, shape index: {}]
  %s6 = inlined_call_operand.vmem [shape: f32[2,1,384], index: 6, kind: input, shape index: {}]
  %s7 = inlined_call_operand.vmem [shape: bf16[2,128,128], index: 7, kind: input, shape index: {}]
  %s8 = inlined_call_operand.vmem [shape: f32[2,1,128], index: 8, kind: input, shape index: {}]
  %s9 = inlined_call_operand.vmem [shape: f32[2,1,128], index: 9, kind: input, shape index: {}]
  %s10 = inlined_call_operand.vmem [shape: f32[2,1,128], index: 10, kind: input, shape index: {}]
  %s11 = inlined_call_operand.vmem [shape: f32[2,1,128], index: 11, kind: input, shape index: {}]
  %s12 = inlined_call_operand.vmem [shape: bf16[2,128,512], index: 12, kind: input, shape index: {}]
  %s13 = inlined_call_operand.vmem [shape: f32[2,1,512], index: 13, kind: input, shape index: {}]
  %s14 = inlined_call_operand.vmem [shape: bf16[2,512,128], index: 14, kind: input, shape index: {}]
  %s15 = inlined_call_operand.vmem [shape: f32[2,1,128], index: 15, kind: input, shape index: {}]
  %s16 = inlined_call_operand.vmem [shape: f32[2,1,128], index: 16, kind: input, shape index: {}]
  %s17 = inlined_call_operand.vmem [shape: f32[1,128], index: 17, kind: input, shape index: {}]
  %s18 = inlined_call_operand.vmem [shape: f32[1,128], index: 18, kind: input, shape index: {}]
  %s19 = inlined_call_operand.vmem [shape: f32[2,17,128], index: 19, kind: output, shape index: {}]
  %s20 = sld [smem:[#allocation0]]
  $region109: #{dinov2_forward.1} parent=0
    _
  %s22 = ssub.s32 1, %s20
  %s23 = scalar_select 0, %s22, %s20
  loop: start=0, step=1, limit=4
  $region2: #{dinov2_forward.1} parent=0 // loop_pre_header
    _
  $region3: #{dinov2_forward.1} parent=0 // loop_header
    %s25 = sphi 0, %s29
    %p26 = scmp.ge.s32.totalorder %s25, 4
    %s35 = sphi 0, %s37
    %s38 = sphi 0, %s35
    %s39 = sphi 0, %s38
    %s55 = sphi 0, %s39
    %s59 = sphi 0, %s59
    %s61 = sphi 0, %s59
    %s62 = sphi 0, %s61
    %s76 = sphi 0, %s62
    %s80 = sphi 0, %s80
    %s82 = sphi 0, %s80
    %s83 = sphi 0, %s82
    %s97 = sphi 0, %s83
    %s101 = sphi 0, %s101
    %s103 = sphi 0, %s101
    %s104 = sphi 0, %s103
    %s118 = sphi 0, %s104
    %s122 = sphi 0, %s122
    %s124 = sphi 0, %s122
    %s125 = sphi 0, %s124
    %s139 = sphi 0, %s125
    %s143 = sphi 0, %s143
    %s145 = sphi 0, %s143
    %s146 = sphi 0, %s145
    %s160 = sphi 0, %s146
    %s164 = sphi 0, %s164
    %s166 = sphi 0, %s164
    %s167 = sphi 0, %s166
    %s181 = sphi 0, %s167
    %s185 = sphi 0, %s185
    %s187 = sphi 0, %s185
    %s188 = sphi 0, %s187
    %s202 = sphi 0, %s188
    %s206 = sphi 0, %s206
    %s208 = sphi 0, %s206
    %s209 = sphi 0, %s208
    %s223 = sphi 0, %s209
    %s227 = sphi 0, %s227
    %s229 = sphi 0, %s227
    %s230 = sphi 0, %s229
    %s244 = sphi 0, %s230
    %s248 = sphi 0, %s248
    %s250 = sphi 0, %s248
    %s251 = sphi 0, %s250
    %s265 = sphi 0, %s251
    %s269 = sphi 0, %s269
    %s271 = sphi 0, %s269
    %s272 = sphi 0, %s271
    %s286 = sphi 0, %s272
    %s290 = sphi 0, %s290
    %s292 = sphi 0, %s290
    %s293 = sphi 0, %s292
    %s307 = sphi 0, %s293
    %s311 = sphi 0, %s311
    %s313 = sphi 0, %s311
    %s314 = sphi 0, %s313
    %s328 = sphi 0, %s314
    %s332 = sphi 0, %s332
    %s334 = sphi 0, %s332
    %s335 = sphi 0, %s334
    %s349 = sphi 0, %s335
    %s353 = sphi 0, %s353
    %s355 = sphi 0, %s353
    %s356 = sphi 0, %s355
    %s370 = sphi 0, %s356
    %s374 = sphi 0, %s374
    %s376 = sphi 0, %s374
    %s377 = sphi 0, %s376
    %s391 = sphi 0, %s377
    %s395 = sphi 0, %s395
    %s397 = sphi 0, %s395
    %s398 = sphi 0, %s397
    %s412 = sphi 0, %s398
    %s416 = sphi 0, %s416
    %s418 = sphi 0, %s416
    %s419 = sphi 0, %s418
    %s433 = sphi 0, %s419
    %s439 = sphi 0, %s441
    %s442 = sphi 0, %s439
    %s443 = sphi 0, %s442
    %s459 = sphi 0, %s443
  $region4: #{dinov2_forward.1} parent=0 // loop_header_branch
    %28 = sbr.rel (%p26) target = $region8
  $region5: #{dinov2_forward.1} parent=0 // loop_body
    %s30 = ssub.s32 %s25, 1
    %s31 = ssub.s32 %s25, 2
    %s32 = sadd.s32 %s25, 1
    %s33 = ssub.s32 %s25, %s32
    %p34 = scmp.eq.s32.totalorder %s33, 0
    %s36 = sadd.s32 %s35, 1
    %s37 = scalar_select %p34, %s35, %s36
    %p40 = pneg %p34
    %p41 = scmp.eq.s32.totalorder %s25, 1
    %p42 = por %p40, %p41
    %p43 = scmp.ne.s32.totalorder %s35, %s38
    %p44 = scmp.eq.s32.totalorder %s25, 0
    %p45 = por %p43, %p44
    %p46 = scmp.ne.s32.totalorder %s35, %s38
    %p47 = scmp.eq.s32.totalorder %s30, 1
    %p48 = por %p46, %p47
    %p49 = scmp.ne.s32.totalorder %s38, %s39
    %p50 = scmp.eq.s32.totalorder %s30, 0
    %p51 = por %p49, %p50
    %p52 = scmp.ne.s32.totalorder %s38, %s39
    %p53 = scmp.eq.s32.totalorder %s31, 1
    %p54 = por %p52, %p53
    %p56 = scmp.ne.s32.totalorder %s39, %s55
    %p57 = scmp.eq.s32.totalorder %s31, 0
    %p58 = por %p56, %p57
    %s60 = sadd.s32 %s59, 1
    %p63 = scmp.eq.s32.totalorder %s25, 1
    %p64 = scmp.ne.s32.totalorder %s59, %s61
    %p65 = scmp.eq.s32.totalorder %s25, 0
    %p66 = por %p64, %p65
    %p67 = scmp.ne.s32.totalorder %s59, %s61
    %p68 = scmp.eq.s32.totalorder %s30, 1
    %p69 = por %p67, %p68
    %p70 = scmp.ne.s32.totalorder %s61, %s62
    %p71 = scmp.eq.s32.totalorder %s30, 0
    %p72 = por %p70, %p71
    %p73 = scmp.ne.s32.totalorder %s61, %s62
    %p74 = scmp.eq.s32.totalorder %s31, 1
    %p75 = por %p73, %p74
    %p77 = scmp.ne.s32.totalorder %s62, %s76
    %p78 = scmp.eq.s32.totalorder %s31, 0
    %p79 = por %p77, %p78
    %s81 = sadd.s32 %s80, 1
    %p84 = scmp.eq.s32.totalorder %s25, 1
    %p85 = scmp.ne.s32.totalorder %s80, %s82
    %p86 = scmp.eq.s32.totalorder %s25, 0
    %p87 = por %p85, %p86
    %p88 = scmp.ne.s32.totalorder %s80, %s82
    %p89 = scmp.eq.s32.totalorder %s30, 1
    %p90 = por %p88, %p89
    %p91 = scmp.ne.s32.totalorder %s82, %s83
    %p92 = scmp.eq.s32.totalorder %s30, 0
    %p93 = por %p91, %p92
    %p94 = scmp.ne.s32.totalorder %s82, %s83
    %p95 = scmp.eq.s32.totalorder %s31, 1
    %p96 = por %p94, %p95
    %p98 = scmp.ne.s32.totalorder %s83, %s97
    %p99 = scmp.eq.s32.totalorder %s31, 0
    %p100 = por %p98, %p99
    %s102 = sadd.s32 %s101, 1
    %p105 = scmp.eq.s32.totalorder %s25, 1
    %p106 = scmp.ne.s32.totalorder %s101, %s103
    %p107 = scmp.eq.s32.totalorder %s25, 0
    %p108 = por %p106, %p107
    %p109 = scmp.ne.s32.totalorder %s101, %s103
    %p110 = scmp.eq.s32.totalorder %s30, 1
    %p111 = por %p109, %p110
    %p112 = scmp.ne.s32.totalorder %s103, %s104
    %p113 = scmp.eq.s32.totalorder %s30, 0
    %p114 = por %p112, %p113
    %p115 = scmp.ne.s32.totalorder %s103, %s104
    %p116 = scmp.eq.s32.totalorder %s31, 1
    %p117 = por %p115, %p116
    %p119 = scmp.ne.s32.totalorder %s104, %s118
    %p120 = scmp.eq.s32.totalorder %s31, 0
    %p121 = por %p119, %p120
    %s123 = sadd.s32 %s122, 1
    %p126 = scmp.eq.s32.totalorder %s25, 1
    %p127 = scmp.ne.s32.totalorder %s122, %s124
    %p128 = scmp.eq.s32.totalorder %s25, 0
    %p129 = por %p127, %p128
    %p130 = scmp.ne.s32.totalorder %s122, %s124
    %p131 = scmp.eq.s32.totalorder %s30, 1
    %p132 = por %p130, %p131
    %p133 = scmp.ne.s32.totalorder %s124, %s125
    %p134 = scmp.eq.s32.totalorder %s30, 0
    %p135 = por %p133, %p134
    %p136 = scmp.ne.s32.totalorder %s124, %s125
    %p137 = scmp.eq.s32.totalorder %s31, 1
    %p138 = por %p136, %p137
    %p140 = scmp.ne.s32.totalorder %s125, %s139
    %p141 = scmp.eq.s32.totalorder %s31, 0
    %p142 = por %p140, %p141
    %s144 = sadd.s32 %s143, 1
    %p147 = scmp.eq.s32.totalorder %s25, 1
    %p148 = scmp.ne.s32.totalorder %s143, %s145
    %p149 = scmp.eq.s32.totalorder %s25, 0
    %p150 = por %p148, %p149
    %p151 = scmp.ne.s32.totalorder %s143, %s145
    %p152 = scmp.eq.s32.totalorder %s30, 1
    %p153 = por %p151, %p152
    %p154 = scmp.ne.s32.totalorder %s145, %s146
    %p155 = scmp.eq.s32.totalorder %s30, 0
    %p156 = por %p154, %p155
    %p157 = scmp.ne.s32.totalorder %s145, %s146
    %p158 = scmp.eq.s32.totalorder %s31, 1
    %p159 = por %p157, %p158
    %p161 = scmp.ne.s32.totalorder %s146, %s160
    %p162 = scmp.eq.s32.totalorder %s31, 0
    %p163 = por %p161, %p162
    %s165 = sadd.s32 %s164, 1
    %p168 = scmp.eq.s32.totalorder %s25, 1
    %p169 = scmp.ne.s32.totalorder %s164, %s166
    %p170 = scmp.eq.s32.totalorder %s25, 0
    %p171 = por %p169, %p170
    %p172 = scmp.ne.s32.totalorder %s164, %s166
    %p173 = scmp.eq.s32.totalorder %s30, 1
    %p174 = por %p172, %p173
    %p175 = scmp.ne.s32.totalorder %s166, %s167
    %p176 = scmp.eq.s32.totalorder %s30, 0
    %p177 = por %p175, %p176
    %p178 = scmp.ne.s32.totalorder %s166, %s167
    %p179 = scmp.eq.s32.totalorder %s31, 1
    %p180 = por %p178, %p179
    %p182 = scmp.ne.s32.totalorder %s167, %s181
    %p183 = scmp.eq.s32.totalorder %s31, 0
    %p184 = por %p182, %p183
    %s186 = sadd.s32 %s185, 1
    %p189 = scmp.eq.s32.totalorder %s25, 1
    %p190 = scmp.ne.s32.totalorder %s185, %s187
    %p191 = scmp.eq.s32.totalorder %s25, 0
    %p192 = por %p190, %p191
    %p193 = scmp.ne.s32.totalorder %s185, %s187
    %p194 = scmp.eq.s32.totalorder %s30, 1
    %p195 = por %p193, %p194
    %p196 = scmp.ne.s32.totalorder %s187, %s188
    %p197 = scmp.eq.s32.totalorder %s30, 0
    %p198 = por %p196, %p197
    %p199 = scmp.ne.s32.totalorder %s187, %s188
    %p200 = scmp.eq.s32.totalorder %s31, 1
    %p201 = por %p199, %p200
    %p203 = scmp.ne.s32.totalorder %s188, %s202
    %p204 = scmp.eq.s32.totalorder %s31, 0
    %p205 = por %p203, %p204
    %s207 = sadd.s32 %s206, 1
    %p210 = scmp.eq.s32.totalorder %s25, 1
    %p211 = scmp.ne.s32.totalorder %s206, %s208
    %p212 = scmp.eq.s32.totalorder %s25, 0
    %p213 = por %p211, %p212
    %p214 = scmp.ne.s32.totalorder %s206, %s208
    %p215 = scmp.eq.s32.totalorder %s30, 1
    %p216 = por %p214, %p215
    %p217 = scmp.ne.s32.totalorder %s208, %s209
    %p218 = scmp.eq.s32.totalorder %s30, 0
    %p219 = por %p217, %p218
    %p220 = scmp.ne.s32.totalorder %s208, %s209
    %p221 = scmp.eq.s32.totalorder %s31, 1
    %p222 = por %p220, %p221
    %p224 = scmp.ne.s32.totalorder %s209, %s223
    %p225 = scmp.eq.s32.totalorder %s31, 0
    %p226 = por %p224, %p225
    %s228 = sadd.s32 %s227, 1
    %p231 = scmp.eq.s32.totalorder %s25, 1
    %p232 = scmp.ne.s32.totalorder %s227, %s229
    %p233 = scmp.eq.s32.totalorder %s25, 0
    %p234 = por %p232, %p233
    %p235 = scmp.ne.s32.totalorder %s227, %s229
    %p236 = scmp.eq.s32.totalorder %s30, 1
    %p237 = por %p235, %p236
    %p238 = scmp.ne.s32.totalorder %s229, %s230
    %p239 = scmp.eq.s32.totalorder %s30, 0
    %p240 = por %p238, %p239
    %p241 = scmp.ne.s32.totalorder %s229, %s230
    %p242 = scmp.eq.s32.totalorder %s31, 1
    %p243 = por %p241, %p242
    %p245 = scmp.ne.s32.totalorder %s230, %s244
    %p246 = scmp.eq.s32.totalorder %s31, 0
    %p247 = por %p245, %p246
    %s249 = sadd.s32 %s248, 1
    %p252 = scmp.eq.s32.totalorder %s25, 1
    %p253 = scmp.ne.s32.totalorder %s248, %s250
    %p254 = scmp.eq.s32.totalorder %s25, 0
    %p255 = por %p253, %p254
    %p256 = scmp.ne.s32.totalorder %s248, %s250
    %p257 = scmp.eq.s32.totalorder %s30, 1
    %p258 = por %p256, %p257
    %p259 = scmp.ne.s32.totalorder %s250, %s251
    %p260 = scmp.eq.s32.totalorder %s30, 0
    %p261 = por %p259, %p260
    %p262 = scmp.ne.s32.totalorder %s250, %s251
    %p263 = scmp.eq.s32.totalorder %s31, 1
    %p264 = por %p262, %p263
    %p266 = scmp.ne.s32.totalorder %s251, %s265
    %p267 = scmp.eq.s32.totalorder %s31, 0
    %p268 = por %p266, %p267
    %s270 = sadd.s32 %s269, 1
    %p273 = scmp.eq.s32.totalorder %s25, 1
    %p274 = scmp.ne.s32.totalorder %s269, %s271
    %p275 = scmp.eq.s32.totalorder %s25, 0
    %p276 = por %p274, %p275
    %p277 = scmp.ne.s32.totalorder %s269, %s271
    %p278 = scmp.eq.s32.totalorder %s30, 1
    %p279 = por %p277, %p278
    %p280 = scmp.ne.s32.totalorder %s271, %s272
    %p281 = scmp.eq.s32.totalorder %s30, 0
    %p282 = por %p280, %p281
    %p283 = scmp.ne.s32.totalorder %s271, %s272
    %p284 = scmp.eq.s32.totalorder %s31, 1
    %p285 = por %p283, %p284
    %p287 = scmp.ne.s32.totalorder %s272, %s286
    %p288 = scmp.eq.s32.totalorder %s31, 0
    %p289 = por %p287, %p288
    %s291 = sadd.s32 %s290, 1
    %p294 = scmp.eq.s32.totalorder %s25, 1
    %p295 = scmp.ne.s32.totalorder %s290, %s292
    %p296 = scmp.eq.s32.totalorder %s25, 0
    %p297 = por %p295, %p296
    %p298 = scmp.ne.s32.totalorder %s290, %s292
    %p299 = scmp.eq.s32.totalorder %s30, 1
    %p300 = por %p298, %p299
    %p301 = scmp.ne.s32.totalorder %s292, %s293
    %p302 = scmp.eq.s32.totalorder %s30, 0
    %p303 = por %p301, %p302
    %p304 = scmp.ne.s32.totalorder %s292, %s293
    %p305 = scmp.eq.s32.totalorder %s31, 1
    %p306 = por %p304, %p305
    %p308 = scmp.ne.s32.totalorder %s293, %s307
    %p309 = scmp.eq.s32.totalorder %s31, 0
    %p310 = por %p308, %p309
    %s312 = sadd.s32 %s311, 1
    %p315 = scmp.eq.s32.totalorder %s25, 1
    %p316 = scmp.ne.s32.totalorder %s311, %s313
    %p317 = scmp.eq.s32.totalorder %s25, 0
    %p318 = por %p316, %p317
    %p319 = scmp.ne.s32.totalorder %s311, %s313
    %p320 = scmp.eq.s32.totalorder %s30, 1
    %p321 = por %p319, %p320
    %p322 = scmp.ne.s32.totalorder %s313, %s314
    %p323 = scmp.eq.s32.totalorder %s30, 0
    %p324 = por %p322, %p323
    %p325 = scmp.ne.s32.totalorder %s313, %s314
    %p326 = scmp.eq.s32.totalorder %s31, 1
    %p327 = por %p325, %p326
    %p329 = scmp.ne.s32.totalorder %s314, %s328
    %p330 = scmp.eq.s32.totalorder %s31, 0
    %p331 = por %p329, %p330
    %s333 = sadd.s32 %s332, 1
    %p336 = scmp.eq.s32.totalorder %s25, 1
    %p337 = scmp.ne.s32.totalorder %s332, %s334
    %p338 = scmp.eq.s32.totalorder %s25, 0
    %p339 = por %p337, %p338
    %p340 = scmp.ne.s32.totalorder %s332, %s334
    %p341 = scmp.eq.s32.totalorder %s30, 1
    %p342 = por %p340, %p341
    %p343 = scmp.ne.s32.totalorder %s334, %s335
    %p344 = scmp.eq.s32.totalorder %s30, 0
    %p345 = por %p343, %p344
    %p346 = scmp.ne.s32.totalorder %s334, %s335
    %p347 = scmp.eq.s32.totalorder %s31, 1
    %p348 = por %p346, %p347
    %p350 = scmp.ne.s32.totalorder %s335, %s349
    %p351 = scmp.eq.s32.totalorder %s31, 0
    %p352 = por %p350, %p351
    %s354 = sadd.s32 %s353, 1
    %p357 = scmp.eq.s32.totalorder %s25, 1
    %p358 = scmp.ne.s32.totalorder %s353, %s355
    %p359 = scmp.eq.s32.totalorder %s25, 0
    %p360 = por %p358, %p359
    %p361 = scmp.ne.s32.totalorder %s353, %s355
    %p362 = scmp.eq.s32.totalorder %s30, 1
    %p363 = por %p361, %p362
    %p364 = scmp.ne.s32.totalorder %s355, %s356
    %p365 = scmp.eq.s32.totalorder %s30, 0
    %p366 = por %p364, %p365
    %p367 = scmp.ne.s32.totalorder %s355, %s356
    %p368 = scmp.eq.s32.totalorder %s31, 1
    %p369 = por %p367, %p368
    %p371 = scmp.ne.s32.totalorder %s356, %s370
    %p372 = scmp.eq.s32.totalorder %s31, 0
    %p373 = por %p371, %p372
    %s375 = sadd.s32 %s374, 1
    %p378 = scmp.eq.s32.totalorder %s25, 1
    %p379 = scmp.ne.s32.totalorder %s374, %s376
    %p380 = scmp.eq.s32.totalorder %s25, 0
    %p381 = por %p379, %p380
    %p382 = scmp.ne.s32.totalorder %s374, %s376
    %p383 = scmp.eq.s32.totalorder %s30, 1
    %p384 = por %p382, %p383
    %p385 = scmp.ne.s32.totalorder %s376, %s377
    %p386 = scmp.eq.s32.totalorder %s30, 0
    %p387 = por %p385, %p386
    %p388 = scmp.ne.s32.totalorder %s376, %s377
    %p389 = scmp.eq.s32.totalorder %s31, 1
    %p390 = por %p388, %p389
    %p392 = scmp.ne.s32.totalorder %s377, %s391
    %p393 = scmp.eq.s32.totalorder %s31, 0
    %p394 = por %p392, %p393
    %s396 = sadd.s32 %s395, 1
    %p399 = scmp.eq.s32.totalorder %s25, 1
    %p400 = scmp.ne.s32.totalorder %s395, %s397
    %p401 = scmp.eq.s32.totalorder %s25, 0
    %p402 = por %p400, %p401
    %p403 = scmp.ne.s32.totalorder %s395, %s397
    %p404 = scmp.eq.s32.totalorder %s30, 1
    %p405 = por %p403, %p404
    %p406 = scmp.ne.s32.totalorder %s397, %s398
    %p407 = scmp.eq.s32.totalorder %s30, 0
    %p408 = por %p406, %p407
    %p409 = scmp.ne.s32.totalorder %s397, %s398
    %p410 = scmp.eq.s32.totalorder %s31, 1
    %p411 = por %p409, %p410
    %p413 = scmp.ne.s32.totalorder %s398, %s412
    %p414 = scmp.eq.s32.totalorder %s31, 0
    %p415 = por %p413, %p414
    %s417 = sadd.s32 %s416, 1
    %p420 = scmp.eq.s32.totalorder %s25, 1
    %p421 = scmp.ne.s32.totalorder %s416, %s418
    %p422 = scmp.eq.s32.totalorder %s25, 0
    %p423 = por %p421, %p422
    %p424 = scmp.ne.s32.totalorder %s416, %s418
    %p425 = scmp.eq.s32.totalorder %s30, 1
    %p426 = por %p424, %p425
    %p427 = scmp.ne.s32.totalorder %s418, %s419
    %p428 = scmp.eq.s32.totalorder %s30, 0
    %p429 = por %p427, %p428
    %p430 = scmp.ne.s32.totalorder %s418, %s419
    %p431 = scmp.eq.s32.totalorder %s31, 1
    %p432 = por %p430, %p431
    %p434 = scmp.ne.s32.totalorder %s419, %s433
    %p435 = scmp.eq.s32.totalorder %s31, 0
    %p436 = por %p434, %p435
    %s437 = ssub.s32 %s25, %s32
    %p438 = scmp.eq.s32.totalorder %s437, 0
    %s440 = sadd.s32 %s439, 1
    %s441 = scalar_select %p438, %s439, %s440
    %p444 = pneg %p438
    %p445 = scmp.eq.s32.totalorder %s25, 1
    %p446 = por %p444, %p445
    %p447 = scmp.ne.s32.totalorder %s439, %s442
    %p448 = scmp.eq.s32.totalorder %s25, 0
    %p449 = por %p447, %p448
    %p450 = scmp.ne.s32.totalorder %s439, %s442
    %p451 = scmp.eq.s32.totalorder %s30, 1
    %p452 = por %p450, %p451
    %p453 = scmp.ne.s32.totalorder %s442, %s443
    %p454 = scmp.eq.s32.totalorder %s30, 0
    %p455 = por %p453, %p454
    %p456 = scmp.ne.s32.totalorder %s442, %s443
    %p457 = scmp.eq.s32.totalorder %s31, 1
    %p458 = por %p456, %p457
    %p460 = scmp.ne.s32.totalorder %s443, %s459
    %p461 = scmp.eq.s32.totalorder %s31, 0
    %p462 = por %p460, %p461
    %p463 = scmp.le.s32.totalorder 1, %s25
    %p464 = scmp.lt.s32.totalorder %s25, 3
    %p465 = pnand %p463, %p464
    %p466 = pneg %p465
    // Predicated region
    $region9: #{dinov2_forward.1} parent=5 // pred_check
      _
    $region10: #{dinov2_forward.1} parent=5 // pred_check_branch
      %468 = sbr.rel (%p465) target = $region12
    $region11: #{dinov2_forward.1} parent=5 // pred_region
      %s469 = ssub.s32 %s25, 1
      // Predicated region
      $region13: #{dinov2_forward.1} parent=11 // pred_check
        %p470 = pneg %p72
      $region14: #{dinov2_forward.1} parent=11 // pred_check_branch
        %472 = sbr.rel (%p470) target = $region16
      $region15: #{dinov2_forward.1} parent=11 // pred_region
        _
      $region16: #{dinov2_forward.1} parent=11 // pred_fallthru
        _
      // Predicated region
      $region17: #{dinov2_forward.1} parent=11 // pred_check
        %p473 = pneg %p93
      $region18: #{dinov2_forward.1} parent=11 // pred_check_branch
        %475 = sbr.rel (%p473) target = $region20
      $region19: #{dinov2_forward.1} parent=11 // pred_region
        _
      $region20: #{dinov2_forward.1} parent=11 // pred_fallthru
        _
      // Predicated region
      $region21: #{dinov2_forward.1} parent=11 // pred_check
        %p476 = pneg %p114
      $region22: #{dinov2_forward.1} parent=11 // pred_check_branch
        %478 = sbr.rel (%p476) target = $region24
      $region23: #{dinov2_forward.1} parent=11 // pred_region
        _
      $region24: #{dinov2_forward.1} parent=11 // pred_fallthru
        _
      // Predicated region
      $region25: #{dinov2_forward.1} parent=11 // pred_check
        %p479 = pneg %p135
      $region26: #{dinov2_forward.1} parent=11 // pred_check_branch
        %481 = sbr.rel (%p479) target = $region28
      $region27: #{dinov2_forward.1} parent=11 // pred_region
        _
      $region28: #{dinov2_forward.1} parent=11 // pred_fallthru
        _
      // Predicated region
      $region29: #{dinov2_forward.1} parent=11 // pred_check
        %p482 = pneg %p156
      $region30: #{dinov2_forward.1} parent=11 // pred_check_branch
        %484 = sbr.rel (%p482) target = $region32
      $region31: #{dinov2_forward.1} parent=11 // pred_region
        _
      $region32: #{dinov2_forward.1} parent=11 // pred_fallthru
        _
      // Predicated region
      $region33: #{dinov2_forward.1} parent=11 // pred_check
        %p485 = pneg %p177
      $region34: #{dinov2_forward.1} parent=11 // pred_check_branch
        %487 = sbr.rel (%p485) target = $region36
      $region35: #{dinov2_forward.1} parent=11 // pred_region
        _
      $region36: #{dinov2_forward.1} parent=11 // pred_fallthru
        _
      // Predicated region
      $region37: #{dinov2_forward.1} parent=11 // pred_check
        %p488 = pneg %p198
      $region38: #{dinov2_forward.1} parent=11 // pred_check_branch
        %490 = sbr.rel (%p488) target = $region40
      $region39: #{dinov2_forward.1} parent=11 // pred_region
        _
      $region40: #{dinov2_forward.1} parent=11 // pred_fallthru
        _
      // Predicated region
      $region41: #{dinov2_forward.1} parent=11 // pred_check
        %p491 = pneg %p219
      $region42: #{dinov2_forward.1} parent=11 // pred_check_branch
        %493 = sbr.rel (%p491) target = $region44
      $region43: #{dinov2_forward.1} parent=11 // pred_region
        _
      $region44: #{dinov2_forward.1} parent=11 // pred_fallthru
        _
      // Predicated region
      $region45: #{dinov2_forward.1} parent=11 // pred_check
        %p494 = pneg %p240
      $region46: #{dinov2_forward.1} parent=11 // pred_check_branch
        %496 = sbr.rel (%p494) target = $region48
      $region47: #{dinov2_forward.1} parent=11 // pred_region
        _
      $region48: #{dinov2_forward.1} parent=11 // pred_fallthru
        _
      // Predicated region
      $region49: #{dinov2_forward.1} parent=11 // pred_check
        %p497 = pneg %p261
      $region50: #{dinov2_forward.1} parent=11 // pred_check_branch
        %499 = sbr.rel (%p497) target = $region52
      $region51: #{dinov2_forward.1} parent=11 // pred_region
        _
      $region52: #{dinov2_forward.1} parent=11 // pred_fallthru
        _
      // Predicated region
      $region53: #{dinov2_forward.1} parent=11 // pred_check
        %p500 = pneg %p282
      $region54: #{dinov2_forward.1} parent=11 // pred_check_branch
        %502 = sbr.rel (%p500) target = $region56
      $region55: #{dinov2_forward.1} parent=11 // pred_region
        _
      $region56: #{dinov2_forward.1} parent=11 // pred_fallthru
        _
      // Predicated region
      $region57: #{dinov2_forward.1} parent=11 // pred_check
        %p503 = pneg %p303
      $region58: #{dinov2_forward.1} parent=11 // pred_check_branch
        %505 = sbr.rel (%p503) target = $region60
      $region59: #{dinov2_forward.1} parent=11 // pred_region
        _
      $region60: #{dinov2_forward.1} parent=11 // pred_fallthru
        _
      // Predicated region
      $region61: #{dinov2_forward.1} parent=11 // pred_check
        %p506 = pneg %p324
      $region62: #{dinov2_forward.1} parent=11 // pred_check_branch
        %508 = sbr.rel (%p506) target = $region64
      $region63: #{dinov2_forward.1} parent=11 // pred_region
        _
      $region64: #{dinov2_forward.1} parent=11 // pred_fallthru
        _
      // Predicated region
      $region65: #{dinov2_forward.1} parent=11 // pred_check
        %p509 = pneg %p345
      $region66: #{dinov2_forward.1} parent=11 // pred_check_branch
        %511 = sbr.rel (%p509) target = $region68
      $region67: #{dinov2_forward.1} parent=11 // pred_region
        _
      $region68: #{dinov2_forward.1} parent=11 // pred_fallthru
        _
      // Predicated region
      $region69: #{dinov2_forward.1} parent=11 // pred_check
        %p512 = pneg %p366
      $region70: #{dinov2_forward.1} parent=11 // pred_check_branch
        %514 = sbr.rel (%p512) target = $region72
      $region71: #{dinov2_forward.1} parent=11 // pred_region
        _
      $region72: #{dinov2_forward.1} parent=11 // pred_fallthru
        _
      // Predicated region
      $region73: #{dinov2_forward.1} parent=11 // pred_check
        %p515 = pneg %p387
      $region74: #{dinov2_forward.1} parent=11 // pred_check_branch
        %517 = sbr.rel (%p515) target = $region76
      $region75: #{dinov2_forward.1} parent=11 // pred_region
        _
      $region76: #{dinov2_forward.1} parent=11 // pred_fallthru
        _
      // Predicated region
      $region77: #{dinov2_forward.1} parent=11 // pred_check
        %p518 = pneg %p408
      $region78: #{dinov2_forward.1} parent=11 // pred_check_branch
        %520 = sbr.rel (%p518) target = $region80
      $region79: #{dinov2_forward.1} parent=11 // pred_region
        _
      $region80: #{dinov2_forward.1} parent=11 // pred_fallthru
        _
      // Predicated region
      $region81: #{dinov2_forward.1} parent=11 // pred_check
        %p521 = pneg %p429
      $region82: #{dinov2_forward.1} parent=11 // pred_check_branch
        %523 = sbr.rel (%p521) target = $region84
      $region83: #{dinov2_forward.1} parent=11 // pred_region
        _
      $region84: #{dinov2_forward.1} parent=11 // pred_fallthru
        _
    $region12: #{dinov2_forward.1} parent=5 // pred_fallthru
      _
    %p524 = scmp.lt.s32.totalorder %s25, 2
    // Predicated region
    $region85: #{dinov2_forward.1} parent=5 // pred_check
      %p525 = pneg %p524
    $region86: #{dinov2_forward.1} parent=5 // pred_check_branch
      %527 = sbr.rel (%p525) target = $region88
    $region87: #{dinov2_forward.1} parent=5 // pred_region
      // Predicated region
      $region89: #{dinov2_forward.1} parent=87 // pred_check
        %p528 = pneg %p45
      $region90: #{dinov2_forward.1} parent=87 // pred_check_branch
        %530 = sbr.rel (%p528) target = $region92
      $region91: #{dinov2_forward.1} parent=87 // pred_region
        %p531 = scmp.lt.s32.totalorder %s25, 1
        %s532 = scalar_select %p531, %s25, 1
        %s533 = smul.addr %s532, 15
        %s534 = smul.addr %s533, 4
        %s535 = scalar_lea.vmem %s0, %s534
      $region92: #{dinov2_forward.1} parent=87 // pred_fallthru
        _
    $region88: #{dinov2_forward.1} parent=5 // pred_fallthru
      _
    %p536 = scmp.le.s32.totalorder 1, %s25
    %p537 = scmp.lt.s32.totalorder %s25, 3
    %p538 = pnand %p536, %p537
    %p539 = pneg %p538
    // Predicated region
    $region93: #{dinov2_forward.1} parent=5 // pred_check
      _
    $region94: #{dinov2_forward.1} parent=5 // pred_check_branch
      %541 = sbr.rel (%p538) target = $region96
    $region95: #{dinov2_forward.1} parent=5 // pred_region
      %s542 = ssub.s32 %s25, 1
      %p543 = scmp.lt.s32.totalorder %s30, 1
      %s544 = scalar_select %p543, %s30, 1
      %s545 = smul.addr %s544, 15
      %s546 = smul.addr %s545, 4
      %s547 = scalar_lea.vmem %s0, %s546
      %p548 = pneg %p51
      %p549 = pneg %p48
      %p550 = pneg %p72
      %p551 = pneg %p69
      %p552 = pneg %p93
      %p553 = pneg %p90
      %p554 = pneg %p114
      %p555 = pneg %p111
      %p556 = pneg %p135
      %p557 = pneg %p132
      %p558 = pneg %p156
      %p559 = pneg %p153
      %p560 = pneg %p177
      %p561 = pneg %p174
      %p562 = pneg %p198
      %p563 = pneg %p195
      %p564 = pneg %p219
      %p565 = pneg %p216
      %p566 = pneg %p240
      %p567 = pneg %p237
      %p568 = pneg %p261
      %p569 = pneg %p258
      %p570 = pneg %p282
      %p571 = pneg %p279
      %p572 = pneg %p303
      %p573 = pneg %p300
      %p574 = pneg %p324
      %p575 = pneg %p321
      %p576 = pneg %p345
      %p577 = pneg %p342
      %p578 = pneg %p366
      %p579 = pneg %p363
      %p580 = pneg %p387
      %p581 = pneg %p384
      %p582 = pneg %p408
      %p583 = pneg %p405
      %p584 = pneg %p429
      %p585 = pneg %p426
      %p586 = pneg %p455
      %p587 = pneg %p452
      %p588 = scmp.lt.s32.totalorder %s30, 1
      %s589 = scalar_select %p588, %s30, 1
      %s590 = smul.addr %s589, 3
      %s591 = smul.addr %s590, 8
      %s592 = scalar_lea.vmem %s19, %s591
      %p593 = scmp.lt.s32.totalorder %s30, 1
      %s594 = scalar_select %p593, %s30, 1
      %s595 = smul.addr %s594, 15
      %s596 = smul.addr %s595, 4
      %s597 = scalar_lea.vmem %s0, %s596
      %p598 = scmp.lt.s32.totalorder %s30, 1
      %s599 = scalar_select %p598, %s30, 1
      %s600 = smul.addr %s599, 3
      %s601 = smul.addr %s600, 8
      %s602 = scalar_lea.vmem %s19, %s601
      %v604 = vld [vmem:[%s597] sm:$0xff]
      %v605 = vld [vmem:[%s597 + $0x8] sm:$0xff]
      %v606 = vld [vmem:[%s597 + $0x10] sm:$0xf]
      %v607 = vld [vmem:[%s597 + $0x14] sm:$0xff]
      %v608 = vld [vmem:[%s597 + $0x1c] sm:$0xff]
      %v609 = vld [vmem:[%s597 + $0x24] sm:$0xf]
      %v610 = vld [vmem:[%s597 + $0x28] sm:$0x11]
      %v611 = vld [vmem:[%s597 + $0x30] sm:$0x11]
      %v612 = vld [vmem:[%s597 + $0x38] sm:$0x1]
      %v613 = vld [vmem:[%s1] sm:$0xf]
      %v614 = vld [vmem:[%s1 + $0x4] sm:$0xf]
      %v615 = vld [vmem:[%s1 + $0x8] sm:$0xf]
      %v616 = vld [vmem:[%s1 + $0xc] sm:$0xf]
      %v617 = vld [vmem:[%s1 + $0x10] sm:$0xf]
      %v618 = vld [vmem:[%s1 + $0x14] sm:$0xf]
      %v619 = vld [vmem:[%s1 + $0x18] sm:$0xf]
      %v620 = vld [vmem:[%s1 + $0x1c] sm:$0xf]
      %v621 = vld [vmem:[%s1 + $0x20] sm:$0xf]
      %v622 = vld [vmem:[%s1 + $0x24] sm:$0xf]
      %v623 = vld [vmem:[%s1 + $0x28] sm:$0xf]
      %v624 = vld [vmem:[%s1 + $0x2c] sm:$0xf]
      %v625 = vld [vmem:[%s1 + $0x30] sm:$0xf]
      %v626 = vld [vmem:[%s1 + $0x34] sm:$0xf]
      %v627 = vld [vmem:[%s1 + $0x38] sm:$0xf]
      %v628 = vld [vmem:[%s1 + $0x3c] sm:$0xf]
      %v629 = vld [vmem:[%s1 + $0x40] sm:$0xf]
      %v630 = vld [vmem:[%s1 + $0x44] sm:$0xf]
      %v631 = vld [vmem:[%s1 + $0x48] sm:$0xf]
      %v632 = vld [vmem:[%s1 + $0x4c] sm:$0xf]
      %v633 = vld [vmem:[%s1 + $0x50] sm:$0xf]
      %v634 = vld [vmem:[%s1 + $0x54] sm:$0xf]
      %v635 = vld [vmem:[%s1 + $0x58] sm:$0xf]
      %v636 = vld [vmem:[%s1 + $0x5c] sm:$0xf]
      %v637 = vld [vmem:[%s1 + $0x60] sm:$0xf]
      %v638 = vld [vmem:[%s1 + $0x64] sm:$0xf]
      %v639 = vld [vmem:[%s1 + $0x68] sm:$0xf]
      %v640 = vld [vmem:[%s1 + $0x6c] sm:$0xf]
      %v641 = vld [vmem:[%s1 + $0x70] sm:$0xf]
      %v642 = vld [vmem:[%s1 + $0x74] sm:$0xf]
      %v643 = vld [vmem:[%s1 + $0x78] sm:$0xf]
      %v644 = vld [vmem:[%s1 + $0x7c] sm:$0xf]
      %v645 = vld [vmem:[%s1 + $0x80] sm:$0xf]
      %v646 = vld [vmem:[%s1 + $0x84] sm:$0xf]
      %v647 = vld [vmem:[%s1 + $0x88] sm:$0xf]
      %v648 = vld [vmem:[%s1 + $0x8c] sm:$0xf]
      %v649 = vld [vmem:[%s1 + $0x90] sm:$0xf]
      %v650 = vld [vmem:[%s1 + $0x94] sm:$0xf]
      %v651 = vld [vmem:[%s1 + $0x98] sm:$0xf]
      %v652 = vld [vmem:[%s1 + $0x9c] sm:$0xf]
      %v653 = vld [vmem:[%s1 + $0xa0] sm:$0xf]
      %v654 = vld [vmem:[%s1 + $0xa4] sm:$0xf]
      %v655 = vld [vmem:[%s1 + $0xa8] sm:$0xf]
      %v656 = vld [vmem:[%s1 + $0xac] sm:$0xf]
      %v657 = vld [vmem:[%s1 + $0xb0] sm:$0xf]
      %v658 = vld [vmem:[%s1 + $0xb4] sm:$0xf]
      %v659 = vld [vmem:[%s1 + $0xb8] sm:$0xf]
      %v660 = vld [vmem:[%s1 + $0xbc] sm:$0xf]
      %v661 = vld [vmem:[%s1 + $0xc0] sm:$0xf]
      %v662 = vld [vmem:[%s1 + $0xc4] sm:$0xf]
      %v663 = vld [vmem:[%s1 + $0xc8] sm:$0xf]
      %v664 = vld [vmem:[%s1 + $0xcc] sm:$0xf]
      %v665 = vld [vmem:[%s1 + $0xd0] sm:$0xf]
      %v666 = vld [vmem:[%s1 + $0xd4] sm:$0xf]
      %v667 = vld [vmem:[%s1 + $0xd8] sm:$0xf]
      %v668 = vld [vmem:[%s1 + $0xdc] sm:$0xf]
      %v669 = vld [vmem:[%s1 + $0xe0] sm:$0xf]
      %v670 = vld [vmem:[%s1 + $0xe4] sm:$0xf]
      %v671 = vld [vmem:[%s1 + $0xe8] sm:$0xf]
      %v672 = vld [vmem:[%s1 + $0xec] sm:$0xf]
      %v673 = vld [vmem:[%s1 + $0xf0] sm:$0xf]
      %v674 = vld [vmem:[%s1 + $0xf4] sm:$0xf]
      %v675 = vld [vmem:[%s1 + $0xf8] sm:$0xf]
      %v676 = vld [vmem:[%s1 + $0xfc] sm:$0xf]
      %v677 = vld [vmem:[%s1 + $0x100] sm:$0xf]
      %v678 = vld [vmem:[%s1 + $0x104] sm:$0xf]
      %v679 = vld [vmem:[%s1 + $0x108] sm:$0xf]
      %v680 = vld [vmem:[%s1 + $0x10c] sm:$0xf]
      %v681 = vld [vmem:[%s1 + $0x110] sm:$0xf]
      %v682 = vld [vmem:[%s1 + $0x114] sm:$0xf]
      %v683 = vld [vmem:[%s1 + $0x118] sm:$0xf]
      %v684 = vld [vmem:[%s1 + $0x11c] sm:$0xf]
      %v685 = vld [vmem:[%s1 + $0x120] sm:$0xf]
      %v686 = vld [vmem:[%s1 + $0x124] sm:$0xf]
      %v687 = vld [vmem:[%s1 + $0x128] sm:$0xf]
      %v688 = vld [vmem:[%s1 + $0x12c] sm:$0xf]
      %v689 = vld [vmem:[%s1 + $0x130] sm:$0xf]
      %v690 = vld [vmem:[%s1 + $0x134] sm:$0xf]
      %v691 = vld [vmem:[%s1 + $0x138] sm:$0xf]
      %v692 = vld [vmem:[%s1 + $0x13c] sm:$0xf]
      %v693 = vld [vmem:[%s2] sm:$0xff]
      %v694 = vld [vmem:[%s2 + $0x8] sm:$0xff]
      %v695 = vld [vmem:[%s2 + $0x10] sm:$0x1]
      %v705 = vunpack.c.l.b16 %v604
      %v706 = vunpack.c.h.b16 %v604
      %v707 = vunpack.c.l.b16 %v605
      %v708 = vunpack.c.h.b16 %v605
      %v709 = vunpack.c.l.b16 %v606
      %v710 = vunpack.c.l.b16 %v607
      %v711 = vunpack.c.h.b16 %v607
      %v712 = vunpack.c.l.b16 %v608
      %v713 = vunpack.c.h.b16 %v608
      %v714 = vunpack.c.l.b16 %v609
      %v715 = vunpack.c.l.b16 %v610
      %v716 = vunpack.c.h.b16 %v610
      %v717 = vunpack.c.l.b16 %v611
      %v718 = vunpack.c.h.b16 %v611
      %v719 = vunpack.c.l.b16 %v612
      %v720 = vpack.c.b16 %v710, %v705
      %v721 = vpack.c.b16 %v711, %v706
      %v722 = vpack.c.b16 %v712, %v707
      %v723 = vpack.c.b16 %v713, %v708
      %v724 = vpack.c.b16 %v714, %v709
      %v725 = vpack.c.b16 %v715, %v715
      %v726 = vpack.c.b16 %v716, %v716
      %v727 = vpack.c.b16 %v717, %v717
      %v728 = vpack.c.b16 %v718, %v718
      %v729 = vpack.c.b16 %v719, %v719
      %v820 = vunpack.c.l.b16 %v613
      %v821 = vunpack.c.l.b16 %v614
      %v822 = vunpack.c.l.b16 %v615
      %v823 = vunpack.c.l.b16 %v616
      %v824 = vunpack.c.l.b16 %v617
      %v825 = vunpack.c.l.b16 %v618
      %v826 = vunpack.c.l.b16 %v619
      %v827 = vunpack.c.l.b16 %v620
      %v828 = vunpack.c.l.b16 %v621
      %v829 = vunpack.c.l.b16 %v622
      %v830 = vunpack.c.l.b16 %v623
      %v831 = vunpack.c.l.b16 %v624
      %v832 = vunpack.c.l.b16 %v625
      %v833 = vunpack.c.l.b16 %v626
      %v834 = vunpack.c.l.b16 %v627
      %v835 = vunpack.c.l.b16 %v628
      %v836 = vunpack.c.l.b16 %v629
      %v837 = vunpack.c.l.b16 %v630
      %v838 = vunpack.c.l.b16 %v631
      %v839 = vunpack.c.l.b16 %v632
      %v840 = vunpack.c.l.b16 %v633
      %v841 = vunpack.c.l.b16 %v634
      %v842 = vunpack.c.l.b16 %v635
      %v843 = vunpack.c.l.b16 %v636
      %v844 = vunpack.c.l.b16 %v637
      %v845 = vunpack.c.l.b16 %v638
      %v846 = vunpack.c.l.b16 %v639
      %v847 = vunpack.c.l.b16 %v640
      %v848 = vunpack.c.l.b16 %v641
      %v849 = vunpack.c.l.b16 %v642
      %v850 = vunpack.c.l.b16 %v643
      %v851 = vunpack.c.l.b16 %v644
      %v852 = vunpack.c.l.b16 %v645
      %v853 = vunpack.c.l.b16 %v646
      %v854 = vunpack.c.l.b16 %v647
      %v855 = vunpack.c.l.b16 %v648
      %v856 = vunpack.c.l.b16 %v649
      %v857 = vunpack.c.l.b16 %v650
      %v858 = vunpack.c.l.b16 %v651
      %v859 = vunpack.c.l.b16 %v652
      %v860 = vunpack.c.l.b16 %v653
      %v861 = vunpack.c.l.b16 %v654
      %v862 = vunpack.c.l.b16 %v655
      %v863 = vunpack.c.l.b16 %v656
      %v864 = vunpack.c.l.b16 %v657
      %v865 = vunpack.c.l.b16 %v658
      %v866 = vunpack.c.l.b16 %v659
      %v867 = vunpack.c.l.b16 %v660
      %v868 = vunpack.c.l.b16 %v661
      %v869 = vunpack.c.l.b16 %v662
      %v870 = vunpack.c.l.b16 %v663
      %v871 = vunpack.c.l.b16 %v664
      %v872 = vunpack.c.l.b16 %v665
      %v873 = vunpack.c.l.b16 %v666
      %v874 = vunpack.c.l.b16 %v667
      %v875 = vunpack.c.l.b16 %v668
      %v876 = vunpack.c.l.b16 %v669
      %v877 = vunpack.c.l.b16 %v670
      %v878 = vunpack.c.l.b16 %v671
      %v879 = vunpack.c.l.b16 %v672
      %v880 = vunpack.c.l.b16 %v673
      %v881 = vunpack.c.l.b16 %v674
      %v882 = vunpack.c.l.b16 %v675
      %v883 = vunpack.c.l.b16 %v676
      %v884 = vunpack.c.l.b16 %v677
      %v885 = vunpack.c.l.b16 %v678
      %v886 = vunpack.c.l.b16 %v679
      %v887 = vunpack.c.l.b16 %v680
      %v888 = vunpack.c.l.b16 %v681
      %v889 = vunpack.c.l.b16 %v682
      %v890 = vunpack.c.l.b16 %v683
      %v891 = vunpack.c.l.b16 %v684
      %v892 = vunpack.c.l.b16 %v685
      %v893 = vunpack.c.l.b16 %v686
      %v894 = vunpack.c.l.b16 %v687
      %v895 = vunpack.c.l.b16 %v688
      %v896 = vunpack.c.l.b16 %v689
      %v897 = vunpack.c.l.b16 %v690
      %v898 = vunpack.c.l.b16 %v691
      %v899 = vunpack.c.l.b16 %v692
      %v900 = vpack.c.b16 %v821, %v820
      %v901 = vpack.c.b16 %v823, %v822
      %v902 = vpack.c.b16 %v825, %v824
      %v903 = vpack.c.b16 %v827, %v826
      %v904 = vpack.c.b16 %v829, %v828
      %v905 = vpack.c.b16 %v831, %v830
      %v906 = vpack.c.b16 %v833, %v832
      %v907 = vpack.c.b16 %v835, %v834
      %v908 = vpack.c.b16 %v837, %v836
      %v909 = vpack.c.b16 %v839, %v838
      %v910 = vpack.c.b16 %v841, %v840
      %v911 = vpack.c.b16 %v843, %v842
      %v912 = vpack.c.b16 %v845, %v844
      %v913 = vpack.c.b16 %v847, %v846
      %v914 = vpack.c.b16 %v849, %v848
      %v915 = vpack.c.b16 %v851, %v850
      %v916 = vpack.c.b16 %v853, %v852
      %v917 = vpack.c.b16 %v855, %v854
      %v918 = vpack.c.b16 %v857, %v856
      %v919 = vpack.c.b16 %v859, %v858
      %v920 = vpack.c.b16 %v861, %v860
      %v921 = vpack.c.b16 %v863, %v862
      %v922 = vpack.c.b16 %v865, %v864
      %v923 = vpack.c.b16 %v867, %v866
      %v924 = vpack.c.b16 %v869, %v868
      %v925 = vpack.c.b16 %v871, %v870
      %v926 = vpack.c.b16 %v873, %v872
      %v927 = vpack.c.b16 %v875, %v874
      %v928 = vpack.c.b16 %v877, %v876
      %v929 = vpack.c.b16 %v879, %v878
      %v930 = vpack.c.b16 %v881, %v880
      %v931 = vpack.c.b16 %v883, %v882
      %v932 = vpack.c.b16 %v885, %v884
      %v933 = vpack.c.b16 %v887, %v886
      %v934 = vpack.c.b16 %v889, %v888
      %v935 = vpack.c.b16 %v891, %v890
      %v936 = vpack.c.b16 %v893, %v892
      %v937 = vpack.c.b16 %v895, %v894
      %v938 = vpack.c.b16 %v897, %v896
      %v939 = vpack.c.b16 %v899, %v898
      %980 = vmatprep.subr.bf16.mxu0 0
      %981 = vmatpush1.bf16.msra.mxu0 %v900
      %982 = vmatprep.subr.bf16.mxu0 0
      %983 = vmatpush1.bf16.msra.mxu0 %v901
      %984 = vmatprep.subr.bf16.mxu0 0
      %985 = vmatpush1.bf16.msra.mxu0 %v902
      %986 = vmatprep.subr.bf16.mxu0 0
      %987 = vmatpush1.bf16.msra.mxu0 %v903
      %988 = vmatprep.subr.bf16.mxu0 0
      %989 = vmatpush1.bf16.msra.mxu0 %v904
      %990 = vmatprep.subr.bf16.mxu0 0
      %991 = vmatpush1.bf16.msra.mxu0 %v905
      %992 = vmatprep.subr.bf16.mxu0 0
      %993 = vmatpush1.bf16.msra.mxu0 %v906
      %994 = vmatprep.subr.bf16.mxu0 0
      %995 = vmatpush1.bf16.msra.mxu0 %v907
      %996 = vmatprep.subr.bf16.mxu0 0
      %997 = vmatpush1.bf16.msra.mxu0 %v908
      %998 = vmatprep.subr.bf16.mxu0 0
      %999 = vmatpush1.bf16.msra.mxu0 %v909
      %1000 = vmatprep.subr.bf16.mxu0 0
      %1001 = vmatpush1.bf16.msra.mxu0 %v910
      %1002 = vmatprep.subr.bf16.mxu0 0
      %1003 = vmatpush1.bf16.msra.mxu0 %v911
      %1004 = vmatprep.subr.bf16.mxu0 0
      %1005 = vmatpush1.bf16.msra.mxu0 %v912
      %1006 = vmatprep.subr.bf16.mxu0 0
      %1007 = vmatpush1.bf16.msra.mxu0 %v913
      %1008 = vmatprep.subr.bf16.mxu0 0
      %1009 = vmatpush1.bf16.msra.mxu0 %v914
      %1010 = vmatprep.subr.bf16.mxu0 0
      %1011 = vmatpush1.bf16.msra.mxu0 %v915
      %1012 = vmatprep.mubr.bf16.mxu0 %v721
      %1013 = vmatmul.mubr.bf16.gmra.mrb[0].mxu0 %v720
      %v1014 = vpop.f32.mrb[0].mxu0
      %v1015 = vadd.f32 %v693, %v1014
      %v1016 = vpop.f32.mrb[0].mxu0
      %v1017 = vpop.f32.mrb[0].mxu0
      %v1018 = vadd.f32 %v694, %v1017
      %v1019 = vpop.f32.mrb[0].mxu0
      %1020 = vmatprep.mubr.bf16.mxu0 %v726
      %1021 = vmatmul.mubr.bf16.gmra.mrb[0].mxu0 %v725
      %v1022 = vpop.f32.mrb[0].mxu0
      %v1023 = vadd.f32 %v695, %v1022
      %v1024 = vpop.f32.mrb[0].mxu0
      %v1025 = vpop.f32.mrb[0].mxu0
      %v1026 = vpop.f32.mrb[0].mxu0
      %1027 = vdwg.mxu0
      %1028 = vmatprep.subr.bf16.mxu0 0
      %1029 = vmatpush1.bf16.msra.mxu0 %v916
      %1030 = vmatprep.subr.bf16.mxu0 0
      %1031 = vmatpush1.bf16.msra.mxu0 %v917
      %1032 = vmatprep.subr.bf16.mxu0 0
      %1033 = vmatpush1.bf16.msra.mxu0 %v918
      %1034 = vmatprep.subr.bf16.mxu0 0
      %1035 = vmatpush1.bf16.msra.mxu0 %v919
      %1036 = vmatprep.subr.bf16.mxu0 0
      %1037 = vmatpush1.bf16.msra.mxu0 %v920
      %1038 = vmatprep.subr.bf16.mxu0 0
      %1039 = vmatpush1.bf16.msra.mxu0 %v921
      %1040 = vmatprep.subr.bf16.mxu0 0
      %1041 = vmatpush1.bf16.msra.mxu0 %v922
      %1042 = vmatprep.subr.bf16.mxu0 0
      %1043 = vmatpush1.bf16.msra.mxu0 %v923
      %1044 = vmatprep.subr.bf16.mxu0 0
      %1045 = vmatpush1.bf16.msra.mxu0 %v924
      %1046 = vmatprep.subr.bf16.mxu0 0
      %1047 = vmatpush1.bf16.msra.mxu0 %v925
      %1048 = vmatprep.subr.bf16.mxu0 0
      %1049 = vmatpush1.bf16.msra.mxu0 %v926
      %1050 = vmatprep.subr.bf16.mxu0 0
      %1051 = vmatpush1.bf16.msra.mxu0 %v927
      %1052 = vmatprep.subr.bf16.mxu0 0
      %1053 = vmatpush1.bf16.msra.mxu0 %v928
      %1054 = vmatprep.subr.bf16.mxu0 0
      %1055 = vmatpush1.bf16.msra.mxu0 %v929
      %1056 = vmatprep.subr.bf16.mxu0 0
      %1057 = vmatpush1.bf16.msra.mxu0 %v930
      %1058 = vmatprep.subr.bf16.mxu0 0
      %1059 = vmatpush1.bf16.msra.mxu0 %v931
      %1060 = vmatprep.mubr.bf16.mxu0 %v723
      %1061 = vmatmul.mubr.bf16.gmra.mrb[0].mxu0 %v722
      %v1062 = vpop.f32.mrb[0].mxu0
      %v1063 = vadd.f32 %v1015, %v1062
      %v1064 = vpop.f32.mrb[0].mxu0
      %v1065 = vpop.f32.mrb[0].mxu0
      %v1066 = vadd.f32 %v1018, %v1065
      %v1067 = vpop.f32.mrb[0].mxu0
      %1068 = vmatprep.mubr.bf16.mxu0 %v728
      %1069 = vmatmul.mubr.bf16.gmra.mrb[0].mxu0 %v727
      %v1070 = vpop.f32.mrb[0].mxu0
      %v1071 = vadd.f32 %v1023, %v1070
      %v1072 = vpop.f32.mrb[0].mxu0
      %v1073 = vpop.f32.mrb[0].mxu0
      %v1074 = vpop.f32.mrb[0].mxu0
      %1075 = vdwg.mxu0
      %1076 = vmatprep.subr.bf16.mxu0 0
      %1077 = vmatpush1.bf16.msra.mxu0 %v932
      %1078 = vmatprep.subr.bf16.mxu0 0
      %1079 = vmatpush1.bf16.msra.mxu0 %v933
      %1080 = vmatprep.subr.bf16.mxu0 0
      %1081 = vmatpush1.bf16.msra.mxu0 %v934
      %1082 = vmatprep.subr.bf16.mxu0 0
      %1083 = vmatpush1.bf16.msra.mxu0 %v935
      %1084 = vmatprep.subr.bf16.mxu0 0
      %1085 = vmatpush1.bf16.msra.mxu0 %v936
      %1086 = vmatprep.subr.bf16.mxu0 0
      %1087 = vmatpush1.bf16.msra.mxu0 %v937
      %1088 = vmatprep.subr.bf16.mxu0 0
      %1089 = vmatpush1.bf16.msra.mxu0 %v938
      %1090 = vmatprep.subr.bf16.mxu0 0
      %1091 = vmatpush1.bf16.msra.mxu0 %v939
      %1092 = vmatprep.subr.bf16.mxu0 0
      %1093 = vmatpush1.bf16.msra.mxu0 0
      %1094 = vmatprep.subr.bf16.mxu0 0
      %1095 = vmatpush1.bf16.msra.mxu0 0
      %1096 = vmatprep.subr.bf16.mxu0 0
      %1097 = vmatpush1.bf16.msra.mxu0 0
      %1098 = vmatprep.subr.bf16.mxu0 0
      %1099 = vmatpush1.bf16.msra.mxu0 0
      %1100 = vmatprep.subr.bf16.mxu0 0
      %1101 = vmatpush1.bf16.msra.mxu0 0
      %1102 = vmatprep.subr.bf16.mxu0 0
      %1103 = vmatpush1.bf16.msra.mxu0 0
      %1104 = vmatprep.subr.bf16.mxu0 0
      %1105 = vmatpush1.bf16.msra.mxu0 0
      %1106 = vmatprep.subr.bf16.mxu0 0
      %1107 = vmatpush1.bf16.msra.mxu0 0
      %1108 = vmatprep.mubr.bf16.mxu0 0
      %1109 = vmatmul.mubr.bf16.gmra.mrb[0].mxu0 %v724
      %v1110 = vpop.f32.mrb[0].mxu0
      %v1111 = vadd.f32 %v1063, %v1110
      %v1112 = vpop.f32.mrb[0].mxu0
      %v1113 = vpop.f32.mrb[0].mxu0
      %v1114 = vadd.f32 %v1066, %v1113
      %v1115 = vpop.f32.mrb[0].mxu0
      %1116 = vmatprep.mubr.bf16.mxu0 0
      %1117 = vmatmul.mubr.bf16.gmra.mrb[0].mxu0 %v729
      %v1118 = vpop.f32.mrb[0].mxu0
      %v1119 = vadd.f32 %v1071, %v1118
      %v1120 = vpop.f32.mrb[0].mxu0
      %v1121 = vpop.f32.mrb[0].mxu0
      %v1122 = vpop.f32.mrb[0].mxu0
      %1123 = vdwg.mxu0
      %v1124 = vld [vmem:[%s3] sm:$0x1]
      %v1125 = vld [vmem:[%s4] sm:$0x1]
      %1126 = vadd.xlane.f32.xlu0 %v1111
      %v1127 = vpop.xlane.xlu0 %1126
      %1128 = vadd.xlane.f32.xlu0 %v1114
      %v1129 = vpop.xlane.xlu0 %1128
      %vm1130 = vcmask 1040384
      %v1131 = vsel %vm1130, %v1119, 0.0
      %1132 = vadd.xlane.f32.xlu0 %v1131
      %v1133 = vpop.xlane.xlu0 %1132
      %v1134 = vrcp.pop 128.0
      %v1135 = vmul.f32 %v1127, %v1134
      %v1136 = vmul.f32 %v1129, %v1134
      %v1137 = vmul.f32 %v1133, %v1134
      %v1138 = vsub.f32 %v1111, %v1135
      %v1139 = vsub.f32 %v1114, %v1136
      %v1140 = vsub.f32 %v1119, %v1137
      %v1141 = vmul.f32 %v1138, %v1138
      %v1142 = vmul.f32 %v1139, %v1139
      %v1143 = vmul.f32 %v1140, %v1140
      %1144 = vadd.xlane.f32.xlu0 %v1141
      %v1145 = vpop.xlane.xlu0 %1144
      %1146 = vadd.xlane.f32.xlu0 %v1142
      %v1147 = vpop.xlane.xlu0 %1146
      %v1148 = vsel %vm1130, %v1143, 0.0
      %1149 = vadd.xlane.f32.xlu0 %v1148
      %v1150 = vpop.xlane.xlu0 %1149
      %v1151 = vmul.f32 %v1145, %v1134
      %v1152 = vmul.f32 %v1147, %v1134
      %v1153 = vmul.f32 %v1150, %v1134
      %v1154 = vadd.f32 %v1151, 1e-06
      %v1155 = vadd.f32 %v1152, 1e-06
      %v1156 = vadd.f32 %v1153, 1e-06
      %v1157 = vrsqrt.pop %v1154
      %v1158 = vrsqrt.pop %v1155
      %v1159 = vrsqrt.pop %v1156
      %v1160 = vmul.f32 %v1138, %v1157
      %v1161 = vmul.f32 %v1139, %v1158
      %v1162 = vmul.f32 %v1140, %v1159
      %v1164 = vlaneseq
      %v1165 = vshrl.u32 %v1164, 7
      %v1166 = vsub.s32 0, %v1165
      %v1167 = vrot.slane %v1124, %v1166
      %v1169 = vmul.f32 %v1160, %v1167
      %v1170 = vmul.f32 %v1161, %v1167
      %v1171 = vmul.f32 %v1162, %v1167
      %v1173 = vlaneseq
      %v1174 = vshrl.u32 %v1173, 7
      %v1175 = vsub.s32 0, %v1174
      %v1176 = vrot.slane %v1125, %v1175
      %v1178 = vadd.f32 %v1169, %v1176
      %v1179 = vadd.f32 %v1170, %v1176
      %v1180 = vadd.f32 %v1171, %v1176
      %v1181 = vld [vmem:[%s5] sm:$0xff]
      %v1182 = vld [vmem:[%s5 + $0x8] sm:$0xf]
      %v1183 = vld [vmem:[%s5 + $0xc] sm:$0xff]
      %v1184 = vld [vmem:[%s5 + $0x14] sm:$0xf]
      %v1185 = vld [vmem:[%s5 + $0x18] sm:$0xff]
      %v1186 = vld [vmem:[%s5 + $0x20] sm:$0xf]
      %v1187 = vld [vmem:[%s5 + $0x24] sm:$0xff]
      %v1188 = vld [vmem:[%s5 + $0x2c] sm:$0xf]
      %v1189 = vld [vmem:[%s5 + $0x30] sm:$0xff]
      %v1190 = vld [vmem:[%s5 + $0x38] sm:$0xf]
      %v1191 = vld [vmem:[%s5 + $0x3c] sm:$0xff]
      %v1192 = vld [vmem:[%s5 + $0x44] sm:$0xf]
      %v1193 = vld [vmem:[%s5 + $0x48] sm:$0xff]
      %v1194 = vld [vmem:[%s5 + $0x50] sm:$0xf]
      %v1195 = vld [vmem:[%s5 + $0x54] sm:$0xff]
      %v1196 = vld [vmem:[%s5 + $0x5c] sm:$0xf]
      %v1197 = vld [vmem:[%s5 + $0x60] sm:$0xff]
      %v1198 = vld [vmem:[%s5 + $0x68] sm:$0xf]
      %v1199 = vld [vmem:[%s5 + $0x6c] sm:$0xff]
      %v1200 = vld [vmem:[%s5 + $0x74] sm:$0xf]
      %v1201 = vld [vmem:[%s5 + $0x78] sm:$0xff]
      %v1202 = vld [vmem:[%s5 + $0x80] sm:$0xf]
      %v1203 = vld [vmem:[%s5 + $0x84] sm:$0xff]
      %v1204 = vld [vmem:[%s5 + $0x8c] sm:$0xf]
      %v1205 = vld [vmem:[%s5 + $0x90] sm:$0xff]
      %v1206 = vld [vmem:[%s5 + $0x98] sm:$0xf]
      %v1207 = vld [vmem:[%s5 + $0x9c] sm:$0xff]
      %v1208 = vld [vmem:[%s5 + $0xa4] sm:$0xf]
      %v1209 = vld [vmem:[%s5 + $0xa8] sm:$0xff]
      %v1210 = vld [vmem:[%s5 + $0xb0] sm:$0xf]
      %v1211 = vld [vmem:[%s5 + $0xb4] sm:$0xff]
      %v1212 = vld [vmem:[%s5 + $0xbc] sm:$0xf]
      %v1213 = vpack.c.bf16 %v1179, %v1178
      %v1214 = vpack.c.bf16 %v1180, %v1180
      %v1215 = vld [vmem:[%s6] sm:$0x7]
      %v1217 = vlaneseq
      %v1218 = vshrl.u32 %v1217, 7
      %v1219 = vsub.s32 0, %v1218
      %v1220 = vrot.slane %v1215, %v1219
      %v1221 = vlaneseq
      %v1222 = vshrl.u32 %v1221, 7
      %v1223 = vsub.s32 1, %v1222
      %v1224 = vrot.slane %v1215, %v1223
      %v1225 = vlaneseq
      %v1226 = vshrl.u32 %v1225, 7
      %v1227 = vsub.s32 2, %v1226
      %v1228 = vrot.slane %v1215, %v1227
      %v1264 = vunpack.c.l.b16 %v1181
      %v1265 = vunpack.c.h.b16 %v1181
      %v1266 = vunpack.c.l.b16 %v1182
      %v1267 = vunpack.c.l.b16 %v1183
      %v1268 = vunpack.c.h.b16 %v1183
      %v1269 = vunpack.c.l.b16 %v1184
      %v1270 = vunpack.c.l.b16 %v1185
      %v1271 = vunpack.c.h.b16 %v1185
      %v1272 = vunpack.c.l.b16 %v1186
      %v1273 = vunpack.c.l.b16 %v1187
      %v1274 = vunpack.c.h.b16 %v1187
      %v1275 = vunpack.c.l.b16 %v1188
      %v1276 = vunpack.c.l.b16 %v1189
      %v1277 = vunpack.c.h.b16 %v1189
      %v1278 = vunpack.c.l.b16 %v1190
      %v1279 = vunpack.c.l.b16 %v1191
      %v1280 = vunpack.c.h.b16 %v1191
      %v1281 = vunpack.c.l.b16 %v1192
      %v1282 = vunpack.c.l.b16 %v1193
      %v1283 = vunpack.c.h.b16 %v1193
      %v1284 = vunpack.c.l.b16 %v1194
      %v1285 = vunpack.c.l.b16 %v1195
      %v1286 = vunpack.c.h.b16 %v1195
      %v1287 = vunpack.c.l.b16 %v1196
      %v1288 = vunpack.c.l.b16 %v1197
      %v1289 = vunpack.c.h.b16 %v1197
      %v1290 = vunpack.c.l.b16 %v1198
      %v1291 = vunpack.c.l.b16 %v1199
      %v1292 = vunpack.c.h.b16 %v1199
      %v1293 = vunpack.c.l.b16 %v1200
      %v1294 = vunpack.c.l.b16 %v1201
      %v1295 = vunpack.c.h.b16 %v1201
      %v1296 = vunpack.c.l.b16 %v1202
      %v1297 = vunpack.c.l.b16 %v1203
      %v1298 = vunpack.c.h.b16 %v1203
      %v1299 = vunpack.c.l.b16 %v1204
      %v1300 = vunpack.c.l.b16 %v1205
      %v1301 = vunpack.c.h.b16 %v1205
      %v1302 = vunpack.c.l.b16 %v1206
      %v1303 = vunpack.c.l.b16 %v1207
      %v1304 = vunpack.c.h.b16 %v1207
      %v1305 = vunpack.c.l.b16 %v1208
      %v1306 = vunpack.c.l.b16 %v1209
      %v1307 = vunpack.c.h.b16 %v1209
      %v1308 = vunpack.c.l.b16 %v1210
      %v1309 = vunpack.c.l.b16 %v1211
      %v1310 = vunpack.c.h.b16 %v1211
      %v1311 = vunpack.c.l.b16 %v1212
      %v1312 = vpack.c.b16 %v1267, %v1264
      %v1313 = vpack.c.b16 %v1268, %v1265
      %v1314 = vpack.c.b16 %v1269, %v1266
      %v1315 = vpack.c.b16 %v1273, %v1270
      %v1316 = vpack.c.b16 %v1274, %v1271
      %v1317 = vpack.c.b16 %v1275, %v1272
      %v1318 = vpack.c.b16 %v1279, %v1276
      %v1319 = vpack.c.b16 %v1280, %v1277
      %v1320 = vpack.c.b16 %v1281, %v1278
      %v1321 = vpack.c.b16 %v1285, %v1282
      %v1322 = vpack.c.b16 %v1286, %v1283
      %v1323 = vpack.c.b16 %v1287, %v1284
      %v1324 = vpack.c.b16 %v1291, %v1288
      %v1325 = vpack.c.b16 %v1292, %v1289
      %v1326 = vpack.c.b16 %v1293, %v1290
      %v1327 = vpack.c.b16 %v1297, %v1294
      %v1328 = vpack.c.b16 %v1298, %v1295
      %v1329 = vpack.c.b16 %v1299, %v1296
      %v1330 = vpack.c.b16 %v1303, %v1300
      %v1331 = vpack.c.b16 %v1304, %v1301
      %v1332 = vpack.c.b16 %v1305, %v1302
      %v1333 = vpack.c.b16 %v1309, %v1306
      %v1334 = vpack.c.b16 %v1310, %v1307
      %v1335 = vpack.c.b16 %v1311, %v1308
      %1360 = vmatprep.subr.bf16.mxu0 %v1313
      %1361 = vmatpush1.bf16.msra.mxu0 %v1312
      %1362 = vmatprep.subr.bf16.mxu0 %v1316
      %1363 = vmatpush1.bf16.msra.mxu0 %v1315
      %1364 = vmatprep.subr.bf16.mxu0 %v1319
      %1365 = vmatpush1.bf16.msra.mxu0 %v1318
      %1366 = vmatprep.subr.bf16.mxu0 %v1322
      %1367 = vmatpush1.bf16.msra.mxu0 %v1321
      %1368 = vmatprep.subr.bf16.mxu0 %v1325
      %1369 = vmatpush1.bf16.msra.mxu0 %v1324
      %1370 = vmatprep.subr.bf16.mxu0 %v1328
      %1371 = vmatpush1.bf16.msra.mxu0 %v1327
      %1372 = vmatprep.subr.bf16.mxu0 %v1331
      %1373 = vmatpush1.bf16.msra.mxu0 %v1330
      %1374 = vmatprep.subr.bf16.mxu0 %v1334
      %1375 = vmatpush1.bf16.msra.mxu0 %v1333
      %1376 = vmatprep.subr.bf16.mxu0 0
      %1377 = vmatpush1.bf16.msra.mxu0 0
      %1378 = vmatprep.subr.bf16.mxu0 0
      %1379 = vmatpush1.bf16.msra.mxu0 0
      %1380 = vmatprep.subr.bf16.mxu0 0
      %1381 = vmatpush1.bf16.msra.mxu0 0
      %1382 = vmatprep.subr.bf16.mxu0 0
      %1383 = vmatpush1.bf16.msra.mxu0 0
      %1384 = vmatprep.subr.bf16.mxu0 0
      %1385 = vmatpush1.bf16.msra.mxu0 0
      %1386 = vmatprep.subr.bf16.mxu0 0
      %1387 = vmatpush1.bf16.msra.mxu0 0
      %1388 = vmatprep.subr.bf16.mxu0 0
      %1389 = vmatpush1.bf16.msra.mxu0 0
      %1390 = vmatprep.subr.bf16.mxu0 0
      %1391 = vmatpush1.bf16.msra.mxu0 0
      %1392 = vmatprep.mubr.bf16.mxu0 0
      %1393 = vmatmul.mubr.bf16.gmra.mrb[0].mxu0 %v1213
      %v1394 = vpop.f32.mrb[0].mxu0
      %v1395 = vadd.f32 %v1220, %v1394
      %v1396 = vpop.f32.mrb[0].mxu0
      %v1397 = vadd.f32 %v1224, %v1396
      %v1398 = vpop.f32.mrb[0].mxu0
      %v1399 = vadd.f32 %v1220, %v1398
      %v1400 = vpop.f32.mrb[0].mxu0
      %v1401 = vadd.f32 %v1224, %v1400
      %1402 = vmatprep.mubr.bf16.mxu0 0
      %1403 = vmatmul.mubr.bf16.gmra.mrb[0].mxu0 %v1214
      %v1404 = vpop.f32.mrb[0].mxu0
      %v1405 = vadd.f32 %v1220, %v1404
      %v1406 = vpop.f32.mrb[0].mxu0
      %v1407 = vadd.f32 %v1224, %v1406
      %v1408 = vpop.f32.mrb[0].mxu0
      %v1409 = vpop.f32.mrb[0].mxu0
      %1410 = vdwg.mxu0
      %1411 = vmatprep.subr.bf16.mxu0 0
      %1412 = vmatpush1.bf16.msra.mxu0 %v1314
      %1413 = vmatprep.subr.bf16.mxu0 0
      %1414 = vmatpush1.bf16.msra.mxu0 %v1317
      %1415 = vmatprep.subr.bf16.mxu0 0
      %1416 = vmatpush1.bf16.msra.mxu0 %v1320
      %1417 = vmatprep.subr.bf16.mxu0 0
      %1418 = vmatpush1.bf16.msra.mxu0 %v1323
      %1419 = vmatprep.subr.bf16.mxu0 0
      %1420 = vmatpush1.bf16.msra.mxu0 %v1326
      %1421 = vmatprep.subr.bf16.mxu0 0
      %1422 = vmatpush1.bf16.msra.mxu0 %v1329
      %1423 = vmatprep.subr.bf16.mxu0 0
      %1424 = vmatpush1.bf16.msra.mxu0 %v1332
      %1425 = vmatprep.subr.bf16.mxu0 0
      %1426 = vmatpush1.bf16.msra.mxu0 %v1335
      %1427 = vmatprep.subr.bf16.mxu0 0
      %1428 = vmatpush1.bf16.msra.mxu0 0
      %1429 = vmatprep.subr.bf16.mxu0 0
      %1430 = vmatpush1.bf16.msra.mxu0 0
      %1431 = vmatprep.subr.bf16.mxu0 0
      %1432 = vmatpush1.bf16.msra.mxu0 0
      %1433 = vmatprep.subr.bf16.mxu0 0
      %1434 = vmatpush1.bf16.msra.mxu0 0
      %1435 = vmatprep.subr.bf16.mxu0 0
      %1436 = vmatpush1.bf16.msra.mxu0 0
      %1437 = vmatprep.subr.bf16.mxu0 0
      %1438 = vmatpush1.bf16.msra.mxu0 0
      %1439 = vmatprep.subr.bf16.mxu0 0
      %1440 = vmatpush1.bf16.msra.mxu0 0
      %1441 = vmatprep.subr.bf16.mxu0 0
      %1442 = vmatpush1.bf16.msra.mxu0 0
      %1443 = vmatprep.mubr.bf16.mxu0 0
      %1444 = vmatmul.mubr.bf16.gmra.mrb[0].mxu0 %v1213
      %v1445 = vpop.f32.mrb[0].mxu0
      %v1446 = vadd.f32 %v1228, %v1445
      %v1447 = vpop.f32.mrb[0].mxu0
      %v1448 = vpop.f32.mrb[0].mxu0
      %v1449 = vadd.f32 %v1228, %v1448
      %v1450 = vpop.f32.mrb[0].mxu0
      %1451 = vmatprep.mubr.bf16.mxu0 0
      %1452 = vmatmul.mubr.bf16.gmra.mrb[0].mxu0 %v1214
      %v1453 = vpop.f32.mrb[0].mxu0
      %v1454 = vadd.f32 %v1228, %v1453
      %v1455 = vpop.f32.mrb[0].mxu0
      %v1456 = vpop.f32.mrb[0].mxu0
      %v1457 = vpop.f32.mrb[0].mxu0
      %1458 = vdwg.mxu0
      %v1459 = vmul.f32 %v1395, 0.17677669
      %v1460 = vmul.f32 %v1399, 0.17677669
      %v1461 = vmul.f32 %v1405, 0.17677669
      %v1462 = vld [vmem:[%s7] sm:$0xf]
      %v1463 = vld [vmem:[%s7 + $0x4] sm:$0xf]
      %v1464 = vld [vmem:[%s7 + $0x8] sm:$0xf]
      %v1465 = vld [vmem:[%s7 + $0xc] sm:$0xf]
      %v1466 = vld [vmem:[%s7 + $0x10] sm:$0xf]
      %v1467 = vld [vmem:[%s7 + $0x14] sm:$0xf]
      %v1468 = vld [vmem:[%s7 + $0x18] sm:$0xf]
      %v1469 = vld [vmem:[%s7 + $0x1c] sm:$0xf]
      %v1470 = vld [vmem:[%s7 + $0x20] sm:$0xf]
      %v1471 = vld [vmem:[%s7 + $0x24] sm:$0xf]
      %v1472 = vld [vmem:[%s7 + $0x28] sm:$0xf]
      %v1473 = vld [vmem:[%s7 + $0x2c] sm:$0xf]
      %v1474 = vld [vmem:[%s7 + $0x30] sm:$0xf]
      %v1475 = vld [vmem:[%s7 + $0x34] sm:$0xf]
      %v1476 = vld [vmem:[%s7 + $0x38] sm:$0xf]
      %v1477 = vld [vmem:[%s7 + $0x3c] sm:$0xf]
      %v1478 = vpack.c.bf16 %v1460, %v1459
      %v1479 = vpack.c.bf16 %v1461, %v1461
      %v1480 = vpack.c.bf16 %v1401, %v1397
      %v1481 = vpack.c.bf16 %v1407, %v1407
      %v1482 = vpack.c.bf16 %v1449, %v1446
      %v1483 = vpack.c.bf16 %v1454, %v1454
      %vm1484 = vcmask 261120
      %v1486 = vsel %vm1484, %v1478, 0
      %v1489 = vsel %vm1484, %v1479, 0
      %v1492 = vsel %vm1484, %v1480, 0
      %v1495 = vsel %vm1484, %v1481, 0
      %1497 = vmatprep.subr.bf16.mxu0 0
      %1498 = vmatpush1.bf16.xpose.msra.mxu0 %v1492
      %1499 = vmatprep.subr.bf16.mxu0 0
      %1500 = vmatpush1.bf16.xpose.msra.mxu0 %v1495
      %1501 = vmatprep.subr.bf16.mxu0 0
      %1502 = vmatpush1.bf16.xpose.msra.mxu0 0
      %1503 = vmatprep.subr.bf16.mxu0 0
      %1504 = vmatpush1.bf16.xpose.msra.mxu0 0
      %1505 = vmatprep.subr.bf16.mxu0 0
      %1506 = vmatpush1.bf16.xpose.msra.mxu0 0
      %1507 = vmatprep.subr.bf16.mxu0 0
      %1508 = vmatpush1.bf16.xpose.msra.mxu0 0
      %1509 = vmatprep.subr.bf16.mxu0 0
      %1510 = vmatpush1.bf16.xpose.msra.mxu0 0
      %1511 = vmatprep.subr.bf16.mxu0 0
      %1512 = vmatpush1.bf16.xpose.msra.mxu0 0
      %1513 = vmatprep.subr.bf16.mxu0 0
      %1514 = vmatpush1.bf16.xpose.msra.mxu0 0
      %1515 = vmatprep.subr.bf16.mxu0 0
      %1516 = vmatpush1.bf16.xpose.msra.mxu0 0
      %1517 = vmatprep.subr.bf16.mxu0 0
      %1518 = vmatpush1.bf16.xpose.msra.mxu0 0
      %1519 = vmatprep.subr.bf16.mxu0 0
      %1520 = vmatpush1.bf16.xpose.msra.mxu0 0
      %1521 = vmatprep.subr.bf16.mxu0 0
      %1522 = vmatpush1.bf16.xpose.msra.mxu0 0
      %1523 = vmatprep.subr.bf16.mxu0 0
      %1524 = vmatpush1.bf16.xpose.msra.mxu0 0
      %1525 = vmatprep.subr.bf16.mxu0 0
      %1526 = vmatpush1.bf16.xpose.msra.mxu0 0
      %1527 = vmatprep.subr.bf16.mxu0 0
      %1528 = vmatpush1.bf16.xpose.msra.mxu0 0
      %1529 = vmatprep.mubr.bf16.mxu0 0
      %1530 = vmatmul.mubr.bf16.gmra.mrb[0].mxu0 %v1486
      %v1531 = vpop.f32.mrb[0].mxu0
      %v1532 = vadd.f32 0.0, %v1531
      %v1533 = vpop.f32.mrb[0].mxu0
      %v1534 = vpop.f32.mrb[0].mxu0
      %v1535 = vadd.f32 0.0, %v1534
      %v1536 = vpop.f32.mrb[0].mxu0
      %1537 = vmatprep.mubr.bf16.mxu0 0
      %1538 = vmatmul.mubr.bf16.gmra.mrb[0].mxu0 %v1489
      %v1539 = vpop.f32.mrb[0].mxu0
      %v1540 = vadd.f32 0.0, %v1539
      %v1541 = vpop.f32.mrb[0].mxu0
      %v1542 = vpop.f32.mrb[0].mxu0
      %v1543 = vpop.f32.mrb[0].mxu0
      %1544 = vdwg.mxu0
      %vm1545 = vcmask 138240
      %v1546 = vsel %vm1545, %v1532, -inf
      %1547 = vmax.xlane.f32.xlu0 %v1546
      %v1548 = vpop.xlane.xlu0 %1547
      %v1549 = vsel %vm1545, %v1535, -inf
      %1550 = vmax.xlane.f32.xlu0 %v1549
      %v1551 = vpop.xlane.xlu0 %1550
      %vm1552 = vcmask 131072
      %v1553 = vsel %vm1552, %v1540, -inf
      %1554 = vmax.xlane.f32.xlu0 %v1553
      %v1555 = vpop.xlane.xlu0 %1554
      %v1556 = vsub.f32 %v1532, %v1548
      %v1557 = vsub.f32 %v1535, %v1551
      %v1558 = vsub.f32 %v1540, %v1555
      %v1559 = vmul.f32 %v1556, 1.442695
      %v1560 = vpow.pop %v1559
      %v1561 = vmul.f32 %v1557, 1.442695
      %v1562 = vpow.pop %v1561
      %v1563 = vmul.f32 %v1558, 1.442695
      %v1564 = vpow.pop %v1563
      %v1565 = vsel %vm1545, %v1560, 0.0
      %1566 = vadd.xlane.f32.xlu0 %v1565
      %v1567 = vpop.xlane.xlu0 %1566
      %v1568 = vsel %vm1545, %v1562, 0.0
      %1569 = vadd.xlane.f32.xlu0 %v1568
      %v1570 = vpop.xlane.xlu0 %1569
      %v1571 = vsel %vm1552, %v1564, 0.0
      %1572 = vadd.xlane.f32.xlu0 %v1571
      %v1573 = vpop.xlane.xlu0 %1572
      %v1574 = vrcp.pop %v1567
      %v1575 = vmul.f32 %v1560, %v1574
      %v1576 = vrcp.pop %v1570
      %v1577 = vmul.f32 %v1562, %v1576
      %v1578 = vrcp.pop %v1573
      %v1579 = vmul.f32 %v1564, %v1578
      %v1580 = vpack.c.bf16 %v1577, %v1575
      %v1581 = vpack.c.bf16 %v1579, %v1579
      %v1583 = vsel %vm1545, %v1580, 0
      %v1586 = vsel %vm1545, %v1581, 0
      %v1588 = vsel 0, 4294967295, 65535
      %v1589 = vsel %vm1130, %v1588, 0
      %v1591 = vand.u32 %v1483, %v1589
      %1593 = vmatprep.subr.bf16.mxu0 0
      %1594 = vmatpush1.bf16.msra.mxu0 %v1482
      %1595 = vmatprep.subr.bf16.mxu0 0
      %1596 = vmatpush1.bf16.msra.mxu0 %v1591
      %1597 = vmatprep.subr.bf16.mxu0 0
      %1598 = vmatpush1.bf16.msra.mxu0 0
      %1599 = vmatprep.subr.bf16.mxu0 0
      %1600 = vmatpush1.bf16.msra.mxu0 0
      %1601 = vmatprep.subr.bf16.mxu0 0
      %1602 = vmatpush1.bf16.msra.mxu0 0
      %1603 = vmatprep.subr.bf16.mxu0 0
      %1604 = vmatpush1.bf16.msra.mxu0 0
      %1605 = vmatprep.subr.bf16.mxu0 0
      %1606 = vmatpush1.bf16.msra.mxu0 0
      %1607 = vmatprep.subr.bf16.mxu0 0
      %1608 = vmatpush1.bf16.msra.mxu0 0
      %1609 = vmatprep.subr.bf16.mxu0 0
      %1610 = vmatpush1.bf16.msra.mxu0 0
      %1611 = vmatprep.subr.bf16.mxu0 0
      %1612 = vmatpush1.bf16.msra.mxu0 0
      %1613 = vmatprep.subr.bf16.mxu0 0
      %1614 = vmatpush1.bf16.msra.mxu0 0
      %1615 = vmatprep.subr.bf16.mxu0 0
      %1616 = vmatpush1.bf16.msra.mxu0 0
      %1617 = vmatprep.subr.bf16.mxu0 0
      %1618 = vmatpush1.bf16.msra.mxu0 0
      %1619 = vmatprep.subr.bf16.mxu0 0
      %1620 = vmatpush1.bf16.msra.mxu0 0
      %1621 = vmatprep.subr.bf16.mxu0 0
      %1622 = vmatpush1.bf16.msra.mxu0 0
      %1623 = vmatprep.subr.bf16.mxu0 0
      %1624 = vmatpush1.bf16.msra.mxu0 0
      %1625 = vmatprep.mubr.bf16.mxu0 0
      %1626 = vmatmul.mubr.bf16.gmra.mrb[0].mxu0 %v1583
      %v1627 = vpop.f32.mrb[0].mxu0
      %v1628 = vadd.f32 0.0, %v1627
      %v1629 = vpop.f32.mrb[0].mxu0
      %v1630 = vpop.f32.mrb[0].mxu0
      %v1631 = vadd.f32 0.0, %v1630
      %v1632 = vpop.f32.mrb[0].mxu0
      %1633 = vmatprep.mubr.bf16.mxu0 0
      %1634 = vmatmul.mubr.bf16.gmra.mrb[0].mxu0 %v1586
      %v1635 = vpop.f32.mrb[0].mxu0
      %v1636 = vadd.f32 0.0, %v1635
      %v1637 = vpop.f32.mrb[0].mxu0
      %v1638 = vpop.f32.mrb[0].mxu0
      %v1639 = vpop.f32.mrb[0].mxu0
      %1640 = vdwg.mxu0
      %v1641 = vpack.c.bf16 %v1631, %v1628
      %v1642 = vpack.c.bf16 %v1636, %v1636
      %1645 = vrot.lane.b32.xlu0 %v1478, 96
      %v1646 = vpop.permute.xlu0 %1645
      %1647 = vrot.lane.b32.xlu0 %v1479, 96
      %v1648 = vpop.permute.xlu0 %1647
      %1651 = vrot.lane.b32.xlu0 %v1480, 96
      %v1652 = vpop.permute.xlu0 %1651
      %1653 = vrot.lane.b32.xlu0 %v1481, 96
      %v1654 = vpop.permute.xlu0 %1653
      %v1656 = vsel %vm1484, %v1646, 0
      %v1659 = vsel %vm1484, %v1648, 0
      %v1662 = vsel %vm1484, %v1652, 0
      %v1665 = vsel %vm1484, %v1654, 0
      %1667 = vmatprep.subr.bf16.mxu0 0
      %1668 = vmatpush1.bf16.xpose.msra.mxu0 %v1662
      %1669 = vmatprep.subr.bf16.mxu0 0
      %1670 = vmatpush1.bf16.xpose.msra.mxu0 %v1665
      %1671 = vmatprep.subr.bf16.mxu0 0
      %1672 = vmatpush1.bf16.xpose.msra.mxu0 0
      %1673 = vmatprep.subr.bf16.mxu0 0
      %1674 = vmatpush1.bf16.xpose.msra.mxu0 0
      %1675 = vmatprep.subr.bf16.mxu0 0
      %1676 = vmatpush1.bf16.xpose.msra.mxu0 0
      %1677 = vmatprep.subr.bf16.mxu0 0
      %1678 = vmatpush1.bf16.xpose.msra.mxu0 0
      %1679 = vmatprep.subr.bf16.mxu0 0
      %1680 = vmatpush1.bf16.xpose.msra.mxu0 0
      %1681 = vmatprep.subr.bf16.mxu0 0
      %1682 = vmatpush1.bf16.xpose.msra.mxu0 0
      %1683 = vmatprep.subr.bf16.mxu0 0
      %1684 = vmatpush1.bf16.xpose.msra.mxu0 0
      %1685 = vmatprep.subr.bf16.mxu0 0
      %1686 = vmatpush1.bf16.xpose.msra.mxu0 0
      %1687 = vmatprep.subr.bf16.mxu0 0
      %1688 = vmatpush1.bf16.xpose.msra.mxu0 0
      %1689 = vmatprep.subr.bf16.mxu0 0
      %1690 = vmatpush1.bf16.xpose.msra.mxu0 0
      %1691 = vmatprep.subr.bf16.mxu0 0
      %1692 = vmatpush1.bf16.xpose.msra.mxu0 0
      %1693 = vmatprep.subr.bf16.mxu0 0
      %1694 = vmatpush1.bf16.xpose.msra.mxu0 0
      %1695 = vmatprep.subr.bf16.mxu0 0
      %1696 = vmatpush1.bf16.xpose.msra.mxu0 0
      %1697 = vmatprep.subr.bf16.mxu0 0
      %1698 = vmatpush1.bf16.xpose.msra.mxu0 0
      %1699 = vmatprep.mubr.bf16.mxu0 0
      %1700 = vmatmul.mubr.bf16.gmra.mrb[0].mxu0 %v1656
      %v1701 = vpop.f32.mrb[0].mxu0
      %v1702 = vadd.f32 0.0, %v1701
      %v1703 = vpop.f32.mrb[0].mxu0
      %v1704 = vpop.f32.mrb[0].mxu0
      %v1705 = vadd.f32 0.0, %v1704
      %v1706 = vpop.f32.mrb[0].mxu0
      %1707 = vmatprep.mubr.bf16.mxu0 0
      %1708 = vmatmul.mubr.bf16.gmra.mrb[0].mxu0 %v1659
      %v1709 = vpop.f32.mrb[0].mxu0
      %v1710 = vadd.f32 0.0, %v1709
      %v1711 = vpop.f32.mrb[0].mxu0
      %v1712 = vpop.f32.mrb[0].mxu0
      %v1713 = vpop.f32.mrb[0].mxu0
      %1714 = vdwg.mxu0
      %v1715 = vsel %vm1545, %v1702, -inf
      %1716 = vmax.xlane.f32.xlu0 %v1715
      %v1717 = vpop.xlane.xlu0 %1716
      %v1718 = vsel %vm1545, %v1705, -inf
      %1719 = vmax.xlane.f32.xlu0 %v1718
      %v1720 = vpop.xlane.xlu0 %1719
      %v1721 = vsel %vm1552, %v1710, -inf
      %1722 = vmax.xlane.f32.xlu0 %v1721
      %v1723 = vpop.xlane.xlu0 %1722
      %v1724 = vsub.f32 %v1702, %v1717
      %v1725 = vsub.f32 %v1705, %v1720
      %v1726 = vsub.f32 %v1710, %v1723
      %v1727 = vmul.f32 %v1724, 1.442695
      %v1728 = vpow.pop %v1727
      %v1729 = vmul.f32 %v1725, 1.442695
      %v1730 = vpow.pop %v1729
      %v1731 = vmul.f32 %v1726, 1.442695
      %v1732 = vpow.pop %v1731
      %v1733 = vsel %vm1545, %v1728, 0.0
      %1734 = vadd.xlane.f32.xlu0 %v1733
      %v1735 = vpop.xlane.xlu0 %1734
      %v1736 = vsel %vm1545, %v1730, 0.0
      %1737 = vadd.xlane.f32.xlu0 %v1736
      %v1738 = vpop.xlane.xlu0 %1737
      %v1739 = vsel %vm1552, %v1732, 0.0
      %1740 = vadd.xlane.f32.xlu0 %v1739
      %v1741 = vpop.xlane.xlu0 %1740
      %v1742 = vrcp.pop %v1735
      %v1743 = vmul.f32 %v1728, %v1742
      %v1744 = vrcp.pop %v1738
      %v1745 = vmul.f32 %v1730, %v1744
      %v1746 = vrcp.pop %v1741
      %v1747 = vmul.f32 %v1732, %v1746
      %v1748 = vpack.c.bf16 %v1745, %v1743
      %v1749 = vpack.c.bf16 %v1747, %v1747
      %1752 = vrot.lane.b32.xlu0 %v1482, 96
      %v1753 = vpop.permute.xlu0 %1752
      %1754 = vrot.lane.b32.xlu0 %v1483, 96
      %v1755 = vpop.permute.xlu0 %1754
      %v1758 = vsel %vm1545, %v1748, 0
      %v1761 = vsel %vm1545, %v1749, 0
      %v1764 = vand.u32 %v1755, %v1589
      %1766 = vmatprep.subr.bf16.mxu0 0
      %1767 = vmatpush1.bf16.msra.mxu0 %v1753
      %1768 = vmatprep.subr.bf16.mxu0 0
      %1769 = vmatpush1.bf16.msra.mxu0 %v1764
      %1770 = vmatprep.subr.bf16.mxu0 0
      %1771 = vmatpush1.bf16.msra.mxu0 0
      %1772 = vmatprep.subr.bf16.mxu0 0
      %1773 = vmatpush1.bf16.msra.mxu0 0
      %1774 = vmatprep.subr.bf16.mxu0 0
      %1775 = vmatpush1.bf16.msra.mxu0 0
      %1776 = vmatprep.subr.bf16.mxu0 0
      %1777 = vmatpush1.bf16.msra.mxu0 0
      %1778 = vmatprep.subr.bf16.mxu0 0
      %1779 = vmatpush1.bf16.msra.mxu0 0
      %1780 = vmatprep.subr.bf16.mxu0 0
      %1781 = vmatpush1.bf16.msra.mxu0 0
      %1782 = vmatprep.subr.bf16.mxu0 0
      %1783 = vmatpush1.bf16.msra.mxu0 0
      %1784 = vmatprep.subr.bf16.mxu0 0
      %1785 = vmatpush1.bf16.msra.mxu0 0
      %1786 = vmatprep.subr.bf16.mxu0 0
      %1787 = vmatpush1.bf16.msra.mxu0 0
      %1788 = vmatprep.subr.bf16.mxu0 0
      %1789 = vmatpush1.bf16.msra.mxu0 0
      %1790 = vmatprep.subr.bf16.mxu0 0
      %1791 = vmatpush1.bf16.msra.mxu0 0
      %1792 = vmatprep.subr.bf16.mxu0 0
      %1793 = vmatpush1.bf16.msra.mxu0 0
      %1794 = vmatprep.subr.bf16.mxu0 0
      %1795 = vmatpush1.bf16.msra.mxu0 0
      %1796 = vmatprep.subr.bf16.mxu0 0
      %1797 = vmatpush1.bf16.msra.mxu0 0
      %1798 = vmatprep.mubr.bf16.mxu0 0
      %1799 = vmatmul.mubr.bf16.gmra.mrb[0].mxu0 %v1758
      %v1800 = vpop.f32.mrb[0].mxu0
      %v1801 = vadd.f32 0.0, %v1800
      %v1802 = vpop.f32.mrb[0].mxu0
      %v1803 = vpop.f32.mrb[0].mxu0
      %v1804 = vadd.f32 0.0, %v1803
      %v1805 = vpop.f32.mrb[0].mxu0
      %1806 = vmatprep.mubr.bf16.mxu0 0
      %1807 = vmatmul.mubr.bf16.gmra.mrb[0].mxu0 %v1761
      %v1808 = vpop.f32.mrb[0].mxu0
      %v1809 = vadd.f32 0.0, %v1808
      %v1810 = vpop.f32.mrb[0].mxu0
      %v1811 = vpop.f32.mrb[0].mxu0
      %v1812 = vpop.f32.mrb[0].mxu0
      %1813 = vdwg.mxu0
      %v1814 = vpack.c.bf16 %v1804, %v1801
      %v1815 = vpack.c.bf16 %v1809, %v1809
      %v1820 = vunpack.c.l.b16 %v1466
      %v1821 = vunpack.c.l.b16 %v1467
      %v1822 = vunpack.c.l.b16 %v1468
      %v1823 = vunpack.c.l.b16 %v1469
      %v1824 = vpack.c.b16 %v1821, %v1820
      %v1825 = vpack.c.b16 %v1823, %v1822
      %v1829 = vsel %vm1484, %v1814, 0
      %v1832 = vsel %vm1484, %v1815, 0
      %1834 = vmatprep.subr.bf16.mxu0 0
      %1835 = vmatpush1.bf16.msra.mxu0 %v1824
      %1836 = vmatprep.subr.bf16.mxu0 0
      %1837 = vmatpush1.bf16.msra.mxu0 %v1825
      %1838 = vmatprep.subr.bf16.mxu0 0
      %1839 = vmatpush1.bf16.msra.mxu0 0
      %1840 = vmatprep.subr.bf16.mxu0 0
      %1841 = vmatpush1.bf16.msra.mxu0 0
      %1842 = vmatprep.subr.bf16.mxu0 0
      %1843 = vmatpush1.bf16.msra.mxu0 0
      %1844 = vmatprep.subr.bf16.mxu0 0
      %1845 = vmatpush1.bf16.msra.mxu0 0
      %1846 = vmatprep.subr.bf16.mxu0 0
      %1847 = vmatpush1.bf16.msra.mxu0 0
      %1848 = vmatprep.subr.bf16.mxu0 0
      %1849 = vmatpush1.bf16.msra.mxu0 0
      %1850 = vmatprep.subr.bf16.mxu0 0
      %1851 = vmatpush1.bf16.msra.mxu0 0
      %1852 = vmatprep.subr.bf16.mxu0 0
      %1853 = vmatpush1.bf16.msra.mxu0 0
      %1854 = vmatprep.subr.bf16.mxu0 0
      %1855 = vmatpush1.bf16.msra.mxu0 0
      %1856 = vmatprep.subr.bf16.mxu0 0
      %1857 = vmatpush1.bf16.msra.mxu0 0
      %1858 = vmatprep.subr.bf16.mxu0 0
      %1859 = vmatpush1.bf16.msra.mxu0 0
      %1860 = vmatprep.subr.bf16.mxu0 0
      %1861 = vmatpush1.bf16.msra.mxu0 0
      %1862 = vmatprep.subr.bf16.mxu0 0
      %1863 = vmatpush1.bf16.msra.mxu0 0
      %1864 = vmatprep.subr.bf16.mxu0 0
      %1865 = vmatpush1.bf16.msra.mxu0 0
      %1866 = vmatprep.mubr.bf16.mxu0 0
      %1867 = vmatmul.mubr.bf16.gmra.mrb[0].mxu0 %v1829
      %v1868 = vpop.f32.mrb[0].mxu0
      %v1869 = vadd.f32 0.0, %v1868
      %v1870 = vpop.f32.mrb[0].mxu0
      %v1871 = vpop.f32.mrb[0].mxu0
      %v1872 = vadd.f32 0.0, %v1871
      %v1873 = vpop.f32.mrb[0].mxu0
      %1874 = vmatprep.mubr.bf16.mxu0 0
      %1875 = vmatmul.mubr.bf16.gmra.mrb[0].mxu0 %v1832
      %v1876 = vpop.f32.mrb[0].mxu0
      %v1877 = vadd.f32 0.0, %v1876
      %v1878 = vpop.f32.mrb[0].mxu0
      %v1879 = vpop.f32.mrb[0].mxu0
      %v1880 = vpop.f32.mrb[0].mxu0
      %1881 = vdwg.mxu0
      %v1886 = vunpack.c.l.b16 %v1462
      %v1887 = vunpack.c.l.b16 %v1463
      %v1888 = vunpack.c.l.b16 %v1464
      %v1889 = vunpack.c.l.b16 %v1465
      %v1890 = vpack.c.b16 %v1887, %v1886
      %v1891 = vpack.c.b16 %v1889, %v1888
      %v1895 = vsel %vm1484, %v1641, 0
      %v1898 = vsel %vm1484, %v1642, 0
      %1900 = vmatprep.subr.bf16.mxu0 0
      %1901 = vmatpush1.bf16.msra.mxu0 %v1890
      %1902 = vmatprep.subr.bf16.mxu0 0
      %1903 = vmatpush1.bf16.msra.mxu0 %v1891
      %1904 = vmatprep.subr.bf16.mxu0 0
      %1905 = vmatpush1.bf16.msra.mxu0 0
      %1906 = vmatprep.subr.bf16.mxu0 0
      %1907 = vmatpush1.bf16.msra.mxu0 0
      %1908 = vmatprep.subr.bf16.mxu0 0
      %1909 = vmatpush1.bf16.msra.mxu0 0
      %1910 = vmatprep.subr.bf16.mxu0 0
      %1911 = vmatpush1.bf16.msra.mxu0 0
      %1912 = vmatprep.subr.bf16.mxu0 0
      %1913 = vmatpush1.bf16.msra.mxu0 0
      %1914 = vmatprep.subr.bf16.mxu0 0
      %1915 = vmatpush1.bf16.msra.mxu0 0
      %1916 = vmatprep.subr.bf16.mxu0 0
      %1917 = vmatpush1.bf16.msra.mxu0 0
      %1918 = vmatprep.subr.bf16.mxu0 0
      %1919 = vmatpush1.bf16.msra.mxu0 0
      %1920 = vmatprep.subr.bf16.mxu0 0
      %1921 = vmatpush1.bf16.msra.mxu0 0
      %1922 = vmatprep.subr.bf16.mxu0 0
      %1923 = vmatpush1.bf16.msra.mxu0 0
      %1924 = vmatprep.subr.bf16.mxu0 0
      %1925 = vmatpush1.bf16.msra.mxu0 0
      %1926 = vmatprep.subr.bf16.mxu0 0
      %1927 = vmatpush1.bf16.msra.mxu0 0
      %1928 = vmatprep.subr.bf16.mxu0 0
      %1929 = vmatpush1.bf16.msra.mxu0 0
      %1930 = vmatprep.subr.bf16.mxu0 0
      %1931 = vmatpush1.bf16.msra.mxu0 0
      %1932 = vmatprep.mubr.bf16.mxu0 0
      %1933 = vmatmul.mubr.bf16.gmra.mrb[0].mxu0 %v1895
      %v1934 = vpop.f32.mrb[0].mxu0
      %v1935 = vadd.f32 %v1869, %v1934
      %v1936 = vpop.f32.mrb[0].mxu0
      %v1937 = vpop.f32.mrb[0].mxu0
      %v1938 = vadd.f32 %v1872, %v1937
      %v1939 = vpop.f32.mrb[0].mxu0
      %1940 = vmatprep.mubr.bf16.mxu0 0
      %1941 = vmatmul.mubr.bf16.gmra.mrb[0].mxu0 %v1898
      %v1942 = vpop.f32.mrb[0].mxu0
      %v1943 = vadd.f32 %v1877, %v1942
      %v1944 = vpop.f32.mrb[0].mxu0
      %v1945 = vpop.f32.mrb[0].mxu0
      %v1946 = vpop.f32.mrb[0].mxu0
      %1947 = vdwg.mxu0
      %1948 = vrot.lane.b32.xlu0 %v1478, 64
      %v1949 = vpop.permute.xlu0 %1948
      %1950 = vrot.lane.b32.xlu0 %v1479, 64
      %v1951 = vpop.permute.xlu0 %1950
      %1952 = vrot.lane.b32.xlu0 %v1480, 64
      %v1953 = vpop.permute.xlu0 %1952
      %1954 = vrot.lane.b32.xlu0 %v1481, 64
      %v1955 = vpop.permute.xlu0 %1954
      %v1957 = vsel %vm1484, %v1949, 0
      %v1960 = vsel %vm1484, %v1951, 0
      %v1963 = vsel %vm1484, %v1953, 0
      %v1966 = vsel %vm1484, %v1955, 0
      %1968 = vmatprep.subr.bf16.mxu0 0
      %1969 = vmatpush1.bf16.xpose.msra.mxu0 %v1963
      %1970 = vmatprep.subr.bf16.mxu0 0
      %1971 = vmatpush1.bf16.xpose.msra.mxu0 %v1966
      %1972 = vmatprep.subr.bf16.mxu0 0
      %1973 = vmatpush1.bf16.xpose.msra.mxu0 0
      %1974 = vmatprep.subr.bf16.mxu0 0
      %1975 = vmatpush1.bf16.xpose.msra.mxu0 0
      %1976 = vmatprep.subr.bf16.mxu0 0
      %1977 = vmatpush1.bf16.xpose.msra.mxu0 0
      %1978 = vmatprep.subr.bf16.mxu0 0
      %1979 = vmatpush1.bf16.xpose.msra.mxu0 0
      %1980 = vmatprep.subr.bf16.mxu0 0
      %1981 = vmatpush1.bf16.xpose.msra.mxu0 0
      %1982 = vmatprep.subr.bf16.mxu0 0
      %1983 = vmatpush1.bf16.xpose.msra.mxu0 0
      %1984 = vmatprep.subr.bf16.mxu0 0
      %1985 = vmatpush1.bf16.xpose.msra.mxu0 0
      %1986 = vmatprep.subr.bf16.mxu0 0
      %1987 = vmatpush1.bf16.xpose.msra.mxu0 0
      %1988 = vmatprep.subr.bf16.mxu0 0
      %1989 = vmatpush1.bf16.xpose.msra.mxu0 0
      %1990 = vmatprep.subr.bf16.mxu0 0
      %1991 = vmatpush1.bf16.xpose.msra.mxu0 0
      %1992 = vmatprep.subr.bf16.mxu0 0
      %1993 = vmatpush1.bf16.xpose.msra.mxu0 0
      %1994 = vmatprep.subr.bf16.mxu0 0
      %1995 = vmatpush1.bf16.xpose.msra.mxu0 0
      %1996 = vmatprep.subr.bf16.mxu0 0
      %1997 = vmatpush1.bf16.xpose.msra.mxu0 0
      %1998 = vmatprep.subr.bf16.mxu0 0
      %1999 = vmatpush1.bf16.xpose.msra.mxu0 0
      %2000 = vmatprep.mubr.bf16.mxu0 0
      %2001 = vmatmul.mubr.bf16.gmra.mrb[0].mxu0 %v1957
      %v2002 = vpop.f32.mrb[0].mxu0
      %v2003 = vadd.f32 0.0, %v2002
      %v2004 = vpop.f32.mrb[0].mxu0
      %v2005 = vpop.f32.mrb[0].mxu0
      %v2006 = vadd.f32 0.0, %v2005
      %v2007 = vpop.f32.mrb[0].mxu0
      %2008 = vmatprep.mubr.bf16.mxu0 0
      %2009 = vmatmul.mubr.bf16.gmra.mrb[0].mxu0 %v1960
      %v2010 = vpop.f32.mrb[0].mxu0
      %v2011 = vadd.f32 0.0, %v2010
      %v2012 = vpop.f32.mrb[0].mxu0
      %v2013 = vpop.f32.mrb[0].mxu0
      %v2014 = vpop.f32.mrb[0].mxu0
      %2015 = vdwg.mxu0
      %v2016 = vsel %vm1545, %v2003, -inf
      %2017 = vmax.xlane.f32.xlu0 %v2016
      %v2018 = vpop.xlane.xlu0 %2017
      %v2019 = vsel %vm1545, %v2006, -inf
      %2020 = vmax.xlane.f32.xlu0 %v2019
      %v2021 = vpop.xlane.xlu0 %2020
      %v2022 = vsel %vm1552, %v2011, -inf
      %2023 = vmax.xlane.f32.xlu0 %v2022
      %v2024 = vpop.xlane.xlu0 %2023
      %v2025 = vsub.f32 %v2003, %v2018
      %v2026 = vsub.f32 %v2006, %v2021
      %v2027 = vsub.f32 %v2011, %v2024
      %v2028 = vmul.f32 %v2025, 1.442695
      %v2029 = vpow.pop %v2028
      %v2030 = vmul.f32 %v2026, 1.442695
      %v2031 = vpow.pop %v2030
      %v2032 = vmul.f32 %v2027, 1.442695
      %v2033 = vpow.pop %v2032
      %v2034 = vsel %vm1545, %v2029, 0.0
      %2035 = vadd.xlane.f32.xlu0 %v2034
      %v2036 = vpop.xlane.xlu0 %2035
      %v2037 = vsel %vm1545, %v2031, 0.0
      %2038 = vadd.xlane.f32.xlu0 %v2037
      %v2039 = vpop.xlane.xlu0 %2038
      %v2040 = vsel %vm1552, %v2033, 0.0
      %2041 = vadd.xlane.f32.xlu0 %v2040
      %v2042 = vpop.xlane.xlu0 %2041
      %v2043 = vrcp.pop %v2036
      %v2044 = vmul.f32 %v2029, %v2043
      %v2045 = vrcp.pop %v2039
      %v2046 = vmul.f32 %v2031, %v2045
      %v2047 = vrcp.pop %v2042
      %v2048 = vmul.f32 %v2033, %v2047
      %v2049 = vpack.c.bf16 %v2046, %v2044
      %v2050 = vpack.c.bf16 %v2048, %v2048
      %2051 = vrot.lane.b32.xlu0 %v1482, 64
      %v2052 = vpop.permute.xlu0 %2051
      %2053 = vrot.lane.b32.xlu0 %v1483, 64
      %v2054 = vpop.permute.xlu0 %2053
      %v2057 = vsel %vm1545, %v2049, 0
      %v2060 = vsel %vm1545, %v2050, 0
      %v2063 = vand.u32 %v2054, %v1589
      %2065 = vmatprep.subr.bf16.mxu0 0
      %2066 = vmatpush1.bf16.msra.mxu0 %v2052
      %2067 = vmatprep.subr.bf16.mxu0 0
      %2068 = vmatpush1.bf16.msra.mxu0 %v2063
      %2069 = vmatprep.subr.bf16.mxu0 0
      %2070 = vmatpush1.bf16.msra.mxu0 0
      %2071 = vmatprep.subr.bf16.mxu0 0
      %2072 = vmatpush1.bf16.msra.mxu0 0
      %2073 = vmatprep.subr.bf16.mxu0 0
      %2074 = vmatpush1.bf16.msra.mxu0 0
      %2075 = vmatprep.subr.bf16.mxu0 0
      %2076 = vmatpush1.bf16.msra.mxu0 0
      %2077 = vmatprep.subr.bf16.mxu0 0
      %2078 = vmatpush1.bf16.msra.mxu0 0
      %2079 = vmatprep.subr.bf16.mxu0 0
      %2080 = vmatpush1.bf16.msra.mxu0 0
      %2081 = vmatprep.subr.bf16.mxu0 0
      %2082 = vmatpush1.bf16.msra.mxu0 0
      %2083 = vmatprep.subr.bf16.mxu0 0
      %2084 = vmatpush1.bf16.msra.mxu0 0
      %2085 = vmatprep.subr.bf16.mxu0 0
      %2086 = vmatpush1.bf16.msra.mxu0 0
      %2087 = vmatprep.subr.bf16.mxu0 0
      %2088 = vmatpush1.bf16.msra.mxu0 0
      %2089 = vmatprep.subr.bf16.mxu0 0
      %2090 = vmatpush1.bf16.msra.mxu0 0
      %2091 = vmatprep.subr.bf16.mxu0 0
      %2092 = vmatpush1.bf16.msra.mxu0 0
      %2093 = vmatprep.subr.bf16.mxu0 0
      %2094 = vmatpush1.bf16.msra.mxu0 0
      %2095 = vmatprep.subr.bf16.mxu0 0
      %2096 = vmatpush1.bf16.msra.mxu0 0
      %2097 = vmatprep.mubr.bf16.mxu0 0
      %2098 = vmatmul.mubr.bf16.gmra.mrb[0].mxu0 %v2057
      %v2099 = vpop.f32.mrb[0].mxu0
      %v2100 = vadd.f32 0.0, %v2099
      %v2101 = vpop.f32.mrb[0].mxu0
      %v2102 = vpop.f32.mrb[0].mxu0
      %v2103 = vadd.f32 0.0, %v2102
      %v2104 = vpop.f32.mrb[0].mxu0
      %2105 = vmatprep.mubr.bf16.mxu0 0
      %2106 = vmatmul.mubr.bf16.gmra.mrb[0].mxu0 %v2060
      %v2107 = vpop.f32.mrb[0].mxu0
      %v2108 = vadd.f32 0.0, %v2107
      %v2109 = vpop.f32.mrb[0].mxu0
      %v2110 = vpop.f32.mrb[0].mxu0
      %v2111 = vpop.f32.mrb[0].mxu0
      %2112 = vdwg.mxu0
      %v2113 = vpack.c.bf16 %v2103, %v2100
      %v2114 = vpack.c.bf16 %v2108, %v2108
      %v2119 = vunpack.c.l.b16 %v1470
      %v2120 = vunpack.c.l.b16 %v1471
      %v2121 = vunpack.c.l.b16 %v1472
      %v2122 = vunpack.c.l.b16 %v1473
      %v2123 = vpack.c.b16 %v2120, %v2119
      %v2124 = vpack.c.b16 %v2122, %v2121
      %v2128 = vsel %vm1484, %v2113, 0
      %v2131 = vsel %vm1484, %v2114, 0
      %2133 = vmatprep.subr.bf16.mxu0 0
      %2134 = vmatpush1.bf16.msra.mxu0 %v2123
      %2135 = vmatprep.subr.bf16.mxu0 0
      %2136 = vmatpush1.bf16.msra.mxu0 %v2124
      %2137 = vmatprep.subr.bf16.mxu0 0
      %2138 = vmatpush1.bf16.msra.mxu0 0
      %2139 = vmatprep.subr.bf16.mxu0 0
      %2140 = vmatpush1.bf16.msra.mxu0 0
      %2141 = vmatprep.subr.bf16.mxu0 0
      %2142 = vmatpush1.bf16.msra.mxu0 0
      %2143 = vmatprep.subr.bf16.mxu0 0
      %2144 = vmatpush1.bf16.msra.mxu0 0
      %2145 = vmatprep.subr.bf16.mxu0 0
      %2146 = vmatpush1.bf16.msra.mxu0 0
      %2147 = vmatprep.subr.bf16.mxu0 0
      %2148 = vmatpush1.bf16.msra.mxu0 0
      %2149 = vmatprep.subr.bf16.mxu0 0
      %2150 = vmatpush1.bf16.msra.mxu0 0
      %2151 = vmatprep.subr.bf16.mxu0 0
      %2152 = vmatpush1.bf16.msra.mxu0 0
      %2153 = vmatprep.subr.bf16.mxu0 0
      %2154 = vmatpush1.bf16.msra.mxu0 0
      %2155 = vmatprep.subr.bf16.mxu0 0
      %2156 = vmatpush1.bf16.msra.mxu0 0
      %2157 = vmatprep.subr.bf16.mxu0 0
      %2158 = vmatpush1.bf16.msra.mxu0 0
      %2159 = vmatprep.subr.bf16.mxu0 0
      %2160 = vmatpush1.bf16.msra.mxu0 0
      %2161 = vmatprep.subr.bf16.mxu0 0
      %2162 = vmatpush1.bf16.msra.mxu0 0
      %2163 = vmatprep.subr.bf16.mxu0 0
      %2164 = vmatpush1.bf16.msra.mxu0 0
      %2165 = vmatprep.mubr.bf16.mxu0 0
      %2166 = vmatmul.mubr.bf16.gmra.mrb[0].mxu0 %v2128
      %v2167 = vpop.f32.mrb[0].mxu0
      %v2168 = vadd.f32 0.0, %v2167
      %v2169 = vpop.f32.mrb[0].mxu0
      %v2170 = vpop.f32.mrb[0].mxu0
      %v2171 = vadd.f32 0.0, %v2170
      %v2172 = vpop.f32.mrb[0].mxu0
      %2173 = vmatprep.mubr.bf16.mxu0 0
      %2174 = vmatmul.mubr.bf16.gmra.mrb[0].mxu0 %v2131
      %v2175 = vpop.f32.mrb[0].mxu0
      %v2176 = vadd.f32 0.0, %v2175
      %v2177 = vpop.f32.mrb[0].mxu0
      %v2178 = vpop.f32.mrb[0].mxu0
      %v2179 = vpop.f32.mrb[0].mxu0
      %2180 = vdwg.mxu0
      %v2181 = vadd.f32 %v1935, %v2168
      %v2182 = vadd.f32 %v1938, %v2171
      %v2183 = vadd.f32 %v1943, %v2176
      %2184 = vrot.lane.b32.xlu0 %v1478, 32
      %v2185 = vpop.permute.xlu0 %2184
      %2186 = vrot.lane.b32.xlu0 %v1479, 32
      %v2187 = vpop.permute.xlu0 %2186
      %2188 = vrot.lane.b32.xlu0 %v1480, 32
      %v2189 = vpop.permute.xlu0 %2188
      %2190 = vrot.lane.b32.xlu0 %v1481, 32
      %v2191 = vpop.permute.xlu0 %2190
      %v2193 = vsel %vm1484, %v2185, 0
      %v2196 = vsel %vm1484, %v2187, 0
      %v2199 = vsel %vm1484, %v2189, 0
      %v2202 = vsel %vm1484, %v2191, 0
      %2204 = vmatprep.subr.bf16.mxu0 0
      %2205 = vmatpush1.bf16.xpose.msra.mxu0 %v2199
      %2206 = vmatprep.subr.bf16.mxu0 0
      %2207 = vmatpush1.bf16.xpose.msra.mxu0 %v2202
      %2208 = vmatprep.subr.bf16.mxu0 0
      %2209 = vmatpush1.bf16.xpose.msra.mxu0 0
      %2210 = vmatprep.subr.bf16.mxu0 0
      %2211 = vmatpush1.bf16.xpose.msra.mxu0 0
      %2212 = vmatprep.subr.bf16.mxu0 0
      %2213 = vmatpush1.bf16.xpose.msra.mxu0 0
      %2214 = vmatprep.subr.bf16.mxu0 0
      %2215 = vmatpush1.bf16.xpose.msra.mxu0 0
      %2216 = vmatprep.subr.bf16.mxu0 0
      %2217 = vmatpush1.bf16.xpose.msra.mxu0 0
      %2218 = vmatprep.subr.bf16.mxu0 0
      %2219 = vmatpush1.bf16.xpose.msra.mxu0 0
      %2220 = vmatprep.subr.bf16.mxu0 0
      %2221 = vmatpush1.bf16.xpose.msra.mxu0 0
      %2222 = vmatprep.subr.bf16.mxu0 0
      %2223 = vmatpush1.bf16.xpose.msra.mxu0 0
      %2224 = vmatprep.subr.bf16.mxu0 0
      %2225 = vmatpush1.bf16.xpose.msra.mxu0 0
      %2226 = vmatprep.subr.bf16.mxu0 0
      %2227 = vmatpush1.bf16.xpose.msra.mxu0 0
      %2228 = vmatprep.subr.bf16.mxu0 0
      %2229 = vmatpush1.bf16.xpose.msra.mxu0 0
      %2230 = vmatprep.subr.bf16.mxu0 0
      %2231 = vmatpush1.bf16.xpose.msra.mxu0 0
      %2232 = vmatprep.subr.bf16.mxu0 0
      %2233 = vmatpush1.bf16.xpose.msra.mxu0 0
      %2234 = vmatprep.subr.bf16.mxu0 0
      %2235 = vmatpush1.bf16.xpose.msra.mxu0 0
      %2236 = vmatprep.mubr.bf16.mxu0 0
      %2237 = vmatmul.mubr.bf16.gmra.mrb[0].mxu0 %v2193
      %v2238 = vpop.f32.mrb[0].mxu0
      %v2239 = vadd.f32 0.0, %v2238
      %v2240 = vpop.f32.mrb[0].mxu0
      %v2241 = vpop.f32.mrb[0].mxu0
      %v2242 = vadd.f32 0.0, %v2241
      %v2243 = vpop.f32.mrb[0].mxu0
      %2244 = vmatprep.mubr.bf16.mxu0 0
      %2245 = vmatmul.mubr.bf16.gmra.mrb[0].mxu0 %v2196
      %v2246 = vpop.f32.mrb[0].mxu0
      %v2247 = vadd.f32 0.0, %v2246
      %v2248 = vpop.f32.mrb[0].mxu0
      %v2249 = vpop.f32.mrb[0].mxu0
      %v2250 = vpop.f32.mrb[0].mxu0
      %2251 = vdwg.mxu0
      %v2252 = vsel %vm1545, %v2239, -inf
      %2253 = vmax.xlane.f32.xlu0 %v2252
      %v2254 = vpop.xlane.xlu0 %2253
      %v2255 = vsel %vm1545, %v2242, -inf
      %2256 = vmax.xlane.f32.xlu0 %v2255
      %v2257 = vpop.xlane.xlu0 %2256
      %v2258 = vsel %vm1552, %v2247, -inf
      %2259 = vmax.xlane.f32.xlu0 %v2258
      %v2260 = vpop.xlane.xlu0 %2259
      %v2261 = vsub.f32 %v2239, %v2254
      %v2262 = vsub.f32 %v2242, %v2257
      %v2263 = vsub.f32 %v2247, %v2260
      %v2264 = vmul.f32 %v2261, 1.442695
      %v2265 = vpow.pop %v2264
      %v2266 = vmul.f32 %v2262, 1.442695
      %v2267 = vpow.pop %v2266
      %v2268 = vmul.f32 %v2263, 1.442695
      %v2269 = vpow.pop %v2268
      %v2270 = vsel %vm1545, %v2265, 0.0
      %2271 = vadd.xlane.f32.xlu0 %v2270
      %v2272 = vpop.xlane.xlu0 %2271
      %v2273 = vsel %vm1545, %v2267, 0.0
      %2274 = vadd.xlane.f32.xlu0 %v2273
      %v2275 = vpop.xlane.xlu0 %2274
      %v2276 = vsel %vm1552, %v2269, 0.0
      %2277 = vadd.xlane.f32.xlu0 %v2276
      %v2278 = vpop.xlane.xlu0 %2277
      %v2279 = vrcp.pop %v2272
      %v2280 = vmul.f32 %v2265, %v2279
      %v2281 = vrcp.pop %v2275
      %v2282 = vmul.f32 %v2267, %v2281
      %v2283 = vrcp.pop %v2278
      %v2284 = vmul.f32 %v2269, %v2283
      %v2285 = vpack.c.bf16 %v2282, %v2280
      %v2286 = vpack.c.bf16 %v2284, %v2284
      %2287 = vrot.lane.b32.xlu0 %v1482, 32
      %v2288 = vpop.permute.xlu0 %2287
      %2289 = vrot.lane.b32.xlu0 %v1483, 32
      %v2290 = vpop.permute.xlu0 %2289
      %v2293 = vsel %vm1545, %v2285, 0
      %v2296 = vsel %vm1545, %v2286, 0
      %v2299 = vand.u32 %v2290, %v1589
      %2301 = vmatprep.subr.bf16.mxu0 0
      %2302 = vmatpush1.bf16.msra.mxu0 %v2288
      %2303 = vmatprep.subr.bf16.mxu0 0
      %2304 = vmatpush1.bf16.msra.mxu0 %v2299
      %2305 = vmatprep.subr.bf16.mxu0 0
      %2306 = vmatpush1.bf16.msra.mxu0 0
      %2307 = vmatprep.subr.bf16.mxu0 0
      %2308 = vmatpush1.bf16.msra.mxu0 0
      %2309 = vmatprep.subr.bf16.mxu0 0
      %2310 = vmatpush1.bf16.msra.mxu0 0
      %2311 = vmatprep.subr.bf16.mxu0 0
      %2312 = vmatpush1.bf16.msra.mxu0 0
      %2313 = vmatprep.subr.bf16.mxu0 0
      %2314 = vmatpush1.bf16.msra.mxu0 0
      %2315 = vmatprep.subr.bf16.mxu0 0
      %2316 = vmatpush1.bf16.msra.mxu0 0
      %2317 = vmatprep.subr.bf16.mxu0 0
      %2318 = vmatpush1.bf16.msra.mxu0 0
      %2319 = vmatprep.subr.bf16.mxu0 0
      %2320 = vmatpush1.bf16.msra.mxu0 0
      %2321 = vmatprep.subr.bf16.mxu0 0
      %2322 = vmatpush1.bf16.msra.mxu0 0
      %2323 = vmatprep.subr.bf16.mxu0 0
      %2324 = vmatpush1.bf16.msra.mxu0 0
      %2325 = vmatprep.subr.bf16.mxu0 0
      %2326 = vmatpush1.bf16.msra.mxu0 0
      %2327 = vmatprep.subr.bf16.mxu0 0
      %2328 = vmatpush1.bf16.msra.mxu0 0
      %2329 = vmatprep.subr.bf16.mxu0 0
      %2330 = vmatpush1.bf16.msra.mxu0 0
      %2331 = vmatprep.subr.bf16.mxu0 0
      %2332 = vmatpush1.bf16.msra.mxu0 0
      %2333 = vmatprep.mubr.bf16.mxu0 0
      %2334 = vmatmul.mubr.bf16.gmra.mrb[0].mxu0 %v2293
      %v2335 = vpop.f32.mrb[0].mxu0
      %v2336 = vadd.f32 0.0, %v2335
      %v2337 = vpop.f32.mrb[0].mxu0
      %v2338 = vpop.f32.mrb[0].mxu0
      %v2339 = vadd.f32 0.0, %v2338
      %v2340 = vpop.f32.mrb[0].mxu0
      %2341 = vmatprep.mubr.bf16.mxu0 0
      %2342 = vmatmul.mubr.bf16.gmra.mrb[0].mxu0 %v2296
      %v2343 = vpop.f32.mrb[0].mxu0
      %v2344 = vadd.f32 0.0, %v2343
      %v2345 = vpop.f32.mrb[0].mxu0
      %v2346 = vpop.f32.mrb[0].mxu0
      %v2347 = vpop.f32.mrb[0].mxu0
      %2348 = vdwg.mxu0
      %v2349 = vpack.c.bf16 %v2339, %v2336
      %v2350 = vpack.c.bf16 %v2344, %v2344
      %v2355 = vunpack.c.l.b16 %v1474
      %v2356 = vunpack.c.l.b16 %v1475
      %v2357 = vunpack.c.l.b16 %v1476
      %v2358 = vunpack.c.l.b16 %v1477
      %v2359 = vpack.c.b16 %v2356, %v2355
      %v2360 = vpack.c.b16 %v2358, %v2357
      %v2364 = vsel %vm1484, %v2349, 0
      %v2367 = vsel %vm1484, %v2350, 0
      %2369 = vmatprep.subr.bf16.mxu0 0
      %2370 = vmatpush1.bf16.msra.mxu0 %v2359
      %2371 = vmatprep.subr.bf16.mxu0 0
      %2372 = vmatpush1.bf16.msra.mxu0 %v2360
      %2373 = vmatprep.subr.bf16.mxu0 0
      %2374 = vmatpush1.bf16.msra.mxu0 0
      %2375 = vmatprep.subr.bf16.mxu0 0
      %2376 = vmatpush1.bf16.msra.mxu0 0
      %2377 = vmatprep.subr.bf16.mxu0 0
      %2378 = vmatpush1.bf16.msra.mxu0 0
      %2379 = vmatprep.subr.bf16.mxu0 0
      %2380 = vmatpush1.bf16.msra.mxu0 0
      %2381 = vmatprep.subr.bf16.mxu0 0
      %2382 = vmatpush1.bf16.msra.mxu0 0
      %2383 = vmatprep.subr.bf16.mxu0 0
      %2384 = vmatpush1.bf16.msra.mxu0 0
      %2385 = vmatprep.subr.bf16.mxu0 0
      %2386 = vmatpush1.bf16.msra.mxu0 0
      %2387 = vmatprep.subr.bf16.mxu0 0
      %2388 = vmatpush1.bf16.msra.mxu0 0
      %2389 = vmatprep.subr.bf16.mxu0 0
      %2390 = vmatpush1.bf16.msra.mxu0 0
      %2391 = vmatprep.subr.bf16.mxu0 0
      %2392 = vmatpush1.bf16.msra.mxu0 0
      %2393 = vmatprep.subr.bf16.mxu0 0
      %2394 = vmatpush1.bf16.msra.mxu0 0
      %2395 = vmatprep.subr.bf16.mxu0 0
      %2396 = vmatpush1.bf16.msra.mxu0 0
      %2397 = vmatprep.subr.bf16.mxu0 0
      %2398 = vmatpush1.bf16.msra.mxu0 0
      %2399 = vmatprep.subr.bf16.mxu0 0
      %2400 = vmatpush1.bf16.msra.mxu0 0
      %2401 = vmatprep.mubr.bf16.mxu0 0
      %2402 = vmatmul.mubr.bf16.gmra.mrb[0].mxu0 %v2364
      %v2403 = vpop.f32.mrb[0].mxu0
      %v2404 = vadd.f32 0.0, %v2403
      %v2405 = vpop.f32.mrb[0].mxu0
      %v2406 = vpop.f32.mrb[0].mxu0
      %v2407 = vadd.f32 0.0, %v2406
      %v2408 = vpop.f32.mrb[0].mxu0
      %2409 = vmatprep.mubr.bf16.mxu0 0
      %2410 = vmatmul.mubr.bf16.gmra.mrb[0].mxu0 %v2367
      %v2411 = vpop.f32.mrb[0].mxu0
      %v2412 = vadd.f32 0.0, %v2411
      %v2413 = vpop.f32.mrb[0].mxu0
      %v2414 = vpop.f32.mrb[0].mxu0
      %v2415 = vpop.f32.mrb[0].mxu0
      %2416 = vdwg.mxu0
      %v2417 = vadd.f32 %v2181, %v2404
      %v2418 = vadd.f32 %v2182, %v2407
      %v2419 = vadd.f32 %v2183, %v2412
      %v2420 = vld [vmem:[%s8] sm:$0x1]
      %v2422 = vlaneseq
      %v2423 = vshrl.u32 %v2422, 7
      %v2424 = vsub.s32 0, %v2423
      %v2425 = vrot.slane %v2420, %v2424
      %v2427 = vadd.f32 %v2417, %v2425
      %v2428 = vadd.f32 %v2418, %v2425
      %v2429 = vadd.f32 %v2419, %v2425
      %v2430 = vld [vmem:[%s9] sm:$0x1]
      %v2432 = vlaneseq
      %v2433 = vshrl.u32 %v2432, 7
      %v2434 = vsub.s32 0, %v2433
      %v2435 = vrot.slane %v2430, %v2434
      %v2437 = vmul.f32 %v2427, %v2435
      %v2438 = vmul.f32 %v2428, %v2435
      %v2439 = vmul.f32 %v2429, %v2435
      %v2440 = vadd.f32 %v1111, %v2437
      %v2441 = vadd.f32 %v1114, %v2438
      %v2442 = vadd.f32 %v1119, %v2439
      %v2443 = vld [vmem:[%s10] sm:$0x1]
      %v2444 = vld [vmem:[%s11] sm:$0x1]
      %2445 = vadd.xlane.f32.xlu0 %v2440
      %v2446 = vpop.xlane.xlu0 %2445
      %2447 = vadd.xlane.f32.xlu0 %v2441
      %v2448 = vpop.xlane.xlu0 %2447
      %v2449 = vsel %vm1130, %v2442, 0.0
      %2450 = vadd.xlane.f32.xlu0 %v2449
      %v2451 = vpop.xlane.xlu0 %2450
      %v2452 = vmul.f32 %v2446, %v1134
      %v2453 = vmul.f32 %v2448, %v1134
      %v2454 = vmul.f32 %v2451, %v1134
      %v2455 = vsub.f32 %v2440, %v2452
      %v2456 = vsub.f32 %v2441, %v2453
      %v2457 = vsub.f32 %v2442, %v2454
      %v2458 = vmul.f32 %v2455, %v2455
      %v2459 = vmul.f32 %v2456, %v2456
      %v2460 = vmul.f32 %v2457, %v2457
      %2461 = vadd.xlane.f32.xlu0 %v2458
      %v2462 = vpop.xlane.xlu0 %2461
      %2463 = vadd.xlane.f32.xlu0 %v2459
      %v2464 = vpop.xlane.xlu0 %2463
      %v2465 = vsel %vm1130, %v2460, 0.0
      %2466 = vadd.xlane.f32.xlu0 %v2465
      %v2467 = vpop.xlane.xlu0 %2466
      %v2468 = vmul.f32 %v2462, %v1134
      %v2469 = vmul.f32 %v2464, %v1134
      %v2470 = vmul.f32 %v2467, %v1134
      %v2471 = vadd.f32 %v2468, 1e-06
      %v2472 = vadd.f32 %v2469, 1e-06
      %v2473 = vadd.f32 %v2470, 1e-06
      %v2474 = vrsqrt.pop %v2471
      %v2475 = vrsqrt.pop %v2472
      %v2476 = vrsqrt.pop %v2473
      %v2477 = vmul.f32 %v2455, %v2474
      %v2478 = vmul.f32 %v2456, %v2475
      %v2479 = vmul.f32 %v2457, %v2476
      %v2481 = vlaneseq
      %v2482 = vshrl.u32 %v2481, 7
      %v2483 = vsub.s32 0, %v2482
      %v2484 = vrot.slane %v2443, %v2483
      %v2486 = vmul.f32 %v2477, %v2484
      %v2487 = vmul.f32 %v2478, %v2484
      %v2488 = vmul.f32 %v2479, %v2484
      %v2490 = vlaneseq
      %v2491 = vshrl.u32 %v2490, 7
      %v2492 = vsub.s32 0, %v2491
      %v2493 = vrot.slane %v2444, %v2492
      %v2495 = vadd.f32 %v2486, %v2493
      %v2496 = vadd.f32 %v2487, %v2493
      %v2497 = vadd.f32 %v2488, %v2493
      %v2498 = vld [vmem:[%s12] sm:$0xff]
      %v2499 = vld [vmem:[%s12 + $0x8] sm:$0xff]
      %v2500 = vld [vmem:[%s12 + $0x10] sm:$0xff]
      %v2501 = vld [vmem:[%s12 + $0x18] sm:$0xff]
      %v2502 = vld [vmem:[%s12 + $0x20] sm:$0xff]
      %v2503 = vld [vmem:[%s12 + $0x28] sm:$0xff]
      %v2504 = vld [vmem:[%s12 + $0x30] sm:$0xff]
      %v2505 = vld [vmem:[%s12 + $0x38] sm:$0xff]
      %v2506 = vld [vmem:[%s12 + $0x40] sm:$0xff]
      %v2507 = vld [vmem:[%s12 + $0x48] sm:$0xff]
      %v2508 = vld [vmem:[%s12 + $0x50] sm:$0xff]
      %v2509 = vld [vmem:[%s12 + $0x58] sm:$0xff]
      %v2510 = vld [vmem:[%s12 + $0x60] sm:$0xff]
      %v2511 = vld [vmem:[%s12 + $0x68] sm:$0xff]
      %v2512 = vld [vmem:[%s12 + $0x70] sm:$0xff]
      %v2513 = vld [vmem:[%s12 + $0x78] sm:$0xff]
      %v2514 = vld [vmem:[%s12 + $0x80] sm:$0xff]
      %v2515 = vld [vmem:[%s12 + $0x88] sm:$0xff]
      %v2516 = vld [vmem:[%s12 + $0x90] sm:$0xff]
      %v2517 = vld [vmem:[%s12 + $0x98] sm:$0xff]
      %v2518 = vld [vmem:[%s12 + $0xa0] sm:$0xff]
      %v2519 = vld [vmem:[%s12 + $0xa8] sm:$0xff]
      %v2520 = vld [vmem:[%s12 + $0xb0] sm:$0xff]
      %v2521 = vld [vmem:[%s12 + $0xb8] sm:$0xff]
      %v2522 = vld [vmem:[%s12 + $0xc0] sm:$0xff]
      %v2523 = vld [vmem:[%s12 + $0xc8] sm:$0xff]
      %v2524 = vld [vmem:[%s12 + $0xd0] sm:$0xff]
      %v2525 = vld [vmem:[%s12 + $0xd8] sm:$0xff]
      %v2526 = vld [vmem:[%s12 + $0xe0] sm:$0xff]
      %v2527 = vld [vmem:[%s12 + $0xe8] sm:$0xff]
      %v2528 = vld [vmem:[%s12 + $0xf0] sm:$0xff]
      %v2529 = vld [vmem:[%s12 + $0xf8] sm:$0xff]
      %v2530 = vpack.c.bf16 %v2496, %v2495
      %v2531 = vpack.c.bf16 %v2497, %v2497
      %v2532 = vld [vmem:[%s13] sm:$0xf]
      %v2534 = vlaneseq
      %v2535 = vshrl.u32 %v2534, 7
      %v2536 = vsub.s32 0, %v2535
      %v2537 = vrot.slane %v2532, %v2536
      %v2538 = vlaneseq
      %v2539 = vshrl.u32 %v2538, 7
      %v2540 = vsub.s32 1, %v2539
      %v2541 = vrot.slane %v2532, %v2540
      %v2542 = vlaneseq
      %v2543 = vshrl.u32 %v2542, 7
      %v2544 = vsub.s32 2, %v2543
      %v2545 = vrot.slane %v2532, %v2544
      %v2546 = vlaneseq
      %v2547 = vshrl.u32 %v2546, 7
      %v2548 = vsub.s32 3, %v2547
      %v2549 = vrot.slane %v2532, %v2548
      %v2586 = vunpack.c.l.b16 %v2498
      %v2587 = vunpack.c.h.b16 %v2498
      %v2588 = vunpack.c.l.b16 %v2499
      %v2589 = vunpack.c.h.b16 %v2499
      %v2590 = vunpack.c.l.b16 %v2500
      %v2591 = vunpack.c.h.b16 %v2500
      %v2592 = vunpack.c.l.b16 %v2501
      %v2593 = vunpack.c.h.b16 %v2501
      %v2594 = vunpack.c.l.b16 %v2502
      %v2595 = vunpack.c.h.b16 %v2502
      %v2596 = vunpack.c.l.b16 %v2503
      %v2597 = vunpack.c.h.b16 %v2503
      %v2598 = vunpack.c.l.b16 %v2504
      %v2599 = vunpack.c.h.b16 %v2504
      %v2600 = vunpack.c.l.b16 %v2505
      %v2601 = vunpack.c.h.b16 %v2505
      %v2602 = vunpack.c.l.b16 %v2506
      %v2603 = vunpack.c.h.b16 %v2506
      %v2604 = vunpack.c.l.b16 %v2507
      %v2605 = vunpack.c.h.b16 %v2507
      %v2606 = vunpack.c.l.b16 %v2508
      %v2607 = vunpack.c.h.b16 %v2508
      %v2608 = vunpack.c.l.b16 %v2509
      %v2609 = vunpack.c.h.b16 %v2509
      %v2610 = vunpack.c.l.b16 %v2510
      %v2611 = vunpack.c.h.b16 %v2510
      %v2612 = vunpack.c.l.b16 %v2511
      %v2613 = vunpack.c.h.b16 %v2511
      %v2614 = vunpack.c.l.b16 %v2512
      %v2615 = vunpack.c.h.b16 %v2512
      %v2616 = vunpack.c.l.b16 %v2513
      %v2617 = vunpack.c.h.b16 %v2513
      %v2618 = vunpack.c.l.b16 %v2514
      %v2619 = vunpack.c.h.b16 %v2514
      %v2620 = vunpack.c.l.b16 %v2515
      %v2621 = vunpack.c.h.b16 %v2515
      %v2622 = vunpack.c.l.b16 %v2516
      %v2623 = vunpack.c.h.b16 %v2516
      %v2624 = vunpack.c.l.b16 %v2517
      %v2625 = vunpack.c.h.b16 %v2517
      %v2626 = vunpack.c.l.b16 %v2518
      %v2627 = vunpack.c.h.b16 %v2518
      %v2628 = vunpack.c.l.b16 %v2519
      %v2629 = vunpack.c.h.b16 %v2519
      %v2630 = vunpack.c.l.b16 %v2520
      %v2631 = vunpack.c.h.b16 %v2520
      %v2632 = vunpack.c.l.b16 %v2521
      %v2633 = vunpack.c.h.b16 %v2521
      %v2634 = vunpack.c.l.b16 %v2522
      %v2635 = vunpack.c.h.b16 %v2522
      %v2636 = vunpack.c.l.b16 %v2523
      %v2637 = vunpack.c.h.b16 %v2523
      %v2638 = vunpack.c.l.b16 %v2524
      %v2639 = vunpack.c.h.b16 %v2524
      %v2640 = vunpack.c.l.b16 %v2525
      %v2641 = vunpack.c.h.b16 %v2525
      %v2642 = vunpack.c.l.b16 %v2526
      %v2643 = vunpack.c.h.b16 %v2526
      %v2644 = vunpack.c.l.b16 %v2527
      %v2645 = vunpack.c.h.b16 %v2527
      %v2646 = vunpack.c.l.b16 %v2528
      %v2647 = vunpack.c.h.b16 %v2528
      %v2648 = vunpack.c.l.b16 %v2529
      %v2649 = vunpack.c.h.b16 %v2529
      %v2650 = vpack.c.b16 %v2590, %v2586
      %v2651 = vpack.c.b16 %v2591, %v2587
      %v2652 = vpack.c.b16 %v2592, %v2588
      %v2653 = vpack.c.b16 %v2593, %v2589
      %v2654 = vpack.c.b16 %v2598, %v2594
      %v2655 = vpack.c.b16 %v2599, %v2595
      %v2656 = vpack.c.b16 %v2600, %v2596
      %v2657 = vpack.c.b16 %v2601, %v2597
      %v2658 = vpack.c.b16 %v2606, %v2602
      %v2659 = vpack.c.b16 %v2607, %v2603
      %v2660 = vpack.c.b16 %v2608, %v2604
      %v2661 = vpack.c.b16 %v2609, %v2605
      %v2662 = vpack.c.b16 %v2614, %v2610
      %v2663 = vpack.c.b16 %v2615, %v2611
      %v2664 = vpack.c.b16 %v2616, %v2612
      %v2665 = vpack.c.b16 %v2617, %v2613
      %v2666 = vpack.c.b16 %v2622, %v2618
      %v2667 = vpack.c.b16 %v2623, %v2619
      %v2668 = vpack.c.b16 %v2624, %v2620
      %v2669 = vpack.c.b16 %v2625, %v2621
      %v2670 = vpack.c.b16 %v2630, %v2626
      %v2671 = vpack.c.b16 %v2631, %v2627
      %v2672 = vpack.c.b16 %v2632, %v2628
      %v2673 = vpack.c.b16 %v2633, %v2629
      %v2674 = vpack.c.b16 %v2638, %v2634
      %v2675 = vpack.c.b16 %v2639, %v2635
      %v2676 = vpack.c.b16 %v2640, %v2636
      %v2677 = vpack.c.b16 %v2641, %v2637
      %v2678 = vpack.c.b16 %v2646, %v2642
      %v2679 = vpack.c.b16 %v2647, %v2643
      %v2680 = vpack.c.b16 %v2648, %v2644
      %v2681 = vpack.c.b16 %v2649, %v2645
      %2714 = vmatprep.subr.bf16.mxu0 %v2651
      %2715 = vmatpush1.bf16.msra.mxu0 %v2650
      %2716 = vmatprep.subr.bf16.mxu0 %v2655
      %2717 = vmatpush1.bf16.msra.mxu0 %v2654
      %2718 = vmatprep.subr.bf16.mxu0 %v2659
      %2719 = vmatpush1.bf16.msra.mxu0 %v2658
      %2720 = vmatprep.subr.bf16.mxu0 %v2663
      %2721 = vmatpush1.bf16.msra.mxu0 %v2662
      %2722 = vmatprep.subr.bf16.mxu0 %v2667
      %2723 = vmatpush1.bf16.msra.mxu0 %v2666
      %2724 = vmatprep.subr.bf16.mxu0 %v2671
      %2725 = vmatpush1.bf16.msra.mxu0 %v2670
      %2726 = vmatprep.subr.bf16.mxu0 %v2675
      %2727 = vmatpush1.bf16.msra.mxu0 %v2674
      %2728 = vmatprep.subr.bf16.mxu0 %v2679
      %2729 = vmatpush1.bf16.msra.mxu0 %v2678
      %2730 = vmatprep.subr.bf16.mxu0 0
      %2731 = vmatpush1.bf16.msra.mxu0 0
      %2732 = vmatprep.subr.bf16.mxu0 0
      %2733 = vmatpush1.bf16.msra.mxu0 0
      %2734 = vmatprep.subr.bf16.mxu0 0
      %2735 = vmatpush1.bf16.msra.mxu0 0
      %2736 = vmatprep.subr.bf16.mxu0 0
      %2737 = vmatpush1.bf16.msra.mxu0 0
      %2738 = vmatprep.subr.bf16.mxu0 0
      %2739 = vmatpush1.bf16.msra.mxu0 0
      %2740 = vmatprep.subr.bf16.mxu0 0
      %2741 = vmatpush1.bf16.msra.mxu0 0
      %2742 = vmatprep.subr.bf16.mxu0 0
      %2743 = vmatpush1.bf16.msra.mxu0 0
      %2744 = vmatprep.subr.bf16.mxu0 0
      %2745 = vmatpush1.bf16.msra.mxu0 0
      %2746 = vmatprep.mubr.bf16.mxu0 0
      %2747 = vmatmul.mubr.bf16.gmra.mrb[0].mxu0 %v2530
      %v2748 = vpop.f32.mrb[0].mxu0
      %v2749 = vadd.f32 %v2537, %v2748
      %v2750 = vpop.f32.mrb[0].mxu0
      %v2751 = vadd.f32 %v2541, %v2750
      %v2752 = vpop.f32.mrb[0].mxu0
      %v2753 = vadd.f32 %v2537, %v2752
      %v2754 = vpop.f32.mrb[0].mxu0
      %v2755 = vadd.f32 %v2541, %v2754
      %2756 = vmatprep.mubr.bf16.mxu0 0
      %2757 = vmatmul.mubr.bf16.gmra.mrb[0].mxu0 %v2531
      %v2758 = vpop.f32.mrb[0].mxu0
      %v2759 = vadd.f32 %v2537, %v2758
      %v2760 = vpop.f32.mrb[0].mxu0
      %v2761 = vadd.f32 %v2541, %v2760
      %v2762 = vpop.f32.mrb[0].mxu0
      %v2763 = vpop.f32.mrb[0].mxu0
      %2764 = vdwg.mxu0
      %2765 = vmatprep.subr.bf16.mxu0 %v2653
      %2766 = vmatpush1.bf16.msra.mxu0 %v2652
      %2767 = vmatprep.subr.bf16.mxu0 %v2657
      %2768 = vmatpush1.bf16.msra.mxu0 %v2656
      %2769 = vmatprep.subr.bf16.mxu0 %v2661
      %2770 = vmatpush1.bf16.msra.mxu0 %v2660
      %2771 = vmatprep.subr.bf16.mxu0 %v2665
      %2772 = vmatpush1.bf16.msra.mxu0 %v2664
      %2773 = vmatprep.subr.bf16.mxu0 %v2669
      %2774 = vmatpush1.bf16.msra.mxu0 %v2668
      %2775 = vmatprep.subr.bf16.mxu0 %v2673
      %2776 = vmatpush1.bf16.msra.mxu0 %v2672
      %2777 = vmatprep.subr.bf16.mxu0 %v2677
      %2778 = vmatpush1.bf16.msra.mxu0 %v2676
      %2779 = vmatprep.subr.bf16.mxu0 %v2681
      %2780 = vmatpush1.bf16.msra.mxu0 %v2680
      %2781 = vmatprep.subr.bf16.mxu0 0
      %2782 = vmatpush1.bf16.msra.mxu0 0
      %2783 = vmatprep.subr.bf16.mxu0 0
      %2784 = vmatpush1.bf16.msra.mxu0 0
      %2785 = vmatprep.subr.bf16.mxu0 0
      %2786 = vmatpush1.bf16.msra.mxu0 0
      %2787 = vmatprep.subr.bf16.mxu0 0
      %2788 = vmatpush1.bf16.msra.mxu0 0
      %2789 = vmatprep.subr.bf16.mxu0 0
      %2790 = vmatpush1.bf16.msra.mxu0 0
      %2791 = vmatprep.subr.bf16.mxu0 0
      %2792 = vmatpush1.bf16.msra.mxu0 0
      %2793 = vmatprep.subr.bf16.mxu0 0
      %2794 = vmatpush1.bf16.msra.mxu0 0
      %2795 = vmatprep.subr.bf16.mxu0 0
      %2796 = vmatpush1.bf16.msra.mxu0 0
      %2797 = vmatprep.mubr.bf16.mxu0 0
      %2798 = vmatmul.mubr.bf16.gmra.mrb[0].mxu0 %v2530
      %v2799 = vpop.f32.mrb[0].mxu0
      %v2800 = vadd.f32 %v2545, %v2799
      %v2801 = vpop.f32.mrb[0].mxu0
      %v2802 = vadd.f32 %v2549, %v2801
      %v2803 = vpop.f32.mrb[0].mxu0
      %v2804 = vadd.f32 %v2545, %v2803
      %v2805 = vpop.f32.mrb[0].mxu0
      %v2806 = vadd.f32 %v2549, %v2805
      %2807 = vmatprep.mubr.bf16.mxu0 0
      %2808 = vmatmul.mubr.bf16.gmra.mrb[0].mxu0 %v2531
      %v2809 = vpop.f32.mrb[0].mxu0
      %v2810 = vadd.f32 %v2545, %v2809
      %v2811 = vpop.f32.mrb[0].mxu0
      %v2812 = vadd.f32 %v2549, %v2811
      %v2813 = vpop.f32.mrb[0].mxu0
      %v2814 = vpop.f32.mrb[0].mxu0
      %2815 = vdwg.mxu0
      %v2816 = vmul.f32 %v2749, %v2749
      %v2817 = vmul.f32 %v2751, %v2751
      %v2818 = vmul.f32 %v2800, %v2800
      %v2819 = vmul.f32 %v2802, %v2802
      %v2820 = vmul.f32 %v2753, %v2753
      %v2821 = vmul.f32 %v2755, %v2755
      %v2822 = vmul.f32 %v2804, %v2804
      %v2823 = vmul.f32 %v2806, %v2806
      %v2824 = vmul.f32 %v2759, %v2759
      %v2825 = vmul.f32 %v2761, %v2761
      %v2826 = vmul.f32 %v2810, %v2810
      %v2827 = vmul.f32 %v2812, %v2812
      %v2828 = vmul.f32 %v2749, %v2816
      %v2829 = vmul.f32 %v2751, %v2817
      %v2830 = vmul.f32 %v2800, %v2818
      %v2831 = vmul.f32 %v2802, %v2819
      %v2832 = vmul.f32 %v2753, %v2820
      %v2833 = vmul.f32 %v2755, %v2821
      %v2834 = vmul.f32 %v2804, %v2822
      %v2835 = vmul.f32 %v2806, %v2823
      %v2836 = vmul.f32 %v2759, %v2824
      %v2837 = vmul.f32 %v2761, %v2825
      %v2838 = vmul.f32 %v2810, %v2826
      %v2839 = vmul.f32 %v2812, %v2827
      %v2840 = vmul.f32 %v2828, 0.044715
      %v2841 = vmul.f32 %v2829, 0.044715
      %v2842 = vmul.f32 %v2830, 0.044715
      %v2843 = vmul.f32 %v2831, 0.044715
      %v2844 = vmul.f32 %v2832, 0.044715
      %v2845 = vmul.f32 %v2833, 0.044715
      %v2846 = vmul.f32 %v2834, 0.044715
      %v2847 = vmul.f32 %v2835, 0.044715
      %v2848 = vmul.f32 %v2836, 0.044715
      %v2849 = vmul.f32 %v2837, 0.044715
      %v2850 = vmul.f32 %v2838, 0.044715
      %v2851 = vmul.f32 %v2839, 0.044715
      %v2852 = vadd.f32 %v2749, %v2840
      %v2853 = vadd.f32 %v2751, %v2841
      %v2854 = vadd.f32 %v2800, %v2842
      %v2855 = vadd.f32 %v2802, %v2843
      %v2856 = vadd.f32 %v2753, %v2844
      %v2857 = vadd.f32 %v2755, %v2845
      %v2858 = vadd.f32 %v2804, %v2846
      %v2859 = vadd.f32 %v2806, %v2847
      %v2860 = vadd.f32 %v2759, %v2848
      %v2861 = vadd.f32 %v2761, %v2849
      %v2862 = vadd.f32 %v2810, %v2850
      %v2863 = vadd.f32 %v2812, %v2851
      %v2864 = vmul.f32 %v2852, 0.7978846
      %v2865 = vmul.f32 %v2853, 0.7978846
      %v2866 = vmul.f32 %v2854, 0.7978846
      %v2867 = vmul.f32 %v2855, 0.7978846
      %v2868 = vmul.f32 %v2856, 0.7978846
      %v2869 = vmul.f32 %v2857, 0.7978846
      %v2870 = vmul.f32 %v2858, 0.7978846
      %v2871 = vmul.f32 %v2859, 0.7978846
      %v2872 = vmul.f32 %v2860, 0.7978846
      %v2873 = vmul.f32 %v2861, 0.7978846
      %v2874 = vmul.f32 %v2862, 0.7978846
      %v2875 = vmul.f32 %v2863, 0.7978846
      %v2876 = vtanh.pop %v2864
      %v2877 = vtanh.pop %v2865
      %v2878 = vtanh.pop %v2866
      %v2879 = vtanh.pop %v2867
      %v2880 = vtanh.pop %v2868
      %v2881 = vtanh.pop %v2869
      %v2882 = vtanh.pop %v2870
      %v2883 = vtanh.pop %v2871
      %v2884 = vtanh.pop %v2872
      %v2885 = vtanh.pop %v2873
      %v2886 = vtanh.pop %v2874
      %v2887 = vtanh.pop %v2875
      %v2888 = vadd.f32 %v2876, 1.0
      %v2889 = vadd.f32 %v2877, 1.0
      %v2890 = vadd.f32 %v2878, 1.0
      %v2891 = vadd.f32 %v2879, 1.0
      %v2892 = vadd.f32 %v2880, 1.0
      %v2893 = vadd.f32 %v2881, 1.0
      %v2894 = vadd.f32 %v2882, 1.0
      %v2895 = vadd.f32 %v2883, 1.0
      %v2896 = vadd.f32 %v2884, 1.0
      %v2897 = vadd.f32 %v2885, 1.0
      %v2898 = vadd.f32 %v2886, 1.0
      %v2899 = vadd.f32 %v2887, 1.0
      %v2900 = vmul.f32 %v2888, 0.5
      %v2901 = vmul.f32 %v2889, 0.5
      %v2902 = vmul.f32 %v2890, 0.5
      %v2903 = vmul.f32 %v2891, 0.5
      %v2904 = vmul.f32 %v2892, 0.5
      %v2905 = vmul.f32 %v2893, 0.5
      %v2906 = vmul.f32 %v2894, 0.5
      %v2907 = vmul.f32 %v2895, 0.5
      %v2908 = vmul.f32 %v2896, 0.5
      %v2909 = vmul.f32 %v2897, 0.5
      %v2910 = vmul.f32 %v2898, 0.5
      %v2911 = vmul.f32 %v2899, 0.5
      %v2912 = vmul.f32 %v2749, %v2900
      %v2913 = vmul.f32 %v2751, %v2901
      %v2914 = vmul.f32 %v2800, %v2902
      %v2915 = vmul.f32 %v2802, %v2903
      %v2916 = vmul.f32 %v2753, %v2904
      %v2917 = vmul.f32 %v2755, %v2905
      %v2918 = vmul.f32 %v2804, %v2906
      %v2919 = vmul.f32 %v2806, %v2907
      %v2920 = vmul.f32 %v2759, %v2908
      %v2921 = vmul.f32 %v2761, %v2909
      %v2922 = vmul.f32 %v2810, %v2910
      %v2923 = vmul.f32 %v2812, %v2911
      %v2924 = vld [vmem:[%s14] sm:$0xf]
      %v2925 = vld [vmem:[%s14 + $0x4] sm:$0xf]
      %v2926 = vld [vmem:[%s14 + $0x8] sm:$0xf]
      %v2927 = vld [vmem:[%s14 + $0xc] sm:$0xf]
      %v2928 = vld [vmem:[%s14 + $0x10] sm:$0xf]
      %v2929 = vld [vmem:[%s14 + $0x14] sm:$0xf]
      %v2930 = vld [vmem:[%s14 + $0x18] sm:$0xf]
      %v2931 = vld [vmem:[%s14 + $0x1c] sm:$0xf]
      %v2932 = vld [vmem:[%s14 + $0x20] sm:$0xf]
      %v2933 = vld [vmem:[%s14 + $0x24] sm:$0xf]
      %v2934 = vld [vmem:[%s14 + $0x28] sm:$0xf]
      %v2935 = vld [vmem:[%s14 + $0x2c] sm:$0xf]
      %v2936 = vld [vmem:[%s14 + $0x30] sm:$0xf]
      %v2937 = vld [vmem:[%s14 + $0x34] sm:$0xf]
      %v2938 = vld [vmem:[%s14 + $0x38] sm:$0xf]
      %v2939 = vld [vmem:[%s14 + $0x3c] sm:$0xf]
      %v2940 = vld [vmem:[%s14 + $0x40] sm:$0xf]
      %v2941 = vld [vmem:[%s14 + $0x44] sm:$0xf]
      %v2942 = vld [vmem:[%s14 + $0x48] sm:$0xf]
      %v2943 = vld [vmem:[%s14 + $0x4c] sm:$0xf]
      %v2944 = vld [vmem:[%s14 + $0x50] sm:$0xf]
      %v2945 = vld [vmem:[%s14 + $0x54] sm:$0xf]
      %v2946 = vld [vmem:[%s14 + $0x58] sm:$0xf]
      %v2947 = vld [vmem:[%s14 + $0x5c] sm:$0xf]
      %v2948 = vld [vmem:[%s14 + $0x60] sm:$0xf]
      %v2949 = vld [vmem:[%s14 + $0x64] sm:$0xf]
      %v2950 = vld [vmem:[%s14 + $0x68] sm:$0xf]
      %v2951 = vld [vmem:[%s14 + $0x6c] sm:$0xf]
      %v2952 = vld [vmem:[%s14 + $0x70] sm:$0xf]
      %v2953 = vld [vmem:[%s14 + $0x74] sm:$0xf]
      %v2954 = vld [vmem:[%s14 + $0x78] sm:$0xf]
      %v2955 = vld [vmem:[%s14 + $0x7c] sm:$0xf]
      %v2956 = vld [vmem:[%s14 + $0x80] sm:$0xf]
      %v2957 = vld [vmem:[%s14 + $0x84] sm:$0xf]
      %v2958 = vld [vmem:[%s14 + $0x88] sm:$0xf]
      %v2959 = vld [vmem:[%s14 + $0x8c] sm:$0xf]
      %v2960 = vld [vmem:[%s14 + $0x90] sm:$0xf]
      %v2961 = vld [vmem:[%s14 + $0x94] sm:$0xf]
      %v2962 = vld [vmem:[%s14 + $0x98] sm:$0xf]
      %v2963 = vld [vmem:[%s14 + $0x9c] sm:$0xf]
      %v2964 = vld [vmem:[%s14 + $0xa0] sm:$0xf]
      %v2965 = vld [vmem:[%s14 + $0xa4] sm:$0xf]
      %v2966 = vld [vmem:[%s14 + $0xa8] sm:$0xf]
      %v2967 = vld [vmem:[%s14 + $0xac] sm:$0xf]
      %v2968 = vld [vmem:[%s14 + $0xb0] sm:$0xf]
      %v2969 = vld [vmem:[%s14 + $0xb4] sm:$0xf]
      %v2970 = vld [vmem:[%s14 + $0xb8] sm:$0xf]
      %v2971 = vld [vmem:[%s14 + $0xbc] sm:$0xf]
      %v2972 = vld [vmem:[%s14 + $0xc0] sm:$0xf]
      %v2973 = vld [vmem:[%s14 + $0xc4] sm:$0xf]
      %v2974 = vld [vmem:[%s14 + $0xc8] sm:$0xf]
      %v2975 = vld [vmem:[%s14 + $0xcc] sm:$0xf]
      %v2976 = vld [vmem:[%s14 + $0xd0] sm:$0xf]
      %v2977 = vld [vmem:[%s14 + $0xd4] sm:$0xf]
      %v2978 = vld [vmem:[%s14 + $0xd8] sm:$0xf]
      %v2979 = vld [vmem:[%s14 + $0xdc] sm:$0xf]
      %v2980 = vld [vmem:[%s14 + $0xe0] sm:$0xf]
      %v2981 = vld [vmem:[%s14 + $0xe4] sm:$0xf]
      %v2982 = vld [vmem:[%s14 + $0xe8] sm:$0xf]
      %v2983 = vld [vmem:[%s14 + $0xec] sm:$0xf]
      %v2984 = vld [vmem:[%s14 + $0xf0] sm:$0xf]
      %v2985 = vld [vmem:[%s14 + $0xf4] sm:$0xf]
      %v2986 = vld [vmem:[%s14 + $0xf8] sm:$0xf]
      %v2987 = vld [vmem:[%s14 + $0xfc] sm:$0xf]
      %v2988 = vpack.c.bf16 %v2916, %v2912
      %v2989 = vpack.c.bf16 %v2917, %v2913
      %v2990 = vpack.c.bf16 %v2918, %v2914
      %v2991 = vpack.c.bf16 %v2919, %v2915
      %v2992 = vpack.c.bf16 %v2920, %v2920
      %v2993 = vpack.c.bf16 %v2921, %v2921
      %v2994 = vpack.c.bf16 %v2922, %v2922
      %v2995 = vpack.c.bf16 %v2923, %v2923
      %v2996 = vld [vmem:[%s15] sm:$0x1]
      %v2998 = vlaneseq
      %v2999 = vshrl.u32 %v2998, 7
      %v3000 = vsub.s32 0, %v2999
      %v3001 = vrot.slane %v2996, %v3000
      %v3067 = vunpack.c.l.b16 %v2924
      %v3068 = vunpack.c.l.b16 %v2925
      %v3069 = vunpack.c.l.b16 %v2926
      %v3070 = vunpack.c.l.b16 %v2927
      %v3071 = vunpack.c.l.b16 %v2928
      %v3072 = vunpack.c.l.b16 %v2929
      %v3073 = vunpack.c.l.b16 %v2930
      %v3074 = vunpack.c.l.b16 %v2931
      %v3075 = vunpack.c.l.b16 %v2932
      %v3076 = vunpack.c.l.b16 %v2933
      %v3077 = vunpack.c.l.b16 %v2934
      %v3078 = vunpack.c.l.b16 %v2935
      %v3079 = vunpack.c.l.b16 %v2936
      %v3080 = vunpack.c.l.b16 %v2937
      %v3081 = vunpack.c.l.b16 %v2938
      %v3082 = vunpack.c.l.b16 %v2939
      %v3083 = vunpack.c.l.b16 %v2940
      %v3084 = vunpack.c.l.b16 %v2941
      %v3085 = vunpack.c.l.b16 %v2942
      %v3086 = vunpack.c.l.b16 %v2943
      %v3087 = vunpack.c.l.b16 %v2944
      %v3088 = vunpack.c.l.b16 %v2945
      %v3089 = vunpack.c.l.b16 %v2946
      %v3090 = vunpack.c.l.b16 %v2947
      %v3091 = vunpack.c.l.b16 %v2948
      %v3092 = vunpack.c.l.b16 %v2949
      %v3093 = vunpack.c.l.b16 %v2950
      %v3094 = vunpack.c.l.b16 %v2951
      %v3095 = vunpack.c.l.b16 %v2952
      %v3096 = vunpack.c.l.b16 %v2953
      %v3097 = vunpack.c.l.b16 %v2954
      %v3098 = vunpack.c.l.b16 %v2955
      %v3099 = vunpack.c.l.b16 %v2956
      %v3100 = vunpack.c.l.b16 %v2957
      %v3101 = vunpack.c.l.b16 %v2958
      %v3102 = vunpack.c.l.b16 %v2959
      %v3103 = vunpack.c.l.b16 %v2960
      %v3104 = vunpack.c.l.b16 %v2961
      %v3105 = vunpack.c.l.b16 %v2962
      %v3106 = vunpack.c.l.b16 %v2963
      %v3107 = vunpack.c.l.b16 %v2964
      %v3108 = vunpack.c.l.b16 %v2965
      %v3109 = vunpack.c.l.b16 %v2966
      %v3110 = vunpack.c.l.b16 %v2967
      %v3111 = vunpack.c.l.b16 %v2968
      %v3112 = vunpack.c.l.b16 %v2969
      %v3113 = vunpack.c.l.b16 %v2970
      %v3114 = vunpack.c.l.b16 %v2971
      %v3115 = vunpack.c.l.b16 %v2972
      %v3116 = vunpack.c.l.b16 %v2973
      %v3117 = vunpack.c.l.b16 %v2974
      %v3118 = vunpack.c.l.b16 %v2975
      %v3119 = vunpack.c.l.b16 %v2976
      %v3120 = vunpack.c.l.b16 %v2977
      %v3121 = vunpack.c.l.b16 %v2978
      %v3122 = vunpack.c.l.b16 %v2979
      %v3123 = vunpack.c.l.b16 %v2980
      %v3124 = vunpack.c.l.b16 %v2981
      %v3125 = vunpack.c.l.b16 %v2982
      %v3126 = vunpack.c.l.b16 %v2983
      %v3127 = vunpack.c.l.b16 %v2984
      %v3128 = vunpack.c.l.b16 %v2985
      %v3129 = vunpack.c.l.b16 %v2986
      %v3130 = vunpack.c.l.b16 %v2987
      %v3131 = vpack.c.b16 %v3068, %v3067
      %v3132 = vpack.c.b16 %v3070, %v3069
      %v3133 = vpack.c.b16 %v3072, %v3071
      %v3134 = vpack.c.b16 %v3074, %v3073
      %v3135 = vpack.c.b16 %v3076, %v3075
      %v3136 = vpack.c.b16 %v3078, %v3077
      %v3137 = vpack.c.b16 %v3080, %v3079
      %v3138 = vpack.c.b16 %v3082, %v3081
      %v3139 = vpack.c.b16 %v3084, %v3083
      %v3140 = vpack.c.b16 %v3086, %v3085
      %v3141 = vpack.c.b16 %v3088, %v3087
      %v3142 = vpack.c.b16 %v3090, %v3089
      %v3143 = vpack.c.b16 %v3092, %v3091
      %v3144 = vpack.c.b16 %v3094, %v3093
      %v3145 = vpack.c.b16 %v3096, %v3095
      %v3146 = vpack.c.b16 %v3098, %v3097
      %v3147 = vpack.c.b16 %v3100, %v3099
      %v3148 = vpack.c.b16 %v3102, %v3101
      %v3149 = vpack.c.b16 %v3104, %v3103
      %v3150 = vpack.c.b16 %v3106, %v3105
      %v3151 = vpack.c.b16 %v3108, %v3107
      %v3152 = vpack.c.b16 %v3110, %v3109
      %v3153 = vpack.c.b16 %v3112, %v3111
      %v3154 = vpack.c.b16 %v3114, %v3113
      %v3155 = vpack.c.b16 %v3116, %v3115
      %v3156 = vpack.c.b16 %v3118, %v3117
      %v3157 = vpack.c.b16 %v3120, %v3119
      %v3158 = vpack.c.b16 %v3122, %v3121
      %v3159 = vpack.c.b16 %v3124, %v3123
      %v3160 = vpack.c.b16 %v3126, %v3125
      %v3161 = vpack.c.b16 %v3128, %v3127
      %v3162 = vpack.c.b16 %v3130, %v3129
      %3195 = vmatprep.subr.bf16.mxu0 0
      %3196 = vmatpush1.bf16.msra.mxu0 %v3131
      %3197 = vmatprep.subr.bf16.mxu0 0
      %3198 = vmatpush1.bf16.msra.mxu0 %v3132
      %3199 = vmatprep.subr.bf16.mxu0 0
      %3200 = vmatpush1.bf16.msra.mxu0 %v3133
      %3201 = vmatprep.subr.bf16.mxu0 0
      %3202 = vmatpush1.bf16.msra.mxu0 %v3134
      %3203 = vmatprep.subr.bf16.mxu0 0
      %3204 = vmatpush1.bf16.msra.mxu0 %v3135
      %3205 = vmatprep.subr.bf16.mxu0 0
      %3206 = vmatpush1.bf16.msra.mxu0 %v3136
      %3207 = vmatprep.subr.bf16.mxu0 0
      %3208 = vmatpush1.bf16.msra.mxu0 %v3137
      %3209 = vmatprep.subr.bf16.mxu0 0
      %3210 = vmatpush1.bf16.msra.mxu0 %v3138
      %3211 = vmatprep.subr.bf16.mxu0 0
      %3212 = vmatpush1.bf16.msra.mxu0 %v3139
      %3213 = vmatprep.subr.bf16.mxu0 0
      %3214 = vmatpush1.bf16.msra.mxu0 %v3140
      %3215 = vmatprep.subr.bf16.mxu0 0
      %3216 = vmatpush1.bf16.msra.mxu0 %v3141
      %3217 = vmatprep.subr.bf16.mxu0 0
      %3218 = vmatpush1.bf16.msra.mxu0 %v3142
      %3219 = vmatprep.subr.bf16.mxu0 0
      %3220 = vmatpush1.bf16.msra.mxu0 %v3143
      %3221 = vmatprep.subr.bf16.mxu0 0
      %3222 = vmatpush1.bf16.msra.mxu0 %v3144
      %3223 = vmatprep.subr.bf16.mxu0 0
      %3224 = vmatpush1.bf16.msra.mxu0 %v3145
      %3225 = vmatprep.subr.bf16.mxu0 0
      %3226 = vmatpush1.bf16.msra.mxu0 %v3146
      %3227 = vmatprep.mubr.bf16.mxu0 %v2989
      %3228 = vmatmul.mubr.bf16.gmra.mrb[0].mxu0 %v2988
      %v3229 = vpop.f32.mrb[0].mxu0
      %v3230 = vadd.f32 %v3001, %v3229
      %v3231 = vpop.f32.mrb[0].mxu0
      %v3232 = vpop.f32.mrb[0].mxu0
      %v3233 = vadd.f32 %v3001, %v3232
      %v3234 = vpop.f32.mrb[0].mxu0
      %3235 = vmatprep.mubr.bf16.mxu0 %v2993
      %3236 = vmatmul.mubr.bf16.gmra.mrb[0].mxu0 %v2992
      %v3237 = vpop.f32.mrb[0].mxu0
      %v3238 = vadd.f32 %v3001, %v3237
      %v3239 = vpop.f32.mrb[0].mxu0
      %v3240 = vpop.f32.mrb[0].mxu0
      %v3241 = vpop.f32.mrb[0].mxu0
      %3242 = vdwg.mxu0
      %3243 = vmatprep.subr.bf16.mxu0 0
      %3244 = vmatpush1.bf16.msra.mxu0 %v3147
      %3245 = vmatprep.subr.bf16.mxu0 0
      %3246 = vmatpush1.bf16.msra.mxu0 %v3148
      %3247 = vmatprep.subr.bf16.mxu0 0
      %3248 = vmatpush1.bf16.msra.mxu0 %v3149
      %3249 = vmatprep.subr.bf16.mxu0 0
      %3250 = vmatpush1.bf16.msra.mxu0 %v3150
      %3251 = vmatprep.subr.bf16.mxu0 0
      %3252 = vmatpush1.bf16.msra.mxu0 %v3151
      %3253 = vmatprep.subr.bf16.mxu0 0
      %3254 = vmatpush1.bf16.msra.mxu0 %v3152
      %3255 = vmatprep.subr.bf16.mxu0 0
      %3256 = vmatpush1.bf16.msra.mxu0 %v3153
      %3257 = vmatprep.subr.bf16.mxu0 0
      %3258 = vmatpush1.bf16.msra.mxu0 %v3154
      %3259 = vmatprep.subr.bf16.mxu0 0
      %3260 = vmatpush1.bf16.msra.mxu0 %v3155
      %3261 = vmatprep.subr.bf16.mxu0 0
      %3262 = vmatpush1.bf16.msra.mxu0 %v3156
      %3263 = vmatprep.subr.bf16.mxu0 0
      %3264 = vmatpush1.bf16.msra.mxu0 %v3157
      %3265 = vmatprep.subr.bf16.mxu0 0
      %3266 = vmatpush1.bf16.msra.mxu0 %v3158
      %3267 = vmatprep.subr.bf16.mxu0 0
      %3268 = vmatpush1.bf16.msra.mxu0 %v3159
      %3269 = vmatprep.subr.bf16.mxu0 0
      %3270 = vmatpush1.bf16.msra.mxu0 %v3160
      %3271 = vmatprep.subr.bf16.mxu0 0
      %3272 = vmatpush1.bf16.msra.mxu0 %v3161
      %3273 = vmatprep.subr.bf16.mxu0 0
      %3274 = vmatpush1.bf16.msra.mxu0 %v3162
      %3275 = vmatprep.mubr.bf16.mxu0 %v2991
      %3276 = vmatmul.mubr.bf16.gmra.mrb[0].mxu0 %v2990
      %v3277 = vpop.f32.mrb[0].mxu0
      %v3278 = vadd.f32 %v3230, %v3277
      %v3279 = vpop.f32.mrb[0].mxu0
      %v3280 = vpop.f32.mrb[0].mxu0
      %v3281 = vadd.f32 %v3233, %v3280
      %v3282 = vpop.f32.mrb[0].mxu0
      %3283 = vmatprep.mubr.bf16.mxu0 %v2995
      %3284 = vmatmul.mubr.bf16.gmra.mrb[0].mxu0 %v2994
      %v3285 = vpop.f32.mrb[0].mxu0
      %v3286 = vadd.f32 %v3238, %v3285
      %v3287 = vpop.f32.mrb[0].mxu0
      %v3288 = vpop.f32.mrb[0].mxu0
      %v3289 = vpop.f32.mrb[0].mxu0
      %3290 = vdwg.mxu0
      %v3291 = vld [vmem:[%s16] sm:$0x1]
      %v3293 = vlaneseq
      %v3294 = vshrl.u32 %v3293, 7
      %v3295 = vsub.s32 0, %v3294
      %v3296 = vrot.slane %v3291, %v3295
      %v3298 = vmul.f32 %v3278, %v3296
      %v3299 = vmul.f32 %v3281, %v3296
      %v3300 = vmul.f32 %v3286, %v3296
      %v3301 = vadd.f32 %v2440, %v3298
      %v3302 = vadd.f32 %v2441, %v3299
      %v3303 = vadd.f32 %v2442, %v3300
      %s3304 = scalar_lea.vmem %s3, 1
      %v3305 = vld [vmem:[%s3304] sm:$0x1]
      %s3306 = scalar_lea.vmem %s4, 1
      %v3307 = vld [vmem:[%s3306] sm:$0x1]
      %3308 = vadd.xlane.f32.xlu0 %v3301
      %v3309 = vpop.xlane.xlu0 %3308
      %3310 = vadd.xlane.f32.xlu0 %v3302
      %v3311 = vpop.xlane.xlu0 %3310
      %v3312 = vsel %vm1130, %v3303, 0.0
      %3313 = vadd.xlane.f32.xlu0 %v3312
      %v3314 = vpop.xlane.xlu0 %3313
      %v3315 = vmul.f32 %v3309, %v1134
      %v3316 = vmul.f32 %v3311, %v1134
      %v3317 = vmul.f32 %v3314, %v1134
      %v3318 = vsub.f32 %v3301, %v3315
      %v3319 = vsub.f32 %v3302, %v3316
      %v3320 = vsub.f32 %v3303, %v3317
      %v3321 = vmul.f32 %v3318, %v3318
      %v3322 = vmul.f32 %v3319, %v3319
      %v3323 = vmul.f32 %v3320, %v3320
      %3324 = vadd.xlane.f32.xlu0 %v3321
      %v3325 = vpop.xlane.xlu0 %3324
      %3326 = vadd.xlane.f32.xlu0 %v3322
      %v3327 = vpop.xlane.xlu0 %3326
      %v3328 = vsel %vm1130, %v3323, 0.0
      %3329 = vadd.xlane.f32.xlu0 %v3328
      %v3330 = vpop.xlane.xlu0 %3329
      %v3331 = vmul.f32 %v3325, %v1134
      %v3332 = vmul.f32 %v3327, %v1134
      %v3333 = vmul.f32 %v3330, %v1134
      %v3334 = vadd.f32 %v3331, 1e-06
      %v3335 = vadd.f32 %v3332, 1e-06
      %v3336 = vadd.f32 %v3333, 1e-06
      %v3337 = vrsqrt.pop %v3334
      %v3338 = vrsqrt.pop %v3335
      %v3339 = vrsqrt.pop %v3336
      %v3340 = vmul.f32 %v3318, %v3337
      %v3341 = vmul.f32 %v3319, %v3338
      %v3342 = vmul.f32 %v3320, %v3339
      %v3344 = vlaneseq
      %v3345 = vshrl.u32 %v3344, 7
      %v3346 = vsub.s32 0, %v3345
      %v3347 = vrot.slane %v3305, %v3346
      %v3349 = vmul.f32 %v3340, %v3347
      %v3350 = vmul.f32 %v3341, %v3347
      %v3351 = vmul.f32 %v3342, %v3347
      %v3353 = vlaneseq
      %v3354 = vshrl.u32 %v3353, 7
      %v3355 = vsub.s32 0, %v3354
      %v3356 = vrot.slane %v3307, %v3355
      %v3358 = vadd.f32 %v3349, %v3356
      %v3359 = vadd.f32 %v3350, %v3356
      %v3360 = vadd.f32 %v3351, %v3356
      %s3361 = scalar_lea.vmem %s5, 192
      %v3362 = vld [vmem:[%s3361] sm:$0xff]
      %v3363 = vld [vmem:[%s3361 + $0x8] sm:$0xf]
      %v3364 = vld [vmem:[%s3361 + $0xc] sm:$0xff]
      %v3365 = vld [vmem:[%s3361 + $0x14] sm:$0xf]
      %v3366 = vld [vmem:[%s3361 + $0x18] sm:$0xff]
      %v3367 = vld [vmem:[%s3361 + $0x20] sm:$0xf]
      %v3368 = vld [vmem:[%s3361 + $0x24] sm:$0xff]
      %v3369 = vld [vmem:[%s3361 + $0x2c] sm:$0xf]
      %v3370 = vld [vmem:[%s3361 + $0x30] sm:$0xff]
      %v3371 = vld [vmem:[%s3361 + $0x38] sm:$0xf]
      %v3372 = vld [vmem:[%s3361 + $0x3c] sm:$0xff]
      %v3373 = vld [vmem:[%s3361 + $0x44] sm:$0xf]
      %v3374 = vld [vmem:[%s3361 + $0x48] sm:$0xff]
      %v3375 = vld [vmem:[%s3361 + $0x50] sm:$0xf]
      %v3376 = vld [vmem:[%s3361 + $0x54] sm:$0xff]
      %v3377 = vld [vmem:[%s3361 + $0x5c] sm:$0xf]
      %v3378 = vld [vmem:[%s3361 + $0x60] sm:$0xff]
      %v3379 = vld [vmem:[%s3361 + $0x68] sm:$0xf]
      %v3380 = vld [vmem:[%s3361 + $0x6c] sm:$0xff]
      %v3381 = vld [vmem:[%s3361 + $0x74] sm:$0xf]
      %v3382 = vld [vmem:[%s3361 + $0x78] sm:$0xff]
      %v3383 = vld [vmem:[%s3361 + $0x80] sm:$0xf]
      %v3384 = vld [vmem:[%s3361 + $0x84] sm:$0xff]
      %v3385 = vld [vmem:[%s3361 + $0x8c] sm:$0xf]
      %v3386 = vld [vmem:[%s3361 + $0x90] sm:$0xff]
      %v3387 = vld [vmem:[%s3361 + $0x98] sm:$0xf]
      %v3388 = vld [vmem:[%s3361 + $0x9c] sm:$0xff]
      %v3389 = vld [vmem:[%s3361 + $0xa4] sm:$0xf]
      %v3390 = vld [vmem:[%s3361 + $0xa8] sm:$0xff]
      %v3391 = vld [vmem:[%s3361 + $0xb0] sm:$0xf]
      %v3392 = vld [vmem:[%s3361 + $0xb4] sm:$0xff]
      %v3393 = vld [vmem:[%s3361 + $0xbc] sm:$0xf]
      %v3394 = vpack.c.bf16 %v3359, %v3358
      %v3395 = vpack.c.bf16 %v3360, %v3360
      %s3396 = scalar_lea.vmem %s6, 3
      %v3397 = vld [vmem:[%s3396] sm:$0x7]
      %v3399 = vlaneseq
      %v3400 = vshrl.u32 %v3399, 7
      %v3401 = vsub.s32 0, %v3400
      %v3402 = vrot.slane %v3397, %v3401
      %v3403 = vlaneseq
      %v3404 = vshrl.u32 %v3403, 7
      %v3405 = vsub.s32 1, %v3404
      %v3406 = vrot.slane %v3397, %v3405
      %v3407 = vlaneseq
      %v3408 = vshrl.u32 %v3407, 7
      %v3409 = vsub.s32 2, %v3408
      %v3410 = vrot.slane %v3397, %v3409
      %v3446 = vunpack.c.l.b16 %v3362
      %v3447 = vunpack.c.h.b16 %v3362
      %v3448 = vunpack.c.l.b16 %v3363
      %v3449 = vunpack.c.l.b16 %v3364
      %v3450 = vunpack.c.h.b16 %v3364
      %v3451 = vunpack.c.l.b16 %v3365
      %v3452 = vunpack.c.l.b16 %v3366
      %v3453 = vunpack.c.h.b16 %v3366
      %v3454 = vunpack.c.l.b16 %v3367
      %v3455 = vunpack.c.l.b16 %v3368
      %v3456 = vunpack.c.h.b16 %v3368
      %v3457 = vunpack.c.l.b16 %v3369
      %v3458 = vunpack.c.l.b16 %v3370
      %v3459 = vunpack.c.h.b16 %v3370
      %v3460 = vunpack.c.l.b16 %v3371
      %v3461 = vunpack.c.l.b16 %v3372
      %v3462 = vunpack.c.h.b16 %v3372
      %v3463 = vunpack.c.l.b16 %v3373
      %v3464 = vunpack.c.l.b16 %v3374
      %v3465 = vunpack.c.h.b16 %v3374
      %v3466 = vunpack.c.l.b16 %v3375
      %v3467 = vunpack.c.l.b16 %v3376
      %v3468 = vunpack.c.h.b16 %v3376
      %v3469 = vunpack.c.l.b16 %v3377
      %v3470 = vunpack.c.l.b16 %v3378
      %v3471 = vunpack.c.h.b16 %v3378
      %v3472 = vunpack.c.l.b16 %v3379
      %v3473 = vunpack.c.l.b16 %v3380
      %v3474 = vunpack.c.h.b16 %v3380
      %v3475 = vunpack.c.l.b16 %v3381
      %v3476 = vunpack.c.l.b16 %v3382
      %v3477 = vunpack.c.h.b16 %v3382
      %v3478 = vunpack.c.l.b16 %v3383
      %v3479 = vunpack.c.l.b16 %v3384
      %v3480 = vunpack.c.h.b16 %v3384
      %v3481 = vunpack.c.l.b16 %v3385
      %v3482 = vunpack.c.l.b16 %v3386
      %v3483 = vunpack.c.h.b16 %v3386
      %v3484 = vunpack.c.l.b16 %v3387
      %v3485 = vunpack.c.l.b16 %v3388
      %v3486 = vunpack.c.h.b16 %v3388
      %v3487 = vunpack.c.l.b16 %v3389
      %v3488 = vunpack.c.l.b16 %v3390
      %v3489 = vunpack.c.h.b16 %v3390
      %v3490 = vunpack.c.l.b16 %v3391
      %v3491 = vunpack.c.l.b16 %v3392
      %v3492 = vunpack.c.h.b16 %v3392
      %v3493 = vunpack.c.l.b16 %v3393
      %v3494 = vpack.c.b16 %v3449, %v3446
      %v3495 = vpack.c.b16 %v3450, %v3447
      %v3496 = vpack.c.b16 %v3451, %v3448
      %v3497 = vpack.c.b16 %v3455, %v3452
      %v3498 = vpack.c.b16 %v3456, %v3453
      %v3499 = vpack.c.b16 %v3457, %v3454
      %v3500 = vpack.c.b16 %v3461, %v3458
      %v3501 = vpack.c.b16 %v3462, %v3459
      %v3502 = vpack.c.b16 %v3463, %v3460
      %v3503 = vpack.c.b16 %v3467, %v3464
      %v3504 = vpack.c.b16 %v3468, %v3465
      %v3505 = vpack.c.b16 %v3469, %v3466
      %v3506 = vpack.c.b16 %v3473, %v3470
      %v3507 = vpack.c.b16 %v3474, %v3471
      %v3508 = vpack.c.b16 %v3475, %v3472
      %v3509 = vpack.c.b16 %v3479, %v3476
      %v3510 = vpack.c.b16 %v3480, %v3477
      %v3511 = vpack.c.b16 %v3481, %v3478
      %v3512 = vpack.c.b16 %v3485, %v3482
      %v3513 = vpack.c.b16 %v3486, %v3483
      %v3514 = vpack.c.b16 %v3487, %v3484
      %v3515 = vpack.c.b16 %v3491, %v3488
      %v3516 = vpack.c.b16 %v3492, %v3489
      %v3517 = vpack.c.b16 %v3493, %v3490
      %3542 = vmatprep.subr.bf16.mxu0 %v3495
      %3543 = vmatpush1.bf16.msra.mxu0 %v3494
      %3544 = vmatprep.subr.bf16.mxu0 %v3498
      %3545 = vmatpush1.bf16.msra.mxu0 %v3497
      %3546 = vmatprep.subr.bf16.mxu0 %v3501
      %3547 = vmatpush1.bf16.msra.mxu0 %v3500
      %3548 = vmatprep.subr.bf16.mxu0 %v3504
      %3549 = vmatpush1.bf16.msra.mxu0 %v3503
      %3550 = vmatprep.subr.bf16.mxu0 %v3507
      %3551 = vmatpush1.bf16.msra.mxu0 %v3506
      %3552 = vmatprep.subr.bf16.mxu0 %v3510
      %3553 = vmatpush1.bf16.msra.mxu0 %v3509
      %3554 = vmatprep.subr.bf16.mxu0 %v3513
      %3555 = vmatpush1.bf16.msra.mxu0 %v3512
      %3556 = vmatprep.subr.bf16.mxu0 %v3516
      %3557 = vmatpush1.bf16.msra.mxu0 %v3515
      %3558 = vmatprep.subr.bf16.mxu0 0
      %3559 = vmatpush1.bf16.msra.mxu0 0
      %3560 = vmatprep.subr.bf16.mxu0 0
      %3561 = vmatpush1.bf16.msra.mxu0 0
      %3562 = vmatprep.subr.bf16.mxu0 0
      %3563 = vmatpush1.bf16.msra.mxu0 0
      %3564 = vmatprep.subr.bf16.mxu0 0
      %3565 = vmatpush1.bf16.msra.mxu0 0
      %3566 = vmatprep.subr.bf16.mxu0 0
      %3567 = vmatpush1.bf16.msra.mxu0 0
      %3568 = vmatprep.subr.bf16.mxu0 0
      %3569 = vmatpush1.bf16.msra.mxu0 0
      %3570 = vmatprep.subr.bf16.mxu0 0
      %3571 = vmatpush1.bf16.msra.mxu0 0
      %3572 = vmatprep.subr.bf16.mxu0 0
      %3573 = vmatpush1.bf16.msra.mxu0 0
      %3574 = vmatprep.mubr.bf16.mxu0 0
      %3575 = vmatmul.mubr.bf16.gmra.mrb[0].mxu0 %v3394
      %v3576 = vpop.f32.mrb[0].mxu0
      %v3577 = vadd.f32 %v3402, %v3576
      %v3578 = vpop.f32.mrb[0].mxu0
      %v3579 = vadd.f32 %v3406, %v3578
      %v3580 = vpop.f32.mrb[0].mxu0
      %v3581 = vadd.f32 %v3402, %v3580
      %v3582 = vpop.f32.mrb[0].mxu0
      %v3583 = vadd.f32 %v3406, %v3582
      %3584 = vmatprep.mubr.bf16.mxu0 0
      %3585 = vmatmul.mubr.bf16.gmra.mrb[0].mxu0 %v3395
      %v3586 = vpop.f32.mrb[0].mxu0
      %v3587 = vadd.f32 %v3402, %v3586
      %v3588 = vpop.f32.mrb[0].mxu0
      %v3589 = vadd.f32 %v3406, %v3588
      %v3590 = vpop.f32.mrb[0].mxu0
      %v3591 = vpop.f32.mrb[0].mxu0
      %3592 = vdwg.mxu0
      %3593 = vmatprep.subr.bf16.mxu0 0
      %3594 = vmatpush1.bf16.msra.mxu0 %v3496
      %3595 = vmatprep.subr.bf16.mxu0 0
      %3596 = vmatpush1.bf16.msra.mxu0 %v3499
      %3597 = vmatprep.subr.bf16.mxu0 0
      %3598 = vmatpush1.bf16.msra.mxu0 %v3502
      %3599 = vmatprep.subr.bf16.mxu0 0
      %3600 = vmatpush1.bf16.msra.mxu0 %v3505
      %3601 = vmatprep.subr.bf16.mxu0 0
      %3602 = vmatpush1.bf16.msra.mxu0 %v3508
      %3603 = vmatprep.subr.bf16.mxu0 0
      %3604 = vmatpush1.bf16.msra.mxu0 %v3511
      %3605 = vmatprep.subr.bf16.mxu0 0
      %3606 = vmatpush1.bf16.msra.mxu0 %v3514
      %3607 = vmatprep.subr.bf16.mxu0 0
      %3608 = vmatpush1.bf16.msra.mxu0 %v3517
      %3609 = vmatprep.subr.bf16.mxu0 0
      %3610 = vmatpush1.bf16.msra.mxu0 0
      %3611 = vmatprep.subr.bf16.mxu0 0
      %3612 = vmatpush1.bf16.msra.mxu0 0
      %3613 = vmatprep.subr.bf16.mxu0 0
      %3614 = vmatpush1.bf16.msra.mxu0 0
      %3615 = vmatprep.subr.bf16.mxu0 0
      %3616 = vmatpush1.bf16.msra.mxu0 0
      %3617 = vmatprep.subr.bf16.mxu0 0
      %3618 = vmatpush1.bf16.msra.mxu0 0
      %3619 = vmatprep.subr.bf16.mxu0 0
      %3620 = vmatpush1.bf16.msra.mxu0 0
      %3621 = vmatprep.subr.bf16.mxu0 0
      %3622 = vmatpush1.bf16.msra.mxu0 0
      %3623 = vmatprep.subr.bf16.mxu0 0
      %3624 = vmatpush1.bf16.msra.mxu0 0
      %3625 = vmatprep.mubr.bf16.mxu0 0
      %3626 = vmatmul.mubr.bf16.gmra.mrb[0].mxu0 %v3394
      %v3627 = vpop.f32.mrb[0].mxu0
      %v3628 = vadd.f32 %v3410, %v3627
      %v3629 = vpop.f32.mrb[0].mxu0
      %v3630 = vpop.f32.mrb[0].mxu0
      %v3631 = vadd.f32 %v3410, %v3630
      %v3632 = vpop.f32.mrb[0].mxu0
      %3633 = vmatprep.mubr.bf16.mxu0 0
      %3634 = vmatmul.mubr.bf16.gmra.mrb[0].mxu0 %v3395
      %v3635 = vpop.f32.mrb[0].mxu0
      %v3636 = vadd.f32 %v3410, %v3635
      %v3637 = vpop.f32.mrb[0].mxu0
      %v3638 = vpop.f32.mrb[0].mxu0
      %v3639 = vpop.f32.mrb[0].mxu0
      %3640 = vdwg.mxu0
      %v3641 = vmul.f32 %v3577, 0.17677669
      %v3642 = vmul.f32 %v3581, 0.17677669
      %v3643 = vmul.f32 %v3587, 0.17677669
      %s3644 = scalar_lea.vmem %s7, 64
      %v3645 = vld [vmem:[%s3644] sm:$0xf]
      %v3646 = vld [vmem:[%s3644 + $0x4] sm:$0xf]
      %v3647 = vld [vmem:[%s3644 + $0x8] sm:$0xf]
      %v3648 = vld [vmem:[%s3644 + $0xc] sm:$0xf]
      %v3649 = vld [vmem:[%s3644 + $0x10] sm:$0xf]
      %v3650 = vld [vmem:[%s3644 + $0x14] sm:$0xf]
      %v3651 = vld [vmem:[%s3644 + $0x18] sm:$0xf]
      %v3652 = vld [vmem:[%s3644 + $0x1c] sm:$0xf]
      %v3653 = vld [vmem:[%s3644 + $0x20] sm:$0xf]
      %v3654 = vld [vmem:[%s3644 + $0x24] sm:$0xf]
      %v3655 = vld [vmem:[%s3644 + $0x28] sm:$0xf]
      %v3656 = vld [vmem:[%s3644 + $0x2c] sm:$0xf]
      %v3657 = vld [vmem:[%s3644 + $0x30] sm:$0xf]
      %v3658 = vld [vmem:[%s3644 + $0x34] sm:$0xf]
      %v3659 = vld [vmem:[%s3644 + $0x38] sm:$0xf]
      %v3660 = vld [vmem:[%s3644 + $0x3c] sm:$0xf]
      %v3661 = vpack.c.bf16 %v3642, %v3641
      %v3662 = vpack.c.bf16 %v3643, %v3643
      %v3663 = vpack.c.bf16 %v3583, %v3579
      %v3664 = vpack.c.bf16 %v3589, %v3589
      %v3665 = vpack.c.bf16 %v3631, %v3628
      %v3666 = vpack.c.bf16 %v3636, %v3636
      %v3668 = vsel %vm1484, %v3661, 0
      %v3671 = vsel %vm1484, %v3662, 0
      %v3674 = vsel %vm1484, %v3663, 0
      %v3677 = vsel %vm1484, %v3664, 0
      %3679 = vmatprep.subr.bf16.mxu0 0
      %3680 = vmatpush1.bf16.xpose.msra.mxu0 %v3674
      %3681 = vmatprep.subr.bf16.mxu0 0
      %3682 = vmatpush1.bf16.xpose.msra.mxu0 %v3677
      %3683 = vmatprep.subr.bf16.mxu0 0
      %3684 = vmatpush1.bf16.xpose.msra.mxu0 0
      %3685 = vmatprep.subr.bf16.mxu0 0
      %3686 = vmatpush1.bf16.xpose.msra.mxu0 0
      %3687 = vmatprep.subr.bf16.mxu0 0
      %3688 = vmatpush1.bf16.xpose.msra.mxu0 0
      %3689 = vmatprep.subr.bf16.mxu0 0
      %3690 = vmatpush1.bf16.xpose.msra.mxu0 0
      %3691 = vmatprep.subr.bf16.mxu0 0
      %3692 = vmatpush1.bf16.xpose.msra.mxu0 0
      %3693 = vmatprep.subr.bf16.mxu0 0
      %3694 = vmatpush1.bf16.xpose.msra.mxu0 0
      %3695 = vmatprep.subr.bf16.mxu0 0
      %3696 = vmatpush1.bf16.xpose.msra.mxu0 0
      %3697 = vmatprep.subr.bf16.mxu0 0
      %3698 = vmatpush1.bf16.xpose.msra.mxu0 0
      %3699 = vmatprep.subr.bf16.mxu0 0
      %3700 = vmatpush1.bf16.xpose.msra.mxu0 0
      %3701 = vmatprep.subr.bf16.mxu0 0
      %3702 = vmatpush1.bf16.xpose.msra.mxu0 0
      %3703 = vmatprep.subr.bf16.mxu0 0
      %3704 = vmatpush1.bf16.xpose.msra.mxu0 0
      %3705 = vmatprep.subr.bf16.mxu0 0
      %3706 = vmatpush1.bf16.xpose.msra.mxu0 0
      %3707 = vmatprep.subr.bf16.mxu0 0
      %3708 = vmatpush1.bf16.xpose.msra.mxu0 0
      %3709 = vmatprep.subr.bf16.mxu0 0
      %3710 = vmatpush1.bf16.xpose.msra.mxu0 0
      %3711 = vmatprep.mubr.bf16.mxu0 0
      %3712 = vmatmul.mubr.bf16.gmra.mrb[0].mxu0 %v3668
      %v3713 = vpop.f32.mrb[0].mxu0
      %v3714 = vadd.f32 0.0, %v3713
      %v3715 = vpop.f32.mrb[0].mxu0
      %v3716 = vpop.f32.mrb[0].mxu0
      %v3717 = vadd.f32 0.0, %v3716
      %v3718 = vpop.f32.mrb[0].mxu0
      %3719 = vmatprep.mubr.bf16.mxu0 0
      %3720 = vmatmul.mubr.bf16.gmra.mrb[0].mxu0 %v3671
      %v3721 = vpop.f32.mrb[0].mxu0
      %v3722 = vadd.f32 0.0, %v3721
      %v3723 = vpop.f32.mrb[0].mxu0
      %v3724 = vpop.f32.mrb[0].mxu0
      %v3725 = vpop.f32.mrb[0].mxu0
      %3726 = vdwg.mxu0
      %v3727 = vsel %vm1545, %v3714, -inf
      %3728 = vmax.xlane.f32.xlu0 %v3727
      %v3729 = vpop.xlane.xlu0 %3728
      %v3730 = vsel %vm1545, %v3717, -inf
      %3731 = vmax.xlane.f32.xlu0 %v3730
      %v3732 = vpop.xlane.xlu0 %3731
      %v3733 = vsel %vm1552, %v3722, -inf
      %3734 = vmax.xlane.f32.xlu0 %v3733
      %v3735 = vpop.xlane.xlu0 %3734
      %v3736 = vsub.f32 %v3714, %v3729
      %v3737 = vsub.f32 %v3717, %v3732
      %v3738 = vsub.f32 %v3722, %v3735
      %v3739 = vmul.f32 %v3736, 1.442695
      %v3740 = vpow.pop %v3739
      %v3741 = vmul.f32 %v3737, 1.442695
      %v3742 = vpow.pop %v3741
      %v3743 = vmul.f32 %v3738, 1.442695
      %v3744 = vpow.pop %v3743
      %v3745 = vsel %vm1545, %v3740, 0.0
      %3746 = vadd.xlane.f32.xlu0 %v3745
      %v3747 = vpop.xlane.xlu0 %3746
      %v3748 = vsel %vm1545, %v3742, 0.0
      %3749 = vadd.xlane.f32.xlu0 %v3748
      %v3750 = vpop.xlane.xlu0 %3749
      %v3751 = vsel %vm1552, %v3744, 0.0
      %3752 = vadd.xlane.f32.xlu0 %v3751
      %v3753 = vpop.xlane.xlu0 %3752
      %v3754 = vrcp.pop %v3747
      %v3755 = vmul.f32 %v3740, %v3754
      %v3756 = vrcp.pop %v3750
      %v3757 = vmul.f32 %v3742, %v3756
      %v3758 = vrcp.pop %v3753
      %v3759 = vmul.f32 %v3744, %v3758
      %v3760 = vpack.c.bf16 %v3757, %v3755
      %v3761 = vpack.c.bf16 %v3759, %v3759
      %v3763 = vsel %vm1545, %v3760, 0
      %v3766 = vsel %vm1545, %v3761, 0
      %v3769 = vand.u32 %v3666, %v1589
      %3771 = vmatprep.subr.bf16.mxu0 0
      %3772 = vmatpush1.bf16.msra.mxu0 %v3665
      %3773 = vmatprep.subr.bf16.mxu0 0
      %3774 = vmatpush1.bf16.msra.mxu0 %v3769
      %3775 = vmatprep.subr.bf16.mxu0 0
      %3776 = vmatpush1.bf16.msra.mxu0 0
      %3777 = vmatprep.subr.bf16.mxu0 0
      %3778 = vmatpush1.bf16.msra.mxu0 0
      %3779 = vmatprep.subr.bf16.mxu0 0
      %3780 = vmatpush1.bf16.msra.mxu0 0
      %3781 = vmatprep.subr.bf16.mxu0 0
      %3782 = vmatpush1.bf16.msra.mxu0 0
      %3783 = vmatprep.subr.bf16.mxu0 0
      %3784 = vmatpush1.bf16.msra.mxu0 0
      %3785 = vmatprep.subr.bf16.mxu0 0
      %3786 = vmatpush1.bf16.msra.mxu0 0
      %3787 = vmatprep.subr.bf16.mxu0 0
      %3788 = vmatpush1.bf16.msra.mxu0 0
      %3789 = vmatprep.subr.bf16.mxu0 0
      %3790 = vmatpush1.bf16.msra.mxu0 0
      %3791 = vmatprep.subr.bf16.mxu0 0
      %3792 = vmatpush1.bf16.msra.mxu0 0
      %3793 = vmatprep.subr.bf16.mxu0 0
      %3794 = vmatpush1.bf16.msra.mxu0 0
      %3795 = vmatprep.subr.bf16.mxu0 0
      %3796 = vmatpush1.bf16.msra.mxu0 0
      %3797 = vmatprep.subr.bf16.mxu0 0
      %3798 = vmatpush1.bf16.msra.mxu0 0
      %3799 = vmatprep.subr.bf16.mxu0 0
      %3800 = vmatpush1.bf16.msra.mxu0 0
      %3801 = vmatprep.subr.bf16.mxu0 0
      %3802 = vmatpush1.bf16.msra.mxu0 0
      %3803 = vmatprep.mubr.bf16.mxu0 0
      %3804 = vmatmul.mubr.bf16.gmra.mrb[0].mxu0 %v3763
      %v3805 = vpop.f32.mrb[0].mxu0
      %v3806 = vadd.f32 0.0, %v3805
      %v3807 = vpop.f32.mrb[0].mxu0
      %v3808 = vpop.f32.mrb[0].mxu0
      %v3809 = vadd.f32 0.0, %v3808
      %v3810 = vpop.f32.mrb[0].mxu0
      %3811 = vmatprep.mubr.bf16.mxu0 0
      %3812 = vmatmul.mubr.bf16.gmra.mrb[0].mxu0 %v3766
      %v3813 = vpop.f32.mrb[0].mxu0
      %v3814 = vadd.f32 0.0, %v3813
      %v3815 = vpop.f32.mrb[0].mxu0
      %v3816 = vpop.f32.mrb[0].mxu0
      %v3817 = vpop.f32.mrb[0].mxu0
      %3818 = vdwg.mxu0
      %v3819 = vpack.c.bf16 %v3809, %v3806
      %v3820 = vpack.c.bf16 %v3814, %v3814
      %3823 = vrot.lane.b32.xlu0 %v3661, 96
      %v3824 = vpop.permute.xlu0 %3823
      %3825 = vrot.lane.b32.xlu0 %v3662, 96
      %v3826 = vpop.permute.xlu0 %3825
      %3829 = vrot.lane.b32.xlu0 %v3663, 96
      %v3830 = vpop.permute.xlu0 %3829
      %3831 = vrot.lane.b32.xlu0 %v3664, 96
      %v3832 = vpop.permute.xlu0 %3831
      %v3834 = vsel %vm1484, %v3824, 0
      %v3837 = vsel %vm1484, %v3826, 0
      %v3840 = vsel %vm1484, %v3830, 0
      %v3843 = vsel %vm1484, %v3832, 0
      %3845 = vmatprep.subr.bf16.mxu0 0
      %3846 = vmatpush1.bf16.xpose.msra.mxu0 %v3840
      %3847 = vmatprep.subr.bf16.mxu0 0
      %3848 = vmatpush1.bf16.xpose.msra.mxu0 %v3843
      %3849 = vmatprep.subr.bf16.mxu0 0
      %3850 = vmatpush1.bf16.xpose.msra.mxu0 0
      %3851 = vmatprep.subr.bf16.mxu0 0
      %3852 = vmatpush1.bf16.xpose.msra.mxu0 0
      %3853 = vmatprep.subr.bf16.mxu0 0
      %3854 = vmatpush1.bf16.xpose.msra.mxu0 0
      %3855 = vmatprep.subr.bf16.mxu0 0
      %3856 = vmatpush1.bf16.xpose.msra.mxu0 0
      %3857 = vmatprep.subr.bf16.mxu0 0
      %3858 = vmatpush1.bf16.xpose.msra.mxu0 0
      %3859 = vmatprep.subr.bf16.mxu0 0
      %3860 = vmatpush1.bf16.xpose.msra.mxu0 0
      %3861 = vmatprep.subr.bf16.mxu0 0
      %3862 = vmatpush1.bf16.xpose.msra.mxu0 0
      %3863 = vmatprep.subr.bf16.mxu0 0
      %3864 = vmatpush1.bf16.xpose.msra.mxu0 0
      %3865 = vmatprep.subr.bf16.mxu0 0
      %3866 = vmatpush1.bf16.xpose.msra.mxu0 0
      %3867 = vmatprep.subr.bf16.mxu0 0
      %3868 = vmatpush1.bf16.xpose.msra.mxu0 0
      %3869 = vmatprep.subr.bf16.mxu0 0
      %3870 = vmatpush1.bf16.xpose.msra.mxu0 0
      %3871 = vmatprep.subr.bf16.mxu0 0
      %3872 = vmatpush1.bf16.xpose.msra.mxu0 0
      %3873 = vmatprep.subr.bf16.mxu0 0
      %3874 = vmatpush1.bf16.xpose.msra.mxu0 0
      %3875 = vmatprep.subr.bf16.mxu0 0
      %3876 = vmatpush1.bf16.xpose.msra.mxu0 0
      %3877 = vmatprep.mubr.bf16.mxu0 0
      %3878 = vmatmul.mubr.bf16.gmra.mrb[0].mxu0 %v3834
      %v3879 = vpop.f32.mrb[0].mxu0
      %v3880 = vadd.f32 0.0, %v3879
      %v3881 = vpop.f32.mrb[0].mxu0
      %v3882 = vpop.f32.mrb[0].mxu0
      %v3883 = vadd.f32 0.0, %v3882
      %v3884 = vpop.f32.mrb[0].mxu0
      %3885 = vmatprep.mubr.bf16.mxu0 0
      %3886 = vmatmul.mubr.bf16.gmra.mrb[0].mxu0 %v3837
      %v3887 = vpop.f32.mrb[0].mxu0
      %v3888 = vadd.f32 0.0, %v3887
      %v3889 = vpop.f32.mrb[0].mxu0
      %v3890 = vpop.f32.mrb[0].mxu0
      %v3891 = vpop.f32.mrb[0].mxu0
      %3892 = vdwg.mxu0
      %v3893 = vsel %vm1545, %v3880, -inf
      %3894 = vmax.xlane.f32.xlu0 %v3893
      %v3895 = vpop.xlane.xlu0 %3894
      %v3896 = vsel %vm1545, %v3883, -inf
      %3897 = vmax.xlane.f32.xlu0 %v3896
      %v3898 = vpop.xlane.xlu0 %3897
      %v3899 = vsel %vm1552, %v3888, -inf
      %3900 = vmax.xlane.f32.xlu0 %v3899
      %v3901 = vpop.xlane.xlu0 %3900
      %v3902 = vsub.f32 %v3880, %v3895
      %v3903 = vsub.f32 %v3883, %v3898
      %v3904 = vsub.f32 %v3888, %v3901
      %v3905 = vmul.f32 %v3902, 1.442695
      %v3906 = vpow.pop %v3905
      %v3907 = vmul.f32 %v3903, 1.442695
      %v3908 = vpow.pop %v3907
      %v3909 = vmul.f32 %v3904, 1.442695
      %v3910 = vpow.pop %v3909
      %v3911 = vsel %vm1545, %v3906, 0.0
      %3912 = vadd.xlane.f32.xlu0 %v3911
      %v3913 = vpop.xlane.xlu0 %3912
      %v3914 = vsel %vm1545, %v3908, 0.0
      %3915 = vadd.xlane.f32.xlu0 %v3914
      %v3916 = vpop.xlane.xlu0 %3915
      %v3917 = vsel %vm1552, %v3910, 0.0
      %3918 = vadd.xlane.f32.xlu0 %v3917
      %v3919 = vpop.xlane.xlu0 %3918
      %v3920 = vrcp.pop %v3913
      %v3921 = vmul.f32 %v3906, %v3920
      %v3922 = vrcp.pop %v3916
      %v3923 = vmul.f32 %v3908, %v3922
      %v3924 = vrcp.pop %v3919
      %v3925 = vmul.f32 %v3910, %v3924
      %v3926 = vpack.c.bf16 %v3923, %v3921
      %v3927 = vpack.c.bf16 %v3925, %v3925
      %3930 = vrot.lane.b32.xlu0 %v3665, 96
      %v3931 = vpop.permute.xlu0 %3930
      %3932 = vrot.lane.b32.xlu0 %v3666, 96
      %v3933 = vpop.permute.xlu0 %3932
      %v3936 = vsel %vm1545, %v3926, 0
      %v3939 = vsel %vm1545, %v3927, 0
      %v3942 = vand.u32 %v3933, %v1589
      %3944 = vmatprep.subr.bf16.mxu0 0
      %3945 = vmatpush1.bf16.msra.mxu0 %v3931
      %3946 = vmatprep.subr.bf16.mxu0 0
      %3947 = vmatpush1.bf16.msra.mxu0 %v3942
      %3948 = vmatprep.subr.bf16.mxu0 0
      %3949 = vmatpush1.bf16.msra.mxu0 0
      %3950 = vmatprep.subr.bf16.mxu0 0
      %3951 = vmatpush1.bf16.msra.mxu0 0
      %3952 = vmatprep.subr.bf16.mxu0 0
      %3953 = vmatpush1.bf16.msra.mxu0 0
      %3954 = vmatprep.subr.bf16.mxu0 0
      %3955 = vmatpush1.bf16.msra.mxu0 0
      %3956 = vmatprep.subr.bf16.mxu0 0
      %3957 = vmatpush1.bf16.msra.mxu0 0
      %3958 = vmatprep.subr.bf16.mxu0 0
      %3959 = vmatpush1.bf16.msra.mxu0 0
      %3960 = vmatprep.subr.bf16.mxu0 0
      %3961 = vmatpush1.bf16.msra.mxu0 0
      %3962 = vmatprep.subr.bf16.mxu0 0
      %3963 = vmatpush1.bf16.msra.mxu0 0
      %3964 = vmatprep.subr.bf16.mxu0 0
      %3965 = vmatpush1.bf16.msra.mxu0 0
      %3966 = vmatprep.subr.bf16.mxu0 0
      %3967 = vmatpush1.bf16.msra.mxu0 0
      %3968 = vmatprep.subr.bf16.mxu0 0
      %3969 = vmatpush1.bf16.msra.mxu0 0
      %3970 = vmatprep.subr.bf16.mxu0 0
      %3971 = vmatpush1.bf16.msra.mxu0 0
      %3972 = vmatprep.subr.bf16.mxu0 0
      %3973 = vmatpush1.bf16.msra.mxu0 0
      %3974 = vmatprep.subr.bf16.mxu0 0
      %3975 = vmatpush1.bf16.msra.mxu0 0
      %3976 = vmatprep.mubr.bf16.mxu0 0
      %3977 = vmatmul.mubr.bf16.gmra.mrb[0].mxu0 %v3936
      %v3978 = vpop.f32.mrb[0].mxu0
      %v3979 = vadd.f32 0.0, %v3978
      %v3980 = vpop.f32.mrb[0].mxu0
      %v3981 = vpop.f32.mrb[0].mxu0
      %v3982 = vadd.f32 0.0, %v3981
      %v3983 = vpop.f32.mrb[0].mxu0
      %3984 = vmatprep.mubr.bf16.mxu0 0
      %3985 = vmatmul.mubr.bf16.gmra.mrb[0].mxu0 %v3939
      %v3986 = vpop.f32.mrb[0].mxu0
      %v3987 = vadd.f32 0.0, %v3986
      %v3988 = vpop.f32.mrb[0].mxu0
      %v3989 = vpop.f32.mrb[0].mxu0
      %v3990 = vpop.f32.mrb[0].mxu0
      %3991 = vdwg.mxu0
      %v3992 = vpack.c.bf16 %v3982, %v3979
      %v3993 = vpack.c.bf16 %v3987, %v3987
      %v3998 = vunpack.c.l.b16 %v3649
      %v3999 = vunpack.c.l.b16 %v3650
      %v4000 = vunpack.c.l.b16 %v3651
      %v4001 = vunpack.c.l.b16 %v3652
      %v4002 = vpack.c.b16 %v3999, %v3998
      %v4003 = vpack.c.b16 %v4001, %v4000
      %v4007 = vsel %vm1484, %v3992, 0
      %v4010 = vsel %vm1484, %v3993, 0
      %4012 = vmatprep.subr.bf16.mxu0 0
      %4013 = vmatpush1.bf16.msra.mxu0 %v4002
      %4014 = vmatprep.subr.bf16.mxu0 0
      %4015 = vmatpush1.bf16.msra.mxu0 %v4003
      %4016 = vmatprep.subr.bf16.mxu0 0
      %4017 = vmatpush1.bf16.msra.mxu0 0
      %4018 = vmatprep.subr.bf16.mxu0 0
      %4019 = vmatpush1.bf16.msra.mxu0 0
      %4020 = vmatprep.subr.bf16.mxu0 0
      %4021 = vmatpush1.bf16.msra.mxu0 0
      %4022 = vmatprep.subr.bf16.mxu0 0
      %4023 = vmatpush1.bf16.msra.mxu0 0
      %4024 = vmatprep.subr.bf16.mxu0 0
      %4025 = vmatpush1.bf16.msra.mxu0 0
      %4026 = vmatprep.subr.bf16.mxu0 0
      %4027 = vmatpush1.bf16.msra.mxu0 0
      %4028 = vmatprep.subr.bf16.mxu0 0
      %4029 = vmatpush1.bf16.msra.mxu0 0
      %4030 = vmatprep.subr.bf16.mxu0 0
      %4031 = vmatpush1.bf16.msra.mxu0 0
      %4032 = vmatprep.subr.bf16.mxu0 0
      %4033 = vmatpush1.bf16.msra.mxu0 0
      %4034 = vmatprep.subr.bf16.mxu0 0
      %4035 = vmatpush1.bf16.msra.mxu0 0
      %4036 = vmatprep.subr.bf16.mxu0 0
      %4037 = vmatpush1.bf16.msra.mxu0 0
      %4038 = vmatprep.subr.bf16.mxu0 0
      %4039 = vmatpush1.bf16.msra.mxu0 0
      %4040 = vmatprep.subr.bf16.mxu0 0
      %4041 = vmatpush1.bf16.msra.mxu0 0
      %4042 = vmatprep.subr.bf16.mxu0 0
      %4043 = vmatpush1.bf16.msra.mxu0 0
      %4044 = vmatprep.mubr.bf16.mxu0 0
      %4045 = vmatmul.mubr.bf16.gmra.mrb[0].mxu0 %v4007
      %v4046 = vpop.f32.mrb[0].mxu0
      %v4047 = vadd.f32 0.0, %v4046
      %v4048 = vpop.f32.mrb[0].mxu0
      %v4049 = vpop.f32.mrb[0].mxu0
      %v4050 = vadd.f32 0.0, %v4049
      %v4051 = vpop.f32.mrb[0].mxu0
      %4052 = vmatprep.mubr.bf16.mxu0 0
      %4053 = vmatmul.mubr.bf16.gmra.mrb[0].mxu0 %v4010
      %v4054 = vpop.f32.mrb[0].mxu0
      %v4055 = vadd.f32 0.0, %v4054
      %v4056 = vpop.f32.mrb[0].mxu0
      %v4057 = vpop.f32.mrb[0].mxu0
      %v4058 = vpop.f32.mrb[0].mxu0
      %4059 = vdwg.mxu0
      %v4064 = vunpack.c.l.b16 %v3645
      %v4065 = vunpack.c.l.b16 %v3646
      %v4066 = vunpack.c.l.b16 %v3647
      %v4067 = vunpack.c.l.b16 %v3648
      %v4068 = vpack.c.b16 %v4065, %v4064
      %v4069 = vpack.c.b16 %v4067, %v4066
      %v4073 = vsel %vm1484, %v3819, 0
      %v4076 = vsel %vm1484, %v3820, 0
      %4078 = vmatprep.subr.bf16.mxu0 0
      %4079 = vmatpush1.bf16.msra.mxu0 %v4068
      %4080 = vmatprep.subr.bf16.mxu0 0
      %4081 = vmatpush1.bf16.msra.mxu0 %v4069
      %4082 = vmatprep.subr.bf16.mxu0 0
      %4083 = vmatpush1.bf16.msra.mxu0 0
      %4084 = vmatprep.subr.bf16.mxu0 0
      %4085 = vmatpush1.bf16.msra.mxu0 0
      %4086 = vmatprep.subr.bf16.mxu0 0
      %4087 = vmatpush1.bf16.msra.mxu0 0
      %4088 = vmatprep.subr.bf16.mxu0 0
      %4089 = vmatpush1.bf16.msra.mxu0 0
      %4090 = vmatprep.subr.bf16.mxu0 0
      %4091 = vmatpush1.bf16.msra.mxu0 0
      %4092 = vmatprep.subr.bf16.mxu0 0
      %4093 = vmatpush1.bf16.msra.mxu0 0
      %4094 = vmatprep.subr.bf16.mxu0 0
      %4095 = vmatpush1.bf16.msra.mxu0 0
      %4096 = vmatprep.subr.bf16.mxu0 0
      %4097 = vmatpush1.bf16.msra.mxu0 0
      %4098 = vmatprep.subr.bf16.mxu0 0
      %4099 = vmatpush1.bf16.msra.mxu0 0
      %4100 = vmatprep.subr.bf16.mxu0 0
      %4101 = vmatpush1.bf16.msra.mxu0 0
      %4102 = vmatprep.subr.bf16.mxu0 0
      %4103 = vmatpush1.bf16.msra.mxu0 0
      %4104 = vmatprep.subr.bf16.mxu0 0
      %4105 = vmatpush1.bf16.msra.mxu0 0
      %4106 = vmatprep.subr.bf16.mxu0 0
      %4107 = vmatpush1.bf16.msra.mxu0 0
      %4108 = vmatprep.subr.bf16.mxu0 0
      %4109 = vmatpush1.bf16.msra.mxu0 0
      %4110 = vmatprep.mubr.bf16.mxu0 0
      %4111 = vmatmul.mubr.bf16.gmra.mrb[0].mxu0 %v4073
      %v4112 = vpop.f32.mrb[0].mxu0
      %v4113 = vadd.f32 %v4047, %v4112
      %v4114 = vpop.f32.mrb[0].mxu0
      %v4115 = vpop.f32.mrb[0].mxu0
      %v4116 = vadd.f32 %v4050, %v4115
      %v4117 = vpop.f32.mrb[0].mxu0
      %4118 = vmatprep.mubr.bf16.mxu0 0
      %4119 = vmatmul.mubr.bf16.gmra.mrb[0].mxu0 %v4076
      %v4120 = vpop.f32.mrb[0].mxu0
      %v4121 = vadd.f32 %v4055, %v4120
      %v4122 = vpop.f32.mrb[0].mxu0
      %v4123 = vpop.f32.mrb[0].mxu0
      %v4124 = vpop.f32.mrb[0].mxu0
      %4125 = vdwg.mxu0
      %4126 = vrot.lane.b32.xlu0 %v3661, 64
      %v4127 = vpop.permute.xlu0 %4126
      %4128 = vrot.lane.b32.xlu0 %v3662, 64
      %v4129 = vpop.permute.xlu0 %4128
      %4130 = vrot.lane.b32.xlu0 %v3663, 64
      %v4131 = vpop.permute.xlu0 %4130
      %4132 = vrot.lane.b32.xlu0 %v3664, 64
      %v4133 = vpop.permute.xlu0 %4132
      %v4135 = vsel %vm1484, %v4127, 0
      %v4138 = vsel %vm1484, %v4129, 0
      %v4141 = vsel %vm1484, %v4131, 0
      %v4144 = vsel %vm1484, %v4133, 0
      %4146 = vmatprep.subr.bf16.mxu0 0
      %4147 = vmatpush1.bf16.xpose.msra.mxu0 %v4141
      %4148 = vmatprep.subr.bf16.mxu0 0
      %4149 = vmatpush1.bf16.xpose.msra.mxu0 %v4144
      %4150 = vmatprep.subr.bf16.mxu0 0
      %4151 = vmatpush1.bf16.xpose.msra.mxu0 0
      %4152 = vmatprep.subr.bf16.mxu0 0
      %4153 = vmatpush1.bf16.xpose.msra.mxu0 0
      %4154 = vmatprep.subr.bf16.mxu0 0
      %4155 = vmatpush1.bf16.xpose.msra.mxu0 0
      %4156 = vmatprep.subr.bf16.mxu0 0
      %4157 = vmatpush1.bf16.xpose.msra.mxu0 0
      %4158 = vmatprep.subr.bf16.mxu0 0
      %4159 = vmatpush1.bf16.xpose.msra.mxu0 0
      %4160 = vmatprep.subr.bf16.mxu0 0
      %4161 = vmatpush1.bf16.xpose.msra.mxu0 0
      %4162 = vmatprep.subr.bf16.mxu0 0
      %4163 = vmatpush1.bf16.xpose.msra.mxu0 0
      %4164 = vmatprep.subr.bf16.mxu0 0
      %4165 = vmatpush1.bf16.xpose.msra.mxu0 0
      %4166 = vmatprep.subr.bf16.mxu0 0
      %4167 = vmatpush1.bf16.xpose.msra.mxu0 0
      %4168 = vmatprep.subr.bf16.mxu0 0
      %4169 = vmatpush1.bf16.xpose.msra.mxu0 0
      %4170 = vmatprep.subr.bf16.mxu0 0
      %4171 = vmatpush1.bf16.xpose.msra.mxu0 0
      %4172 = vmatprep.subr.bf16.mxu0 0
      %4173 = vmatpush1.bf16.xpose.msra.mxu0 0
      %4174 = vmatprep.subr.bf16.mxu0 0
      %4175 = vmatpush1.bf16.xpose.msra.mxu0 0
      %4176 = vmatprep.subr.bf16.mxu0 0
      %4177 = vmatpush1.bf16.xpose.msra.mxu0 0
      %4178 = vmatprep.mubr.bf16.mxu0 0
      %4179 = vmatmul.mubr.bf16.gmra.mrb[0].mxu0 %v4135
      %v4180 = vpop.f32.mrb[0].mxu0
      %v4181 = vadd.f32 0.0, %v4180
      %v4182 = vpop.f32.mrb[0].mxu0
      %v4183 = vpop.f32.mrb[0].mxu0
      %v4184 = vadd.f32 0.0, %v4183
      %v4185 = vpop.f32.mrb[0].mxu0
      %4186 = vmatprep.mubr.bf16.mxu0 0
      %4187 = vmatmul.mubr.bf16.gmra.mrb[0].mxu0 %v4138
      %v4188 = vpop.f32.mrb[0].mxu0
      %v4189 = vadd.f32 0.0, %v4188
      %v4190 = vpop.f32.mrb[0].mxu0
      %v4191 = vpop.f32.mrb[0].mxu0
      %v4192 = vpop.f32.mrb[0].mxu0
      %4193 = vdwg.mxu0
      %v4194 = vsel %vm1545, %v4181, -inf
      %4195 = vmax.xlane.f32.xlu0 %v4194
      %v4196 = vpop.xlane.xlu0 %4195
      %v4197 = vsel %vm1545, %v4184, -inf
      %4198 = vmax.xlane.f32.xlu0 %v4197
      %v4199 = vpop.xlane.xlu0 %4198
      %v4200 = vsel %vm1552, %v4189, -inf
      %4201 = vmax.xlane.f32.xlu0 %v4200
      %v4202 = vpop.xlane.xlu0 %4201
      %v4203 = vsub.f32 %v4181, %v4196
      %v4204 = vsub.f32 %v4184, %v4199
      %v4205 = vsub.f32 %v4189, %v4202
      %v4206 = vmul.f32 %v4203, 1.442695
      %v4207 = vpow.pop %v4206
      %v4208 = vmul.f32 %v4204, 1.442695
      %v4209 = vpow.pop %v4208
      %v4210 = vmul.f32 %v4205, 1.442695
      %v4211 = vpow.pop %v4210
      %v4212 = vsel %vm1545, %v4207, 0.0
      %4213 = vadd.xlane.f32.xlu0 %v4212
      %v4214 = vpop.xlane.xlu0 %4213
      %v4215 = vsel %vm1545, %v4209, 0.0
      %4216 = vadd.xlane.f32.xlu0 %v4215
      %v4217 = vpop.xlane.xlu0 %4216
      %v4218 = vsel %vm1552, %v4211, 0.0
      %4219 = vadd.xlane.f32.xlu0 %v4218
      %v4220 = vpop.xlane.xlu0 %4219
      %v4221 = vrcp.pop %v4214
      %v4222 = vmul.f32 %v4207, %v4221
      %v4223 = vrcp.pop %v4217
      %v4224 = vmul.f32 %v4209, %v4223
      %v4225 = vrcp.pop %v4220
      %v4226 = vmul.f32 %v4211, %v4225
      %v4227 = vpack.c.bf16 %v4224, %v4222
      %v4228 = vpack.c.bf16 %v4226, %v4226
      %4229 = vrot.lane.b32.xlu0 %v3665, 64
      %v4230 = vpop.permute.xlu0 %4229
      %4231 = vrot.lane.b32.xlu0 %v3666, 64
      %v4232 = vpop.permute.xlu0 %4231
      %v4235 = vsel %vm1545, %v4227, 0
      %v4238 = vsel %vm1545, %v4228, 0
      %v4241 = vand.u32 %v4232, %v1589
      %4243 = vmatprep.subr.bf16.mxu0 0
      %4244 = vmatpush1.bf16.msra.mxu0 %v4230
      %4245 = vmatprep.subr.bf16.mxu0 0
      %4246 = vmatpush1.bf16.msra.mxu0 %v4241
      %4247 = vmatprep.subr.bf16.mxu0 0
      %4248 = vmatpush1.bf16.msra.mxu0 0
      %4249 = vmatprep.subr.bf16.mxu0 0
      %4250 = vmatpush1.bf16.msra.mxu0 0
      %4251 = vmatprep.subr.bf16.mxu0 0
      %4252 = vmatpush1.bf16.msra.mxu0 0
      %4253 = vmatprep.subr.bf16.mxu0 0
      %4254 = vmatpush1.bf16.msra.mxu0 0
      %4255 = vmatprep.subr.bf16.mxu0 0
      %4256 = vmatpush1.bf16.msra.mxu0 0
      %4257 = vmatprep.subr.bf16.mxu0 0
      %4258 = vmatpush1.bf16.msra.mxu0 0
      %4259 = vmatprep.subr.bf16.mxu0 0
      %4260 = vmatpush1.bf16.msra.mxu0 0
      %4261 = vmatprep.subr.bf16.mxu0 0
      %4262 = vmatpush1.bf16.msra.mxu0 0
      %4263 = vmatprep.subr.bf16.mxu0 0
      %4264 = vmatpush1.bf16.msra.mxu0 0
      %4265 = vmatprep.subr.bf16.mxu0 0
      %4266 = vmatpush1.bf16.msra.mxu0 0
      %4267 = vmatprep.subr.bf16.mxu0 0
      %4268 = vmatpush1.bf16.msra.mxu0 0
      %4269 = vmatprep.subr.bf16.mxu0 0
      %4270 = vmatpush1.bf16.msra.mxu0 0
      %4271 = vmatprep.subr.bf16.mxu0 0
      %4272 = vmatpush1.bf16.msra.mxu0 0
      %4273 = vmatprep.subr.bf16.mxu0 0
      %4274 = vmatpush1.bf16.msra.mxu0 0
      %4275 = vmatprep.mubr.bf16.mxu0 0
      %4276 = vmatmul.mubr.bf16.gmra.mrb[0].mxu0 %v4235
      %v4277 = vpop.f32.mrb[0].mxu0
      %v4278 = vadd.f32 0.0, %v4277
      %v4279 = vpop.f32.mrb[0].mxu0
      %v4280 = vpop.f32.mrb[0].mxu0
      %v4281 = vadd.f32 0.0, %v4280
      %v4282 = vpop.f32.mrb[0].mxu0
      %4283 = vmatprep.mubr.bf16.mxu0 0
      %4284 = vmatmul.mubr.bf16.gmra.mrb[0].mxu0 %v4238
      %v4285 = vpop.f32.mrb[0].mxu0
      %v4286 = vadd.f32 0.0, %v4285
      %v4287 = vpop.f32.mrb[0].mxu0
      %v4288 = vpop.f32.mrb[0].mxu0
      %v4289 = vpop.f32.mrb[0].mxu0
      %4290 = vdwg.mxu0
      %v4291 = vpack.c.bf16 %v4281, %v4278
      %v4292 = vpack.c.bf16 %v4286, %v4286
      %v4297 = vunpack.c.l.b16 %v3653
      %v4298 = vunpack.c.l.b16 %v3654
      %v4299 = vunpack.c.l.b16 %v3655
      %v4300 = vunpack.c.l.b16 %v3656
      %v4301 = vpack.c.b16 %v4298, %v4297
      %v4302 = vpack.c.b16 %v4300, %v4299
      %v4306 = vsel %vm1484, %v4291, 0
      %v4309 = vsel %vm1484, %v4292, 0
      %4311 = vmatprep.subr.bf16.mxu0 0
      %4312 = vmatpush1.bf16.msra.mxu0 %v4301
      %4313 = vmatprep.subr.bf16.mxu0 0
      %4314 = vmatpush1.bf16.msra.mxu0 %v4302
      %4315 = vmatprep.subr.bf16.mxu0 0
      %4316 = vmatpush1.bf16.msra.mxu0 0
      %4317 = vmatprep.subr.bf16.mxu0 0
      %4318 = vmatpush1.bf16.msra.mxu0 0
      %4319 = vmatprep.subr.bf16.mxu0 0
      %4320 = vmatpush1.bf16.msra.mxu0 0
      %4321 = vmatprep.subr.bf16.mxu0 0
      %4322 = vmatpush1.bf16.msra.mxu0 0
      %4323 = vmatprep.subr.bf16.mxu0 0
      %4324 = vmatpush1.bf16.msra.mxu0 0
      %4325 = vmatprep.subr.bf16.mxu0 0
      %4326 = vmatpush1.bf16.msra.mxu0 0
      %4327 = vmatprep.subr.bf16.mxu0 0
      %4328 = vmatpush1.bf16.msra.mxu0 0
      %4329 = vmatprep.subr.bf16.mxu0 0
      %4330 = vmatpush1.bf16.msra.mxu0 0
      %4331 = vmatprep.subr.bf16.mxu0 0
      %4332 = vmatpush1.bf16.msra.mxu0 0
      %4333 = vmatprep.subr.bf16.mxu0 0
      %4334 = vmatpush1.bf16.msra.mxu0 0
      %4335 = vmatprep.subr.bf16.mxu0 0
      %4336 = vmatpush1.bf16.msra.mxu0 0
      %4337 = vmatprep.subr.bf16.mxu0 0
      %4338 = vmatpush1.bf16.msra.mxu0 0
      %4339 = vmatprep.subr.bf16.mxu0 0
      %4340 = vmatpush1.bf16.msra.mxu0 0
      %4341 = vmatprep.subr.bf16.mxu0 0
      %4342 = vmatpush1.bf16.msra.mxu0 0
      %4343 = vmatprep.mubr.bf16.mxu0 0
      %4344 = vmatmul.mubr.bf16.gmra.mrb[0].mxu0 %v4306
      %v4345 = vpop.f32.mrb[0].mxu0
      %v4346 = vadd.f32 0.0, %v4345
      %v4347 = vpop.f32.mrb[0].mxu0
      %v4348 = vpop.f32.mrb[0].mxu0
      %v4349 = vadd.f32 0.0, %v4348
      %v4350 = vpop.f32.mrb[0].mxu0
      %4351 = vmatprep.mubr.bf16.mxu0 0
      %4352 = vmatmul.mubr.bf16.gmra.mrb[0].mxu0 %v4309
      %v4353 = vpop.f32.mrb[0].mxu0
      %v4354 = vadd.f32 0.0, %v4353
      %v4355 = vpop.f32.mrb[0].mxu0
      %v4356 = vpop.f32.mrb[0].mxu0
      %v4357 = vpop.f32.mrb[0].mxu0
      %4358 = vdwg.mxu0
      %v4359 = vadd.f32 %v4113, %v4346
      %v4360 = vadd.f32 %v4116, %v4349
      %v4361 = vadd.f32 %v4121, %v4354
      %4362 = vrot.lane.b32.xlu0 %v3661, 32
      %v4363 = vpop.permute.xlu0 %4362
      %4364 = vrot.lane.b32.xlu0 %v3662, 32
      %v4365 = vpop.permute.xlu0 %4364
      %4366 = vrot.lane.b32.xlu0 %v3663, 32
      %v4367 = vpop.permute.xlu0 %4366
      %4368 = vrot.lane.b32.xlu0 %v3664, 32
      %v4369 = vpop.permute.xlu0 %4368
      %v4371 = vsel %vm1484, %v4363, 0
      %v4374 = vsel %vm1484, %v4365, 0
      %v4377 = vsel %vm1484, %v4367, 0
      %v4380 = vsel %vm1484, %v4369, 0
      %4382 = vmatprep.subr.bf16.mxu0 0
      %4383 = vmatpush1.bf16.xpose.msra.mxu0 %v4377
      %4384 = vmatprep.subr.bf16.mxu0 0
      %4385 = vmatpush1.bf16.xpose.msra.mxu0 %v4380
      %4386 = vmatprep.subr.bf16.mxu0 0
      %4387 = vmatpush1.bf16.xpose.msra.mxu0 0
      %4388 = vmatprep.subr.bf16.mxu0 0
      %4389 = vmatpush1.bf16.xpose.msra.mxu0 0
      %4390 = vmatprep.subr.bf16.mxu0 0
      %4391 = vmatpush1.bf16.xpose.msra.mxu0 0
      %4392 = vmatprep.subr.bf16.mxu0 0
      %4393 = vmatpush1.bf16.xpose.msra.mxu0 0
      %4394 = vmatprep.subr.bf16.mxu0 0
      %4395 = vmatpush1.bf16.xpose.msra.mxu0 0
      %4396 = vmatprep.subr.bf16.mxu0 0
      %4397 = vmatpush1.bf16.xpose.msra.mxu0 0
      %4398 = vmatprep.subr.bf16.mxu0 0
      %4399 = vmatpush1.bf16.xpose.msra.mxu0 0
      %4400 = vmatprep.subr.bf16.mxu0 0
      %4401 = vmatpush1.bf16.xpose.msra.mxu0 0
      %4402 = vmatprep.subr.bf16.mxu0 0
      %4403 = vmatpush1.bf16.xpose.msra.mxu0 0
      %4404 = vmatprep.subr.bf16.mxu0 0
      %4405 = vmatpush1.bf16.xpose.msra.mxu0 0
      %4406 = vmatprep.subr.bf16.mxu0 0
      %4407 = vmatpush1.bf16.xpose.msra.mxu0 0
      %4408 = vmatprep.subr.bf16.mxu0 0
      %4409 = vmatpush1.bf16.xpose.msra.mxu0 0
      %4410 = vmatprep.subr.bf16.mxu0 0
      %4411 = vmatpush1.bf16.xpose.msra.mxu0 0
      %4412 = vmatprep.subr.bf16.mxu0 0
      %4413 = vmatpush1.bf16.xpose.msra.mxu0 0
      %4414 = vmatprep.mubr.bf16.mxu0 0
      %4415 = vmatmul.mubr.bf16.gmra.mrb[0].mxu0 %v4371
      %v4416 = vpop.f32.mrb[0].mxu0
      %v4417 = vadd.f32 0.0, %v4416
      %v4418 = vpop.f32.mrb[0].mxu0
      %v4419 = vpop.f32.mrb[0].mxu0
      %v4420 = vadd.f32 0.0, %v4419
      %v4421 = vpop.f32.mrb[0].mxu0
      %4422 = vmatprep.mubr.bf16.mxu0 0
      %4423 = vmatmul.mubr.bf16.gmra.mrb[0].mxu0 %v4374
      %v4424 = vpop.f32.mrb[0].mxu0
      %v4425 = vadd.f32 0.0, %v4424
      %v4426 = vpop.f32.mrb[0].mxu0
      %v4427 = vpop.f32.mrb[0].mxu0
      %v4428 = vpop.f32.mrb[0].mxu0
      %4429 = vdwg.mxu0
      %v4430 = vsel %vm1545, %v4417, -inf
      %4431 = vmax.xlane.f32.xlu0 %v4430
      %v4432 = vpop.xlane.xlu0 %4431
      %v4433 = vsel %vm1545, %v4420, -inf
      %4434 = vmax.xlane.f32.xlu0 %v4433
      %v4435 = vpop.xlane.xlu0 %4434
      %v4436 = vsel %vm1552, %v4425, -inf
      %4437 = vmax.xlane.f32.xlu0 %v4436
      %v4438 = vpop.xlane.xlu0 %4437
      %v4439 = vsub.f32 %v4417, %v4432
      %v4440 = vsub.f32 %v4420, %v4435
      %v4441 = vsub.f32 %v4425, %v4438
      %v4442 = vmul.f32 %v4439, 1.442695
      %v4443 = vpow.pop %v4442
      %v4444 = vmul.f32 %v4440, 1.442695
      %v4445 = vpow.pop %v4444
      %v4446 = vmul.f32 %v4441, 1.442695
      %v4447 = vpow.pop %v4446
      %v4448 = vsel %vm1545, %v4443, 0.0
      %4449 = vadd.xlane.f32.xlu0 %v4448
      %v4450 = vpop.xlane.xlu0 %4449
      %v4451 = vsel %vm1545, %v4445, 0.0
      %4452 = vadd.xlane.f32.xlu0 %v4451
      %v4453 = vpop.xlane.xlu0 %4452
      %v4454 = vsel %vm1552, %v4447, 0.0
      %4455 = vadd.xlane.f32.xlu0 %v4454
      %v4456 = vpop.xlane.xlu0 %4455
      %v4457 = vrcp.pop %v4450
      %v4458 = vmul.f32 %v4443, %v4457
      %v4459 = vrcp.pop %v4453
      %v4460 = vmul.f32 %v4445, %v4459
      %v4461 = vrcp.pop %v4456
      %v4462 = vmul.f32 %v4447, %v4461
      %v4463 = vpack.c.bf16 %v4460, %v4458
      %v4464 = vpack.c.bf16 %v4462, %v4462
      %4465 = vrot.lane.b32.xlu0 %v3665, 32
      %v4466 = vpop.permute.xlu0 %4465
      %4467 = vrot.lane.b32.xlu0 %v3666, 32
      %v4468 = vpop.permute.xlu0 %4467
      %v4471 = vsel %vm1545, %v4463, 0
      %v4474 = vsel %vm1545, %v4464, 0
      %v4477 = vand.u32 %v4468, %v1589
      %4479 = vmatprep.subr.bf16.mxu0 0
      %4480 = vmatpush1.bf16.msra.mxu0 %v4466
      %4481 = vmatprep.subr.bf16.mxu0 0
      %4482 = vmatpush1.bf16.msra.mxu0 %v4477
      %4483 = vmatprep.subr.bf16.mxu0 0
      %4484 = vmatpush1.bf16.msra.mxu0 0
      %4485 = vmatprep.subr.bf16.mxu0 0
      %4486 = vmatpush1.bf16.msra.mxu0 0
      %4487 = vmatprep.subr.bf16.mxu0 0
      %4488 = vmatpush1.bf16.msra.mxu0 0
      %4489 = vmatprep.subr.bf16.mxu0 0
      %4490 = vmatpush1.bf16.msra.mxu0 0
      %4491 = vmatprep.subr.bf16.mxu0 0
      %4492 = vmatpush1.bf16.msra.mxu0 0
      %4493 = vmatprep.subr.bf16.mxu0 0
      %4494 = vmatpush1.bf16.msra.mxu0 0
      %4495 = vmatprep.subr.bf16.mxu0 0
      %4496 = vmatpush1.bf16.msra.mxu0 0
      %4497 = vmatprep.subr.bf16.mxu0 0
      %4498 = vmatpush1.bf16.msra.mxu0 0
      %4499 = vmatprep.subr.bf16.mxu0 0
      %4500 = vmatpush1.bf16.msra.mxu0 0
      %4501 = vmatprep.subr.bf16.mxu0 0
      %4502 = vmatpush1.bf16.msra.mxu0 0
      %4503 = vmatprep.subr.bf16.mxu0 0
      %4504 = vmatpush1.bf16.msra.mxu0 0
      %4505 = vmatprep.subr.bf16.mxu0 0
      %4506 = vmatpush1.bf16.msra.mxu0 0
      %4507 = vmatprep.subr.bf16.mxu0 0
      %4508 = vmatpush1.bf16.msra.mxu0 0
      %4509 = vmatprep.subr.bf16.mxu0 0
      %4510 = vmatpush1.bf16.msra.mxu0 0
      %4511 = vmatprep.mubr.bf16.mxu0 0
      %4512 = vmatmul.mubr.bf16.gmra.mrb[0].mxu0 %v4471
      %v4513 = vpop.f32.mrb[0].mxu0
      %v4514 = vadd.f32 0.0, %v4513
      %v4515 = vpop.f32.mrb[0].mxu0
      %v4516 = vpop.f32.mrb[0].mxu0
      %v4517 = vadd.f32 0.0, %v4516
      %v4518 = vpop.f32.mrb[0].mxu0
      %4519 = vmatprep.mubr.bf16.mxu0 0
      %4520 = vmatmul.mubr.bf16.gmra.mrb[0].mxu0 %v4474
      %v4521 = vpop.f32.mrb[0].mxu0
      %v4522 = vadd.f32 0.0, %v4521
      %v4523 = vpop.f32.mrb[0].mxu0
      %v4524 = vpop.f32.mrb[0].mxu0
      %v4525 = vpop.f32.mrb[0].mxu0
      %4526 = vdwg.mxu0
      %v4527 = vpack.c.bf16 %v4517, %v4514
      %v4528 = vpack.c.bf16 %v4522, %v4522
      %v4533 = vunpack.c.l.b16 %v3657
      %v4534 = vunpack.c.l.b16 %v3658
      %v4535 = vunpack.c.l.b16 %v3659
      %v4536 = vunpack.c.l.b16 %v3660
      %v4537 = vpack.c.b16 %v4534, %v4533
      %v4538 = vpack.c.b16 %v4536, %v4535
      %v4542 = vsel %vm1484, %v4527, 0
      %v4545 = vsel %vm1484, %v4528, 0
      %4547 = vmatprep.subr.bf16.mxu0 0
      %4548 = vmatpush1.bf16.msra.mxu0 %v4537
      %4549 = vmatprep.subr.bf16.mxu0 0
      %4550 = vmatpush1.bf16.msra.mxu0 %v4538
      %4551 = vmatprep.subr.bf16.mxu0 0
      %4552 = vmatpush1.bf16.msra.mxu0 0
      %4553 = vmatprep.subr.bf16.mxu0 0
      %4554 = vmatpush1.bf16.msra.mxu0 0
      %4555 = vmatprep.subr.bf16.mxu0 0
      %4556 = vmatpush1.bf16.msra.mxu0 0
      %4557 = vmatprep.subr.bf16.mxu0 0
      %4558 = vmatpush1.bf16.msra.mxu0 0
      %4559 = vmatprep.subr.bf16.mxu0 0
      %4560 = vmatpush1.bf16.msra.mxu0 0
      %4561 = vmatprep.subr.bf16.mxu0 0
      %4562 = vmatpush1.bf16.msra.mxu0 0
      %4563 = vmatprep.subr.bf16.mxu0 0
      %4564 = vmatpush1.bf16.msra.mxu0 0
      %4565 = vmatprep.subr.bf16.mxu0 0
      %4566 = vmatpush1.bf16.msra.mxu0 0
      %4567 = vmatprep.subr.bf16.mxu0 0
      %4568 = vmatpush1.bf16.msra.mxu0 0
      %4569 = vmatprep.subr.bf16.mxu0 0
      %4570 = vmatpush1.bf16.msra.mxu0 0
      %4571 = vmatprep.subr.bf16.mxu0 0
      %4572 = vmatpush1.bf16.msra.mxu0 0
      %4573 = vmatprep.subr.bf16.mxu0 0
      %4574 = vmatpush1.bf16.msra.mxu0 0
      %4575 = vmatprep.subr.bf16.mxu0 0
      %4576 = vmatpush1.bf16.msra.mxu0 0
      %4577 = vmatprep.subr.bf16.mxu0 0
      %4578 = vmatpush1.bf16.msra.mxu0 0
      %4579 = vmatprep.mubr.bf16.mxu0 0
      %4580 = vmatmul.mubr.bf16.gmra.mrb[0].mxu0 %v4542
      %v4581 = vpop.f32.mrb[0].mxu0
      %v4582 = vadd.f32 0.0, %v4581
      %v4583 = vpop.f32.mrb[0].mxu0
      %v4584 = vpop.f32.mrb[0].mxu0
      %v4585 = vadd.f32 0.0, %v4584
      %v4586 = vpop.f32.mrb[0].mxu0
      %4587 = vmatprep.mubr.bf16.mxu0 0
      %4588 = vmatmul.mubr.bf16.gmra.mrb[0].mxu0 %v4545
      %v4589 = vpop.f32.mrb[0].mxu0
      %v4590 = vadd.f32 0.0, %v4589
      %v4591 = vpop.f32.mrb[0].mxu0
      %v4592 = vpop.f32.mrb[0].mxu0
      %v4593 = vpop.f32.mrb[0].mxu0
      %4594 = vdwg.mxu0
      %v4595 = vadd.f32 %v4359, %v4582
      %v4596 = vadd.f32 %v4360, %v4585
      %v4597 = vadd.f32 %v4361, %v4590
      %s4598 = scalar_lea.vmem %s8, 1
      %v4599 = vld [vmem:[%s4598] sm:$0x1]
      %v4601 = vlaneseq
      %v4602 = vshrl.u32 %v4601, 7
      %v4603 = vsub.s32 0, %v4602
      %v4604 = vrot.slane %v4599, %v4603
      %v4606 = vadd.f32 %v4595, %v4604
      %v4607 = vadd.f32 %v4596, %v4604
      %v4608 = vadd.f32 %v4597, %v4604
      %s4609 = scalar_lea.vmem %s9, 1
      %v4610 = vld [vmem:[%s4609] sm:$0x1]
      %v4612 = vlaneseq
      %v4613 = vshrl.u32 %v4612, 7
      %v4614 = vsub.s32 0, %v4613
      %v4615 = vrot.slane %v4610, %v4614
      %v4617 = vmul.f32 %v4606, %v4615
      %v4618 = vmul.f32 %v4607, %v4615
      %v4619 = vmul.f32 %v4608, %v4615
      %v4620 = vadd.f32 %v3301, %v4617
      %v4621 = vadd.f32 %v3302, %v4618
      %v4622 = vadd.f32 %v3303, %v4619
      %s4623 = scalar_lea.vmem %s10, 1
      %v4624 = vld [vmem:[%s4623] sm:$0x1]
      %s4625 = scalar_lea.vmem %s11, 1
      %v4626 = vld [vmem:[%s4625] sm:$0x1]
      %4627 = vadd.xlane.f32.xlu0 %v4620
      %v4628 = vpop.xlane.xlu0 %4627
      %4629 = vadd.xlane.f32.xlu0 %v4621
      %v4630 = vpop.xlane.xlu0 %4629
      %v4631 = vsel %vm1130, %v4622, 0.0
      %4632 = vadd.xlane.f32.xlu0 %v4631
      %v4633 = vpop.xlane.xlu0 %4632
      %v4634 = vmul.f32 %v4628, %v1134
      %v4635 = vmul.f32 %v4630, %v1134
      %v4636 = vmul.f32 %v4633, %v1134
      %v4637 = vsub.f32 %v4620, %v4634
      %v4638 = vsub.f32 %v4621, %v4635
      %v4639 = vsub.f32 %v4622, %v4636
      %v4640 = vmul.f32 %v4637, %v4637
      %v4641 = vmul.f32 %v4638, %v4638
      %v4642 = vmul.f32 %v4639, %v4639
      %4643 = vadd.xlane.f32.xlu0 %v4640
      %v4644 = vpop.xlane.xlu0 %4643
      %4645 = vadd.xlane.f32.xlu0 %v4641
      %v4646 = vpop.xlane.xlu0 %4645
      %v4647 = vsel %vm1130, %v4642, 0.0
      %4648 = vadd.xlane.f32.xlu0 %v4647
      %v4649 = vpop.xlane.xlu0 %4648
      %v4650 = vmul.f32 %v4644, %v1134
      %v4651 = vmul.f32 %v4646, %v1134
      %v4652 = vmul.f32 %v4649, %v1134
      %v4653 = vadd.f32 %v4650, 1e-06
      %v4654 = vadd.f32 %v4651, 1e-06
      %v4655 = vadd.f32 %v4652, 1e-06
      %v4656 = vrsqrt.pop %v4653
      %v4657 = vrsqrt.pop %v4654
      %v4658 = vrsqrt.pop %v4655
      %v4659 = vmul.f32 %v4637, %v4656
      %v4660 = vmul.f32 %v4638, %v4657
      %v4661 = vmul.f32 %v4639, %v4658
      %v4663 = vlaneseq
      %v4664 = vshrl.u32 %v4663, 7
      %v4665 = vsub.s32 0, %v4664
      %v4666 = vrot.slane %v4624, %v4665
      %v4668 = vmul.f32 %v4659, %v4666
      %v4669 = vmul.f32 %v4660, %v4666
      %v4670 = vmul.f32 %v4661, %v4666
      %v4672 = vlaneseq
      %v4673 = vshrl.u32 %v4672, 7
      %v4674 = vsub.s32 0, %v4673
      %v4675 = vrot.slane %v4626, %v4674
      %v4677 = vadd.f32 %v4668, %v4675
      %v4678 = vadd.f32 %v4669, %v4675
      %v4679 = vadd.f32 %v4670, %v4675
      %s4680 = scalar_lea.vmem %s12, 256
      %v4681 = vld [vmem:[%s4680] sm:$0xff]
      %v4682 = vld [vmem:[%s4680 + $0x8] sm:$0xff]
      %v4683 = vld [vmem:[%s4680 + $0x10] sm:$0xff]
      %v4684 = vld [vmem:[%s4680 + $0x18] sm:$0xff]
      %v4685 = vld [vmem:[%s4680 + $0x20] sm:$0xff]
      %v4686 = vld [vmem:[%s4680 + $0x28] sm:$0xff]
      %v4687 = vld [vmem:[%s4680 + $0x30] sm:$0xff]
      %v4688 = vld [vmem:[%s4680 + $0x38] sm:$0xff]
      %v4689 = vld [vmem:[%s4680 + $0x40] sm:$0xff]
      %v4690 = vld [vmem:[%s4680 + $0x48] sm:$0xff]
      %v4691 = vld [vmem:[%s4680 + $0x50] sm:$0xff]
      %v4692 = vld [vmem:[%s4680 + $0x58] sm:$0xff]
      %v4693 = vld [vmem:[%s4680 + $0x60] sm:$0xff]
      %v4694 = vld [vmem:[%s4680 + $0x68] sm:$0xff]
      %v4695 = vld [vmem:[%s4680 + $0x70] sm:$0xff]
      %v4696 = vld [vmem:[%s4680 + $0x78] sm:$0xff]
      %v4697 = vld [vmem:[%s4680 + $0x80] sm:$0xff]
      %v4698 = vld [vmem:[%s4680 + $0x88] sm:$0xff]
      %v4699 = vld [vmem:[%s4680 + $0x90] sm:$0xff]
      %v4700 = vld [vmem:[%s4680 + $0x98] sm:$0xff]
      %v4701 = vld [vmem:[%s4680 + $0xa0] sm:$0xff]
      %v4702 = vld [vmem:[%s4680 + $0xa8] sm:$0xff]
      %v4703 = vld [vmem:[%s4680 + $0xb0] sm:$0xff]
      %v4704 = vld [vmem:[%s4680 + $0xb8] sm:$0xff]
      %v4705 = vld [vmem:[%s4680 + $0xc0] sm:$0xff]
      %v4706 = vld [vmem:[%s4680 + $0xc8] sm:$0xff]
      %v4707 = vld [vmem:[%s4680 + $0xd0] sm:$0xff]
      %v4708 = vld [vmem:[%s4680 + $0xd8] sm:$0xff]
      %v4709 = vld [vmem:[%s4680 + $0xe0] sm:$0xff]
      %v4710 = vld [vmem:[%s4680 + $0xe8] sm:$0xff]
      %v4711 = vld [vmem:[%s4680 + $0xf0] sm:$0xff]
      %v4712 = vld [vmem:[%s4680 + $0xf8] sm:$0xff]
      %v4713 = vpack.c.bf16 %v4678, %v4677
      %v4714 = vpack.c.bf16 %v4679, %v4679
      %s4715 = scalar_lea.vmem %s13, 4
      %v4716 = vld [vmem:[%s4715] sm:$0xf]
      %v4718 = vlaneseq
      %v4719 = vshrl.u32 %v4718, 7
      %v4720 = vsub.s32 0, %v4719
      %v4721 = vrot.slane %v4716, %v4720
      %v4722 = vlaneseq
      %v4723 = vshrl.u32 %v4722, 7
      %v4724 = vsub.s32 1, %v4723
      %v4725 = vrot.slane %v4716, %v4724
      %v4726 = vlaneseq
      %v4727 = vshrl.u32 %v4726, 7
      %v4728 = vsub.s32 2, %v4727
      %v4729 = vrot.slane %v4716, %v4728
      %v4730 = vlaneseq
      %v4731 = vshrl.u32 %v4730, 7
      %v4732 = vsub.s32 3, %v4731
      %v4733 = vrot.slane %v4716, %v4732
      %v4770 = vunpack.c.l.b16 %v4681
      %v4771 = vunpack.c.h.b16 %v4681
      %v4772 = vunpack.c.l.b16 %v4682
      %v4773 = vunpack.c.h.b16 %v4682
      %v4774 = vunpack.c.l.b16 %v4683
      %v4775 = vunpack.c.h.b16 %v4683
      %v4776 = vunpack.c.l.b16 %v4684
      %v4777 = vunpack.c.h.b16 %v4684
      %v4778 = vunpack.c.l.b16 %v4685
      %v4779 = vunpack.c.h.b16 %v4685
      %v4780 = vunpack.c.l.b16 %v4686
      %v4781 = vunpack.c.h.b16 %v4686
      %v4782 = vunpack.c.l.b16 %v4687
      %v4783 = vunpack.c.h.b16 %v4687
      %v4784 = vunpack.c.l.b16 %v4688
      %v4785 = vunpack.c.h.b16 %v4688
      %v4786 = vunpack.c.l.b16 %v4689
      %v4787 = vunpack.c.h.b16 %v4689
      %v4788 = vunpack.c.l.b16 %v4690
      %v4789 = vunpack.c.h.b16 %v4690
      %v4790 = vunpack.c.l.b16 %v4691
      %v4791 = vunpack.c.h.b16 %v4691
      %v4792 = vunpack.c.l.b16 %v4692
      %v4793 = vunpack.c.h.b16 %v4692
      %v4794 = vunpack.c.l.b16 %v4693
      %v4795 = vunpack.c.h.b16 %v4693
      %v4796 = vunpack.c.l.b16 %v4694
      %v4797 = vunpack.c.h.b16 %v4694
      %v4798 = vunpack.c.l.b16 %v4695
      %v4799 = vunpack.c.h.b16 %v4695
      %v4800 = vunpack.c.l.b16 %v4696
      %v4801 = vunpack.c.h.b16 %v4696
      %v4802 = vunpack.c.l.b16 %v4697
      %v4803 = vunpack.c.h.b16 %v4697
      %v4804 = vunpack.c.l.b16 %v4698
      %v4805 = vunpack.c.h.b16 %v4698
      %v4806 = vunpack.c.l.b16 %v4699
      %v4807 = vunpack.c.h.b16 %v4699
      %v4808 = vunpack.c.l.b16 %v4700
      %v4809 = vunpack.c.h.b16 %v4700
      %v4810 = vunpack.c.l.b16 %v4701
      %v4811 = vunpack.c.h.b16 %v4701
      %v4812 = vunpack.c.l.b16 %v4702
      %v4813 = vunpack.c.h.b16 %v4702
      %v4814 = vunpack.c.l.b16 %v4703
      %v4815 = vunpack.c.h.b16 %v4703
      %v4816 = vunpack.c.l.b16 %v4704
      %v4817 = vunpack.c.h.b16 %v4704
      %v4818 = vunpack.c.l.b16 %v4705
      %v4819 = vunpack.c.h.b16 %v4705
      %v4820 = vunpack.c.l.b16 %v4706
      %v4821 = vunpack.c.h.b16 %v4706
      %v4822 = vunpack.c.l.b16 %v4707
      %v4823 = vunpack.c.h.b16 %v4707
      %v4824 = vunpack.c.l.b16 %v4708
      %v4825 = vunpack.c.h.b16 %v4708
      %v4826 = vunpack.c.l.b16 %v4709
      %v4827 = vunpack.c.h.b16 %v4709
      %v4828 = vunpack.c.l.b16 %v4710
      %v4829 = vunpack.c.h.b16 %v4710
      %v4830 = vunpack.c.l.b16 %v4711
      %v4831 = vunpack.c.h.b16 %v4711
      %v4832 = vunpack.c.l.b16 %v4712
      %v4833 = vunpack.c.h.b16 %v4712
      %v4834 = vpack.c.b16 %v4774, %v4770
      %v4835 = vpack.c.b16 %v4775, %v4771
      %v4836 = vpack.c.b16 %v4776, %v4772
      %v4837 = vpack.c.b16 %v4777, %v4773
      %v4838 = vpack.c.b16 %v4782, %v4778
      %v4839 = vpack.c.b16 %v4783, %v4779
      %v4840 = vpack.c.b16 %v4784, %v4780
      %v4841 = vpack.c.b16 %v4785, %v4781
      %v4842 = vpack.c.b16 %v4790, %v4786
      %v4843 = vpack.c.b16 %v4791, %v4787
      %v4844 = vpack.c.b16 %v4792, %v4788
      %v4845 = vpack.c.b16 %v4793, %v4789
      %v4846 = vpack.c.b16 %v4798, %v4794
      %v4847 = vpack.c.b16 %v4799, %v4795
      %v4848 = vpack.c.b16 %v4800, %v4796
      %v4849 = vpack.c.b16 %v4801, %v4797
      %v4850 = vpack.c.b16 %v4806, %v4802
      %v4851 = vpack.c.b16 %v4807, %v4803
      %v4852 = vpack.c.b16 %v4808, %v4804
      %v4853 = vpack.c.b16 %v4809, %v4805
      %v4854 = vpack.c.b16 %v4814, %v4810
      %v4855 = vpack.c.b16 %v4815, %v4811
      %v4856 = vpack.c.b16 %v4816, %v4812
      %v4857 = vpack.c.b16 %v4817, %v4813
      %v4858 = vpack.c.b16 %v4822, %v4818
      %v4859 = vpack.c.b16 %v4823, %v4819
      %v4860 = vpack.c.b16 %v4824, %v4820
      %v4861 = vpack.c.b16 %v4825, %v4821
      %v4862 = vpack.c.b16 %v4830, %v4826
      %v4863 = vpack.c.b16 %v4831, %v4827
      %v4864 = vpack.c.b16 %v4832, %v4828
      %v4865 = vpack.c.b16 %v4833, %v4829
      %4898 = vmatprep.subr.bf16.mxu0 %v4835
      %4899 = vmatpush1.bf16.msra.mxu0 %v4834
      %4900 = vmatprep.subr.bf16.mxu0 %v4839
      %4901 = vmatpush1.bf16.msra.mxu0 %v4838
      %4902 = vmatprep.subr.bf16.mxu0 %v4843
      %4903 = vmatpush1.bf16.msra.mxu0 %v4842
      %4904 = vmatprep.subr.bf16.mxu0 %v4847
      %4905 = vmatpush1.bf16.msra.mxu0 %v4846
      %4906 = vmatprep.subr.bf16.mxu0 %v4851
      %4907 = vmatpush1.bf16.msra.mxu0 %v4850
      %4908 = vmatprep.subr.bf16.mxu0 %v4855
      %4909 = vmatpush1.bf16.msra.mxu0 %v4854
      %4910 = vmatprep.subr.bf16.mxu0 %v4859
      %4911 = vmatpush1.bf16.msra.mxu0 %v4858
      %4912 = vmatprep.subr.bf16.mxu0 %v4863
      %4913 = vmatpush1.bf16.msra.mxu0 %v4862
      %4914 = vmatprep.subr.bf16.mxu0 0
      %4915 = vmatpush1.bf16.msra.mxu0 0
      %4916 = vmatprep.subr.bf16.mxu0 0
      %4917 = vmatpush1.bf16.msra.mxu0 0
      %4918 = vmatprep.subr.bf16.mxu0 0
      %4919 = vmatpush1.bf16.msra.mxu0 0
      %4920 = vmatprep.subr.bf16.mxu0 0
      %4921 = vmatpush1.bf16.msra.mxu0 0
      %4922 = vmatprep.subr.bf16.mxu0 0
      %4923 = vmatpush1.bf16.msra.mxu0 0
      %4924 = vmatprep.subr.bf16.mxu0 0
      %4925 = vmatpush1.bf16.msra.mxu0 0
      %4926 = vmatprep.subr.bf16.mxu0 0
      %4927 = vmatpush1.bf16.msra.mxu0 0
      %4928 = vmatprep.subr.bf16.mxu0 0
      %4929 = vmatpush1.bf16.msra.mxu0 0
      %4930 = vmatprep.mubr.bf16.mxu0 0
      %4931 = vmatmul.mubr.bf16.gmra.mrb[0].mxu0 %v4713
      %v4932 = vpop.f32.mrb[0].mxu0
      %v4933 = vadd.f32 %v4721, %v4932
      %v4934 = vpop.f32.mrb[0].mxu0
      %v4935 = vadd.f32 %v4725, %v4934
      %v4936 = vpop.f32.mrb[0].mxu0
      %v4937 = vadd.f32 %v4721, %v4936
      %v4938 = vpop.f32.mrb[0].mxu0
      %v4939 = vadd.f32 %v4725, %v4938
      %4940 = vmatprep.mubr.bf16.mxu0 0
      %4941 = vmatmul.mubr.bf16.gmra.mrb[0].mxu0 %v4714
      %v4942 = vpop.f32.mrb[0].mxu0
      %v4943 = vadd.f32 %v4721, %v4942
      %v4944 = vpop.f32.mrb[0].mxu0
      %v4945 = vadd.f32 %v4725, %v4944
      %v4946 = vpop.f32.mrb[0].mxu0
      %v4947 = vpop.f32.mrb[0].mxu0
      %4948 = vdwg.mxu0
      %4949 = vmatprep.subr.bf16.mxu0 %v4837
      %4950 = vmatpush1.bf16.msra.mxu0 %v4836
      %4951 = vmatprep.subr.bf16.mxu0 %v4841
      %4952 = vmatpush1.bf16.msra.mxu0 %v4840
      %4953 = vmatprep.subr.bf16.mxu0 %v4845
      %4954 = vmatpush1.bf16.msra.mxu0 %v4844
      %4955 = vmatprep.subr.bf16.mxu0 %v4849
      %4956 = vmatpush1.bf16.msra.mxu0 %v4848
      %4957 = vmatprep.subr.bf16.mxu0 %v4853
      %4958 = vmatpush1.bf16.msra.mxu0 %v4852
      %4959 = vmatprep.subr.bf16.mxu0 %v4857
      %4960 = vmatpush1.bf16.msra.mxu0 %v4856
      %4961 = vmatprep.subr.bf16.mxu0 %v4861
      %4962 = vmatpush1.bf16.msra.mxu0 %v4860
      %4963 = vmatprep.subr.bf16.mxu0 %v4865
      %4964 = vmatpush1.bf16.msra.mxu0 %v4864
      %4965 = vmatprep.subr.bf16.mxu0 0
      %4966 = vmatpush1.bf16.msra.mxu0 0
      %4967 = vmatprep.subr.bf16.mxu0 0
      %4968 = vmatpush1.bf16.msra.mxu0 0
      %4969 = vmatprep.subr.bf16.mxu0 0
      %4970 = vmatpush1.bf16.msra.mxu0 0
      %4971 = vmatprep.subr.bf16.mxu0 0
      %4972 = vmatpush1.bf16.msra.mxu0 0
      %4973 = vmatprep.subr.bf16.mxu0 0
      %4974 = vmatpush1.bf16.msra.mxu0 0
      %4975 = vmatprep.subr.bf16.mxu0 0
      %4976 = vmatpush1.bf16.msra.mxu0 0
      %4977 = vmatprep.subr.bf16.mxu0 0
      %4978 = vmatpush1.bf16.msra.mxu0 0
      %4979 = vmatprep.subr.bf16.mxu0 0
      %4980 = vmatpush1.bf16.msra.mxu0 0
      %4981 = vmatprep.mubr.bf16.mxu0 0
      %4982 = vmatmul.mubr.bf16.gmra.mrb[0].mxu0 %v4713
      %v4983 = vpop.f32.mrb[0].mxu0
      %v4984 = vadd.f32 %v4729, %v4983
      %v4985 = vpop.f32.mrb[0].mxu0
      %v4986 = vadd.f32 %v4733, %v4985
      %v4987 = vpop.f32.mrb[0].mxu0
      %v4988 = vadd.f32 %v4729, %v4987
      %v4989 = vpop.f32.mrb[0].mxu0
      %v4990 = vadd.f32 %v4733, %v4989
      %4991 = vmatprep.mubr.bf16.mxu0 0
      %4992 = vmatmul.mubr.bf16.gmra.mrb[0].mxu0 %v4714
      %v4993 = vpop.f32.mrb[0].mxu0
      %v4994 = vadd.f32 %v4729, %v4993
      %v4995 = vpop.f32.mrb[0].mxu0
      %v4996 = vadd.f32 %v4733, %v4995
      %v4997 = vpop.f32.mrb[0].mxu0
      %v4998 = vpop.f32.mrb[0].mxu0
      %4999 = vdwg.mxu0
      %v5000 = vmul.f32 %v4933, %v4933
      %v5001 = vmul.f32 %v4935, %v4935
      %v5002 = vmul.f32 %v4984, %v4984
      %v5003 = vmul.f32 %v4986, %v4986
      %v5004 = vmul.f32 %v4937, %v4937
      %v5005 = vmul.f32 %v4939, %v4939
      %v5006 = vmul.f32 %v4988, %v4988
      %v5007 = vmul.f32 %v4990, %v4990
      %v5008 = vmul.f32 %v4943, %v4943
      %v5009 = vmul.f32 %v4945, %v4945
      %v5010 = vmul.f32 %v4994, %v4994
      %v5011 = vmul.f32 %v4996, %v4996
      %v5012 = vmul.f32 %v4933, %v5000
      %v5013 = vmul.f32 %v4935, %v5001
      %v5014 = vmul.f32 %v4984, %v5002
      %v5015 = vmul.f32 %v4986, %v5003
      %v5016 = vmul.f32 %v4937, %v5004
      %v5017 = vmul.f32 %v4939, %v5005
      %v5018 = vmul.f32 %v4988, %v5006
      %v5019 = vmul.f32 %v4990, %v5007
      %v5020 = vmul.f32 %v4943, %v5008
      %v5021 = vmul.f32 %v4945, %v5009
      %v5022 = vmul.f32 %v4994, %v5010
      %v5023 = vmul.f32 %v4996, %v5011
      %v5024 = vmul.f32 %v5012, 0.044715
      %v5025 = vmul.f32 %v5013, 0.044715
      %v5026 = vmul.f32 %v5014, 0.044715
      %v5027 = vmul.f32 %v5015, 0.044715
      %v5028 = vmul.f32 %v5016, 0.044715
      %v5029 = vmul.f32 %v5017, 0.044715
      %v5030 = vmul.f32 %v5018, 0.044715
      %v5031 = vmul.f32 %v5019, 0.044715
      %v5032 = vmul.f32 %v5020, 0.044715
      %v5033 = vmul.f32 %v5021, 0.044715
      %v5034 = vmul.f32 %v5022, 0.044715
      %v5035 = vmul.f32 %v5023, 0.044715
      %v5036 = vadd.f32 %v4933, %v5024
      %v5037 = vadd.f32 %v4935, %v5025
      %v5038 = vadd.f32 %v4984, %v5026
      %v5039 = vadd.f32 %v4986, %v5027
      %v5040 = vadd.f32 %v4937, %v5028
      %v5041 = vadd.f32 %v4939, %v5029
      %v5042 = vadd.f32 %v4988, %v5030
      %v5043 = vadd.f32 %v4990, %v5031
      %v5044 = vadd.f32 %v4943, %v5032
      %v5045 = vadd.f32 %v4945, %v5033
      %v5046 = vadd.f32 %v4994, %v5034
      %v5047 = vadd.f32 %v4996, %v5035
      %v5048 = vmul.f32 %v5036, 0.7978846
      %v5049 = vmul.f32 %v5037, 0.7978846
      %v5050 = vmul.f32 %v5038, 0.7978846
      %v5051 = vmul.f32 %v5039, 0.7978846
      %v5052 = vmul.f32 %v5040, 0.7978846
      %v5053 = vmul.f32 %v5041, 0.7978846
      %v5054 = vmul.f32 %v5042, 0.7978846
      %v5055 = vmul.f32 %v5043, 0.7978846
      %v5056 = vmul.f32 %v5044, 0.7978846
      %v5057 = vmul.f32 %v5045, 0.7978846
      %v5058 = vmul.f32 %v5046, 0.7978846
      %v5059 = vmul.f32 %v5047, 0.7978846
      %v5060 = vtanh.pop %v5048
      %v5061 = vtanh.pop %v5049
      %v5062 = vtanh.pop %v5050
      %v5063 = vtanh.pop %v5051
      %v5064 = vtanh.pop %v5052
      %v5065 = vtanh.pop %v5053
      %v5066 = vtanh.pop %v5054
      %v5067 = vtanh.pop %v5055
      %v5068 = vtanh.pop %v5056
      %v5069 = vtanh.pop %v5057
      %v5070 = vtanh.pop %v5058
      %v5071 = vtanh.pop %v5059
      %v5072 = vadd.f32 %v5060, 1.0
      %v5073 = vadd.f32 %v5061, 1.0
      %v5074 = vadd.f32 %v5062, 1.0
      %v5075 = vadd.f32 %v5063, 1.0
      %v5076 = vadd.f32 %v5064, 1.0
      %v5077 = vadd.f32 %v5065, 1.0
      %v5078 = vadd.f32 %v5066, 1.0
      %v5079 = vadd.f32 %v5067, 1.0
      %v5080 = vadd.f32 %v5068, 1.0
      %v5081 = vadd.f32 %v5069, 1.0
      %v5082 = vadd.f32 %v5070, 1.0
      %v5083 = vadd.f32 %v5071, 1.0
      %v5084 = vmul.f32 %v5072, 0.5
      %v5085 = vmul.f32 %v5073, 0.5
      %v5086 = vmul.f32 %v5074, 0.5
      %v5087 = vmul.f32 %v5075, 0.5
      %v5088 = vmul.f32 %v5076, 0.5
      %v5089 = vmul.f32 %v5077, 0.5
      %v5090 = vmul.f32 %v5078, 0.5
      %v5091 = vmul.f32 %v5079, 0.5
      %v5092 = vmul.f32 %v5080, 0.5
      %v5093 = vmul.f32 %v5081, 0.5
      %v5094 = vmul.f32 %v5082, 0.5
      %v5095 = vmul.f32 %v5083, 0.5
      %v5096 = vmul.f32 %v4933, %v5084
      %v5097 = vmul.f32 %v4935, %v5085
      %v5098 = vmul.f32 %v4984, %v5086
      %v5099 = vmul.f32 %v4986, %v5087
      %v5100 = vmul.f32 %v4937, %v5088
      %v5101 = vmul.f32 %v4939, %v5089
      %v5102 = vmul.f32 %v4988, %v5090
      %v5103 = vmul.f32 %v4990, %v5091
      %v5104 = vmul.f32 %v4943, %v5092
      %v5105 = vmul.f32 %v4945, %v5093
      %v5106 = vmul.f32 %v4994, %v5094
      %v5107 = vmul.f32 %v4996, %v5095
      %s5108 = scalar_lea.vmem %s14, 256
      %v5109 = vld [vmem:[%s5108] sm:$0xf]
      %v5110 = vld [vmem:[%s5108 + $0x4] sm:$0xf]
      %v5111 = vld [vmem:[%s5108 + $0x8] sm:$0xf]
      %v5112 = vld [vmem:[%s5108 + $0xc] sm:$0xf]
      %v5113 = vld [vmem:[%s5108 + $0x10] sm:$0xf]
      %v5114 = vld [vmem:[%s5108 + $0x14] sm:$0xf]
      %v5115 = vld [vmem:[%s5108 + $0x18] sm:$0xf]
      %v5116 = vld [vmem:[%s5108 + $0x1c] sm:$0xf]
      %v5117 = vld [vmem:[%s5108 + $0x20] sm:$0xf]
      %v5118 = vld [vmem:[%s5108 + $0x24] sm:$0xf]
      %v5119 = vld [vmem:[%s5108 + $0x28] sm:$0xf]
      %v5120 = vld [vmem:[%s5108 + $0x2c] sm:$0xf]
      %v5121 = vld [vmem:[%s5108 + $0x30] sm:$0xf]
      %v5122 = vld [vmem:[%s5108 + $0x34] sm:$0xf]
      %v5123 = vld [vmem:[%s5108 + $0x38] sm:$0xf]
      %v5124 = vld [vmem:[%s5108 + $0x3c] sm:$0xf]
      %v5125 = vld [vmem:[%s5108 + $0x40] sm:$0xf]
      %v5126 = vld [vmem:[%s5108 + $0x44] sm:$0xf]
      %v5127 = vld [vmem:[%s5108 + $0x48] sm:$0xf]
      %v5128 = vld [vmem:[%s5108 + $0x4c] sm:$0xf]
      %v5129 = vld [vmem:[%s5108 + $0x50] sm:$0xf]
      %v5130 = vld [vmem:[%s5108 + $0x54] sm:$0xf]
      %v5131 = vld [vmem:[%s5108 + $0x58] sm:$0xf]
      %v5132 = vld [vmem:[%s5108 + $0x5c] sm:$0xf]
      %v5133 = vld [vmem:[%s5108 + $0x60] sm:$0xf]
      %v5134 = vld [vmem:[%s5108 + $0x64] sm:$0xf]
      %v5135 = vld [vmem:[%s5108 + $0x68] sm:$0xf]
      %v5136 = vld [vmem:[%s5108 + $0x6c] sm:$0xf]
      %v5137 = vld [vmem:[%s5108 + $0x70] sm:$0xf]
      %v5138 = vld [vmem:[%s5108 + $0x74] sm:$0xf]
      %v5139 = vld [vmem:[%s5108 + $0x78] sm:$0xf]
      %v5140 = vld [vmem:[%s5108 + $0x7c] sm:$0xf]
      %v5141 = vld [vmem:[%s5108 + $0x80] sm:$0xf]
      %v5142 = vld [vmem:[%s5108 + $0x84] sm:$0xf]
      %v5143 = vld [vmem:[%s5108 + $0x88] sm:$0xf]
      %v5144 = vld [vmem:[%s5108 + $0x8c] sm:$0xf]
      %v5145 = vld [vmem:[%s5108 + $0x90] sm:$0xf]
      %v5146 = vld [vmem:[%s5108 + $0x94] sm:$0xf]
      %v5147 = vld [vmem:[%s5108 + $0x98] sm:$0xf]
      %v5148 = vld [vmem:[%s5108 + $0x9c] sm:$0xf]
      %v5149 = vld [vmem:[%s5108 + $0xa0] sm:$0xf]
      %v5150 = vld [vmem:[%s5108 + $0xa4] sm:$0xf]
      %v5151 = vld [vmem:[%s5108 + $0xa8] sm:$0xf]
      %v5152 = vld [vmem:[%s5108 + $0xac] sm:$0xf]
      %v5153 = vld [vmem:[%s5108 + $0xb0] sm:$0xf]
      %v5154 = vld [vmem:[%s5108 + $0xb4] sm:$0xf]
      %v5155 = vld [vmem:[%s5108 + $0xb8] sm:$0xf]
      %v5156 = vld [vmem:[%s5108 + $0xbc] sm:$0xf]
      %v5157 = vld [vmem:[%s5108 + $0xc0] sm:$0xf]
      %v5158 = vld [vmem:[%s5108 + $0xc4] sm:$0xf]
      %v5159 = vld [vmem:[%s5108 + $0xc8] sm:$0xf]
      %v5160 = vld [vmem:[%s5108 + $0xcc] sm:$0xf]
      %v5161 = vld [vmem:[%s5108 + $0xd0] sm:$0xf]
      %v5162 = vld [vmem:[%s5108 + $0xd4] sm:$0xf]
      %v5163 = vld [vmem:[%s5108 + $0xd8] sm:$0xf]
      %v5164 = vld [vmem:[%s5108 + $0xdc] sm:$0xf]
      %v5165 = vld [vmem:[%s5108 + $0xe0] sm:$0xf]
      %v5166 = vld [vmem:[%s5108 + $0xe4] sm:$0xf]
      %v5167 = vld [vmem:[%s5108 + $0xe8] sm:$0xf]
      %v5168 = vld [vmem:[%s5108 + $0xec] sm:$0xf]
      %v5169 = vld [vmem:[%s5108 + $0xf0] sm:$0xf]
      %v5170 = vld [vmem:[%s5108 + $0xf4] sm:$0xf]
      %v5171 = vld [vmem:[%s5108 + $0xf8] sm:$0xf]
      %v5172 = vld [vmem:[%s5108 + $0xfc] sm:$0xf]
      %v5173 = vpack.c.bf16 %v5100, %v5096
      %v5174 = vpack.c.bf16 %v5101, %v5097
      %v5175 = vpack.c.bf16 %v5102, %v5098
      %v5176 = vpack.c.bf16 %v5103, %v5099
      %v5177 = vpack.c.bf16 %v5104, %v5104
      %v5178 = vpack.c.bf16 %v5105, %v5105
      %v5179 = vpack.c.bf16 %v5106, %v5106
      %v5180 = vpack.c.bf16 %v5107, %v5107
      %s5181 = scalar_lea.vmem %s15, 1
      %v5182 = vld [vmem:[%s5181] sm:$0x1]
      %v5184 = vlaneseq
      %v5185 = vshrl.u32 %v5184, 7
      %v5186 = vsub.s32 0, %v5185
      %v5187 = vrot.slane %v5182, %v5186
      %v5253 = vunpack.c.l.b16 %v5109
      %v5254 = vunpack.c.l.b16 %v5110
      %v5255 = vunpack.c.l.b16 %v5111
      %v5256 = vunpack.c.l.b16 %v5112
      %v5257 = vunpack.c.l.b16 %v5113
      %v5258 = vunpack.c.l.b16 %v5114
      %v5259 = vunpack.c.l.b16 %v5115
      %v5260 = vunpack.c.l.b16 %v5116
      %v5261 = vunpack.c.l.b16 %v5117
      %v5262 = vunpack.c.l.b16 %v5118
      %v5263 = vunpack.c.l.b16 %v5119
      %v5264 = vunpack.c.l.b16 %v5120
      %v5265 = vunpack.c.l.b16 %v5121
      %v5266 = vunpack.c.l.b16 %v5122
      %v5267 = vunpack.c.l.b16 %v5123
      %v5268 = vunpack.c.l.b16 %v5124
      %v5269 = vunpack.c.l.b16 %v5125
      %v5270 = vunpack.c.l.b16 %v5126
      %v5271 = vunpack.c.l.b16 %v5127
      %v5272 = vunpack.c.l.b16 %v5128
      %v5273 = vunpack.c.l.b16 %v5129
      %v5274 = vunpack.c.l.b16 %v5130
      %v5275 = vunpack.c.l.b16 %v5131
      %v5276 = vunpack.c.l.b16 %v5132
      %v5277 = vunpack.c.l.b16 %v5133
      %v5278 = vunpack.c.l.b16 %v5134
      %v5279 = vunpack.c.l.b16 %v5135
      %v5280 = vunpack.c.l.b16 %v5136
      %v5281 = vunpack.c.l.b16 %v5137
      %v5282 = vunpack.c.l.b16 %v5138
      %v5283 = vunpack.c.l.b16 %v5139
      %v5284 = vunpack.c.l.b16 %v5140
      %v5285 = vunpack.c.l.b16 %v5141
      %v5286 = vunpack.c.l.b16 %v5142
      %v5287 = vunpack.c.l.b16 %v5143
      %v5288 = vunpack.c.l.b16 %v5144
      %v5289 = vunpack.c.l.b16 %v5145
      %v5290 = vunpack.c.l.b16 %v5146
      %v5291 = vunpack.c.l.b16 %v5147
      %v5292 = vunpack.c.l.b16 %v5148
      %v5293 = vunpack.c.l.b16 %v5149
      %v5294 = vunpack.c.l.b16 %v5150
      %v5295 = vunpack.c.l.b16 %v5151
      %v5296 = vunpack.c.l.b16 %v5152
      %v5297 = vunpack.c.l.b16 %v5153
      %v5298 = vunpack.c.l.b16 %v5154
      %v5299 = vunpack.c.l.b16 %v5155
      %v5300 = vunpack.c.l.b16 %v5156
      %v5301 = vunpack.c.l.b16 %v5157
      %v5302 = vunpack.c.l.b16 %v5158
      %v5303 = vunpack.c.l.b16 %v5159
      %v5304 = vunpack.c.l.b16 %v5160
      %v5305 = vunpack.c.l.b16 %v5161
      %v5306 = vunpack.c.l.b16 %v5162
      %v5307 = vunpack.c.l.b16 %v5163
      %v5308 = vunpack.c.l.b16 %v5164
      %v5309 = vunpack.c.l.b16 %v5165
      %v5310 = vunpack.c.l.b16 %v5166
      %v5311 = vunpack.c.l.b16 %v5167
      %v5312 = vunpack.c.l.b16 %v5168
      %v5313 = vunpack.c.l.b16 %v5169
      %v5314 = vunpack.c.l.b16 %v5170
      %v5315 = vunpack.c.l.b16 %v5171
      %v5316 = vunpack.c.l.b16 %v5172
      %v5317 = vpack.c.b16 %v5254, %v5253
      %v5318 = vpack.c.b16 %v5256, %v5255
      %v5319 = vpack.c.b16 %v5258, %v5257
      %v5320 = vpack.c.b16 %v5260, %v5259
      %v5321 = vpack.c.b16 %v5262, %v5261
      %v5322 = vpack.c.b16 %v5264, %v5263
      %v5323 = vpack.c.b16 %v5266, %v5265
      %v5324 = vpack.c.b16 %v5268, %v5267
      %v5325 = vpack.c.b16 %v5270, %v5269
      %v5326 = vpack.c.b16 %v5272, %v5271
      %v5327 = vpack.c.b16 %v5274, %v5273
      %v5328 = vpack.c.b16 %v5276, %v5275
      %v5329 = vpack.c.b16 %v5278, %v5277
      %v5330 = vpack.c.b16 %v5280, %v5279
      %v5331 = vpack.c.b16 %v5282, %v5281
      %v5332 = vpack.c.b16 %v5284, %v5283
      %v5333 = vpack.c.b16 %v5286, %v5285
      %v5334 = vpack.c.b16 %v5288, %v5287
      %v5335 = vpack.c.b16 %v5290, %v5289
      %v5336 = vpack.c.b16 %v5292, %v5291
      %v5337 = vpack.c.b16 %v5294, %v5293
      %v5338 = vpack.c.b16 %v5296, %v5295
      %v5339 = vpack.c.b16 %v5298, %v5297
      %v5340 = vpack.c.b16 %v5300, %v5299
      %v5341 = vpack.c.b16 %v5302, %v5301
      %v5342 = vpack.c.b16 %v5304, %v5303
      %v5343 = vpack.c.b16 %v5306, %v5305
      %v5344 = vpack.c.b16 %v5308, %v5307
      %v5345 = vpack.c.b16 %v5310, %v5309
      %v5346 = vpack.c.b16 %v5312, %v5311
      %v5347 = vpack.c.b16 %v5314, %v5313
      %v5348 = vpack.c.b16 %v5316, %v5315
      %5381 = vmatprep.subr.bf16.mxu0 0
      %5382 = vmatpush1.bf16.msra.mxu0 %v5317
      %5383 = vmatprep.subr.bf16.mxu0 0
      %5384 = vmatpush1.bf16.msra.mxu0 %v5318
      %5385 = vmatprep.subr.bf16.mxu0 0
      %5386 = vmatpush1.bf16.msra.mxu0 %v5319
      %5387 = vmatprep.subr.bf16.mxu0 0
      %5388 = vmatpush1.bf16.msra.mxu0 %v5320
      %5389 = vmatprep.subr.bf16.mxu0 0
      %5390 = vmatpush1.bf16.msra.mxu0 %v5321
      %5391 = vmatprep.subr.bf16.mxu0 0
      %5392 = vmatpush1.bf16.msra.mxu0 %v5322
      %5393 = vmatprep.subr.bf16.mxu0 0
      %5394 = vmatpush1.bf16.msra.mxu0 %v5323
      %5395 = vmatprep.subr.bf16.mxu0 0
      %5396 = vmatpush1.bf16.msra.mxu0 %v5324
      %5397 = vmatprep.subr.bf16.mxu0 0
      %5398 = vmatpush1.bf16.msra.mxu0 %v5325
      %5399 = vmatprep.subr.bf16.mxu0 0
      %5400 = vmatpush1.bf16.msra.mxu0 %v5326
      %5401 = vmatprep.subr.bf16.mxu0 0
      %5402 = vmatpush1.bf16.msra.mxu0 %v5327
      %5403 = vmatprep.subr.bf16.mxu0 0
      %5404 = vmatpush1.bf16.msra.mxu0 %v5328
      %5405 = vmatprep.subr.bf16.mxu0 0
      %5406 = vmatpush1.bf16.msra.mxu0 %v5329
      %5407 = vmatprep.subr.bf16.mxu0 0
      %5408 = vmatpush1.bf16.msra.mxu0 %v5330
      %5409 = vmatprep.subr.bf16.mxu0 0
      %5410 = vmatpush1.bf16.msra.mxu0 %v5331
      %5411 = vmatprep.subr.bf16.mxu0 0
      %5412 = vmatpush1.bf16.msra.mxu0 %v5332
      %5413 = vmatprep.mubr.bf16.mxu0 %v5174
      %5414 = vmatmul.mubr.bf16.gmra.mrb[0].mxu0 %v5173
      %v5415 = vpop.f32.mrb[0].mxu0
      %v5416 = vadd.f32 %v5187, %v5415
      %v5417 = vpop.f32.mrb[0].mxu0
      %v5418 = vpop.f32.mrb[0].mxu0
      %v5419 = vadd.f32 %v5187, %v5418
      %v5420 = vpop.f32.mrb[0].mxu0
      %5421 = vmatprep.mubr.bf16.mxu0 %v5178
      %5422 = vmatmul.mubr.bf16.gmra.mrb[0].mxu0 %v5177
      %v5423 = vpop.f32.mrb[0].mxu0
      %v5424 = vadd.f32 %v5187, %v5423
      %v5425 = vpop.f32.mrb[0].mxu0
      %v5426 = vpop.f32.mrb[0].mxu0
      %v5427 = vpop.f32.mrb[0].mxu0
      %5428 = vdwg.mxu0
      %5429 = vmatprep.subr.bf16.mxu0 0
      %5430 = vmatpush1.bf16.msra.mxu0 %v5333
      %5431 = vmatprep.subr.bf16.mxu0 0
      %5432 = vmatpush1.bf16.msra.mxu0 %v5334
      %5433 = vmatprep.subr.bf16.mxu0 0
      %5434 = vmatpush1.bf16.msra.mxu0 %v5335
      %5435 = vmatprep.subr.bf16.mxu0 0
      %5436 = vmatpush1.bf16.msra.mxu0 %v5336
      %5437 = vmatprep.subr.bf16.mxu0 0
      %5438 = vmatpush1.bf16.msra.mxu0 %v5337
      %5439 = vmatprep.subr.bf16.mxu0 0
      %5440 = vmatpush1.bf16.msra.mxu0 %v5338
      %5441 = vmatprep.subr.bf16.mxu0 0
      %5442 = vmatpush1.bf16.msra.mxu0 %v5339
      %5443 = vmatprep.subr.bf16.mxu0 0
      %5444 = vmatpush1.bf16.msra.mxu0 %v5340
      %5445 = vmatprep.subr.bf16.mxu0 0
      %5446 = vmatpush1.bf16.msra.mxu0 %v5341
      %5447 = vmatprep.subr.bf16.mxu0 0
      %5448 = vmatpush1.bf16.msra.mxu0 %v5342
      %5449 = vmatprep.subr.bf16.mxu0 0
      %5450 = vmatpush1.bf16.msra.mxu0 %v5343
      %5451 = vmatprep.subr.bf16.mxu0 0
      %5452 = vmatpush1.bf16.msra.mxu0 %v5344
      %5453 = vmatprep.subr.bf16.mxu0 0
      %5454 = vmatpush1.bf16.msra.mxu0 %v5345
      %5455 = vmatprep.subr.bf16.mxu0 0
      %5456 = vmatpush1.bf16.msra.mxu0 %v5346
      %5457 = vmatprep.subr.bf16.mxu0 0
      %5458 = vmatpush1.bf16.msra.mxu0 %v5347
      %5459 = vmatprep.subr.bf16.mxu0 0
      %5460 = vmatpush1.bf16.msra.mxu0 %v5348
      %5461 = vmatprep.mubr.bf16.mxu0 %v5176
      %5462 = vmatmul.mubr.bf16.gmra.mrb[0].mxu0 %v5175
      %v5463 = vpop.f32.mrb[0].mxu0
      %v5464 = vadd.f32 %v5416, %v5463
      %v5465 = vpop.f32.mrb[0].mxu0
      %v5466 = vpop.f32.mrb[0].mxu0
      %v5467 = vadd.f32 %v5419, %v5466
      %v5468 = vpop.f32.mrb[0].mxu0
      %5469 = vmatprep.mubr.bf16.mxu0 %v5180
      %5470 = vmatmul.mubr.bf16.gmra.mrb[0].mxu0 %v5179
      %v5471 = vpop.f32.mrb[0].mxu0
      %v5472 = vadd.f32 %v5424, %v5471
      %v5473 = vpop.f32.mrb[0].mxu0
      %v5474 = vpop.f32.mrb[0].mxu0
      %v5475 = vpop.f32.mrb[0].mxu0
      %5476 = vdwg.mxu0
      %s5477 = scalar_lea.vmem %s16, 1
      %v5478 = vld [vmem:[%s5477] sm:$0x1]
      %v5480 = vlaneseq
      %v5481 = vshrl.u32 %v5480, 7
      %v5482 = vsub.s32 0, %v5481
      %v5483 = vrot.slane %v5478, %v5482
      %v5485 = vmul.f32 %v5464, %v5483
      %v5486 = vmul.f32 %v5467, %v5483
      %v5487 = vmul.f32 %v5472, %v5483
      %v5488 = vadd.f32 %v4620, %v5485
      %v5489 = vadd.f32 %v4621, %v5486
      %v5490 = vadd.f32 %v4622, %v5487
      %v5491 = vld [vmem:[%s17] sm:$0x1]
      %v5492 = vld [vmem:[%s18] sm:$0x1]
      %5493 = vadd.xlane.f32.xlu0 %v5488
      %v5494 = vpop.xlane.xlu0 %5493
      %5495 = vadd.xlane.f32.xlu0 %v5489
      %v5496 = vpop.xlane.xlu0 %5495
      %v5497 = vsel %vm1130, %v5490, 0.0
      %5498 = vadd.xlane.f32.xlu0 %v5497
      %v5499 = vpop.xlane.xlu0 %5498
      %v5500 = vmul.f32 %v5494, %v1134
      %v5501 = vmul.f32 %v5496, %v1134
      %v5502 = vmul.f32 %v5499, %v1134
      %v5503 = vsub.f32 %v5488, %v5500
      %v5504 = vsub.f32 %v5489, %v5501
      %v5505 = vsub.f32 %v5490, %v5502
      %v5506 = vmul.f32 %v5503, %v5503
      %v5507 = vmul.f32 %v5504, %v5504
      %v5508 = vmul.f32 %v5505, %v5505
      %5509 = vadd.xlane.f32.xlu0 %v5506
      %v5510 = vpop.xlane.xlu0 %5509
      %5511 = vadd.xlane.f32.xlu0 %v5507
      %v5512 = vpop.xlane.xlu0 %5511
      %v5513 = vsel %vm1130, %v5508, 0.0
      %5514 = vadd.xlane.f32.xlu0 %v5513
      %v5515 = vpop.xlane.xlu0 %5514
      %v5516 = vmul.f32 %v5510, %v1134
      %v5517 = vmul.f32 %v5512, %v1134
      %v5518 = vmul.f32 %v5515, %v1134
      %v5519 = vadd.f32 %v5516, 1e-06
      %v5520 = vadd.f32 %v5517, 1e-06
      %v5521 = vadd.f32 %v5518, 1e-06
      %v5522 = vrsqrt.pop %v5519
      %v5523 = vrsqrt.pop %v5520
      %v5524 = vrsqrt.pop %v5521
      %v5525 = vmul.f32 %v5503, %v5522
      %v5526 = vmul.f32 %v5504, %v5523
      %v5527 = vmul.f32 %v5505, %v5524
      %v5529 = vlaneseq
      %v5530 = vshrl.u32 %v5529, 7
      %v5531 = vsub.s32 0, %v5530
      %v5532 = vrot.slane %v5491, %v5531
      %v5534 = vmul.f32 %v5525, %v5532
      %v5535 = vmul.f32 %v5526, %v5532
      %v5536 = vmul.f32 %v5527, %v5532
      %v5538 = vlaneseq
      %v5539 = vshrl.u32 %v5538, 7
      %v5540 = vsub.s32 0, %v5539
      %v5541 = vrot.slane %v5492, %v5540
      %v5543 = vadd.f32 %v5534, %v5541
      %v5544 = vadd.f32 %v5535, %v5541
      %v5545 = vadd.f32 %v5536, %v5541
      %5546 = vst [vmem:[%s602] sm:$0xff] %v5543
      %5547 = vst [vmem:[%s602 + $0x8] sm:$0xff] %v5544
      %5548 = vst [vmem:[%s602 + $0x10] sm:$0x1] %v5545
      %p5549 = scmp.lt.s32.totalorder %s30, 1
      %s5550 = scalar_select %p5549, %s30, 1
      %s5551 = smul.addr %s5550, 3
      %s5552 = smul.addr %s5551, 8
      %s5553 = scalar_lea.vmem %s19, %s5552
      // Predicated region
      $region97: #{dinov2_forward.1} parent=95 // pred_check
        %p5554 = pneg %p452
      $region98: #{dinov2_forward.1} parent=95 // pred_check_branch
        %5556 = sbr.rel (%p5554) target = $region100
      $region99: #{dinov2_forward.1} parent=95 // pred_region
        _
      $region100: #{dinov2_forward.1} parent=95 // pred_fallthru
        _
    $region96: #{dinov2_forward.1} parent=5 // pred_fallthru
      _
    %p5557 = scmp.le.s32.totalorder 2, %s25
    // Predicated region
    $region101: #{dinov2_forward.1} parent=5 // pred_check
      %p5558 = pneg %p5557
    $region102: #{dinov2_forward.1} parent=5 // pred_check_branch
      %5560 = sbr.rel (%p5558) target = $region104
    $region103: #{dinov2_forward.1} parent=5 // pred_region
      %s5561 = ssub.s32 %s25, 2
      // Predicated region
      $region105: #{dinov2_forward.1} parent=103 // pred_check
        %p5562 = pneg %p458
      $region106: #{dinov2_forward.1} parent=103 // pred_check_branch
        %5564 = sbr.rel (%p5562) target = $region108
      $region107: #{dinov2_forward.1} parent=103 // pred_region
        %p5565 = scmp.lt.s32.totalorder %s31, 1
        %s5566 = scalar_select %p5565, %s31, 1
        %s5567 = smul.addr %s5566, 3
        %s5568 = smul.addr %s5567, 8
        %s5569 = scalar_lea.vmem %s19, %s5568
      $region108: #{dinov2_forward.1} parent=103 // pred_fallthru
        _
    $region104: #{dinov2_forward.1} parent=5 // pred_fallthru
      _
  $region6: #{dinov2_forward.1} parent=0 // loop_footer
    %s29 = sadd.s32 1, %s25
  $region7: #{dinov2_forward.1} parent=0 // loop_footer_branch
    %24 = sbr.rel target = $region3
  $region8: #{dinov2_forward.1} parent=0 // loop_exit
    _

</llo_original>
